<compile_context>
chip_gen: v5e
topology: v5e:2x2
jax: 0.10.0
libtpu: 0.0.40
codegen_flags: <defaults>
</compile_context>

<pallas_src>
import functools

import jax
import jax.numpy as jnp
from jax.experimental import pallas as pl
from jax.experimental.pallas import tpu as pltpu


_VMEM_LIMIT = 48 * 1024 * 1024  # below v7x's 64 MiB physical VMEM, generous on v5e/v6e


def _pick_tile(dim, cap, quantum):
    """Largest tile <= cap that is a multiple of `quantum` and divides `dim`;
    falls back to the full dim (always legal for BlockSpec)."""
    if dim <= cap:
        return dim
    t = (cap // quantum) * quantum
    while t >= quantum:
        if dim % t == 0:
            return t
        t -= quantum
    return dim


# --------------------------------------------------------------------------
# Kernel 1: fused LayerNorm + Linear (+ QuickGELU), LN cached per row-block
# --------------------------------------------------------------------------

def _ln_matmul_kernel(x_ref, g_ref, bln_ref, w_ref, b_ref, o_ref, h_ref,
                      *, activation):
    # LayerNorm (f32 statistics) computed once per row-block (first N tile),
    # cached in VMEM as bf16 and reused for the remaining N tiles.
    @pl.when(pl.program_id(1) == 0)
    def _():
        x = x_ref[...].astype(jnp.float32)                      # (tm, K)
        mean = jnp.mean(x, axis=-1, keepdims=True)
        var = jnp.mean(jnp.square(x - mean), axis=-1, keepdims=True)
        h = (x - mean) * jax.lax.rsqrt(var + 1e-5)
        h = h * g_ref[...].astype(jnp.float32) + bln_ref[...].astype(jnp.float32)
        h_ref[...] = h.astype(jnp.bfloat16)

    # bf16 MXU operands, f32 accumulate.
    y = jnp.dot(h_ref[...], w_ref[...], preferred_element_type=jnp.float32)
    y = y + b_ref[...].astype(jnp.float32)
    if activation == "quickgelu":
        y = y * jax.nn.sigmoid(1.702 * y)
    o_ref[...] = y.astype(o_ref.dtype)


def ln_matmul_bias(x, g, bln, w, b, activation="none", out_dtype=jnp.bfloat16):
    """y = act(LayerNorm(x) @ w + b); x:[M,K] f32, w:[K,N] bf16 (pre-transposed)."""
    M, K = x.shape
    K2, N = w.shape
    assert K == K2
    tm = _pick_tile(M, 512, 16)
    tn = _pick_tile(N, 512, 128)
    grid = (M // tm, N // tn)
    return pl.pallas_call(
        functools.partial(_ln_matmul_kernel, activation=activation),
        out_shape=jax.ShapeDtypeStruct((M, N), out_dtype),
        grid=grid,
        in_specs=[
            pl.BlockSpec((tm, K), lambda i, j: (i, 0)),
            pl.BlockSpec((1, K), lambda i, j: (0, 0)),
            pl.BlockSpec((1, K), lambda i, j: (0, 0)),
            pl.BlockSpec((K, tn), lambda i, j: (0, j)),
            pl.BlockSpec((1, tn), lambda i, j: (0, j)),
        ],
        out_specs=pl.BlockSpec((tm, tn), lambda i, j: (i, j)),
        scratch_shapes=[pltpu.VMEM((tm, K), jnp.bfloat16)],
        compiler_params=pltpu.CompilerParams(
            # j must run sequentially per row-block so the cached LN is valid.
            dimension_semantics=("parallel", "arbitrary"),
            vmem_limit_bytes=_VMEM_LIMIT),
    )(x, g.reshape(1, K), bln.reshape(1, K), w, b.reshape(1, N))


# --------------------------------------------------------------------------
# Kernel 2: tiled Linear + bias + residual add (K-looped f32 accumulator)
# --------------------------------------------------------------------------

def _matmul_res_kernel(x_ref, w_ref, b_ref, r_ref, o_ref, acc_ref):
    k = pl.program_id(2)

    @pl.when(k == 0)
    def _():
        acc_ref[...] = jnp.zeros_like(acc_ref)

    xv = x_ref[...]
    if xv.dtype != jnp.bfloat16:
        xv = xv.astype(jnp.bfloat16)
    acc_ref[...] += jnp.dot(xv, w_ref[...], preferred_element_type=jnp.float32)

    @pl.when(k == pl.num_programs(2) - 1)
    def _():
        y = (acc_ref[...] + b_ref[...].astype(jnp.float32)
             + r_ref[...].astype(jnp.float32))
        o_ref[...] = y.astype(o_ref.dtype)


def matmul_bias_residual(x, w, b, res):
    """y = res + x @ w + b; x:[M,K] bf16, w:[K,N] bf16 (pre-transposed), res:[M,N] f32."""
    M, K = x.shape
    K2, N = w.shape
    assert K == K2 and res.shape == (M, N)
    tm = _pick_tile(M, 512, 16)
    tn = _pick_tile(N, 512, 128)
    tk = _pick_tile(K, 1024, 128)
    grid = (M // tm, N // tn, K // tk)
    return pl.pallas_call(
        _matmul_res_kernel,
        out_shape=jax.ShapeDtypeStruct((M, N), res.dtype),
        grid=grid,
        in_specs=[
            pl.BlockSpec((tm, tk), lambda i, j, k: (i, k)),
            pl.BlockSpec((tk, tn), lambda i, j, k: (k, j)),
            pl.BlockSpec((1, tn), lambda i, j, k: (0, j)),
            pl.BlockSpec((tm, tn), lambda i, j, k: (i, j)),
        ],
        out_specs=pl.BlockSpec((tm, tn), lambda i, j, k: (i, j)),
        scratch_shapes=[pltpu.VMEM((tm, tn), jnp.float32)],
        compiler_params=pltpu.CompilerParams(
            dimension_semantics=("parallel", "parallel", "arbitrary"),
            vmem_limit_bytes=_VMEM_LIMIT),
    )(x, w, b.reshape(1, N), res)


# --------------------------------------------------------------------------
# Kernel 3: multi-head self-attention (attn_mask=None)
# --------------------------------------------------------------------------

def _mha_head_kernel(q_ref, k_ref, v_ref, o_ref, *, scale):
    """One (batch, head, q-tile) step; q/k/v are bf16 lane windows of qkv."""
    s = jax.lax.dot_general(q_ref[...], k_ref[...],
                            dimension_numbers=(((1,), (1,)), ((), ())),
                            preferred_element_type=jnp.float32)   # (tq, S)
    s = s * scale
    s = s - jnp.max(s, axis=-1, keepdims=True)
    p = jnp.exp(s)
    p = p * pl.reciprocal(jnp.sum(p, axis=-1, keepdims=True), approx=True)
    o_ref[...] = jnp.dot(p.astype(jnp.bfloat16), v_ref[...],
                         preferred_element_type=jnp.float32).astype(o_ref.dtype)


def _mha_batch_kernel(qkv_ref, o_ref, *, heads, scale):
    """Fallback (head_dim not 128-aligned): all heads of one batch element.
    Heads are read via static ref slices and written straight into o_ref
    (no full f32 copy, no concatenate, no explicit k.T)."""
    # TODO(synk): online-softmax (flash) KV tiling for long sequences; the
    # [S,S] score matrix is materialized per head here.
    S, D3 = qkv_ref.shape
    D = D3 // 3
    hd = D // heads
    for h in range(heads):
        q = qkv_ref[:, h * hd:(h + 1) * hd]
        k = qkv_ref[:, D + h * hd:D + (h + 1) * hd]
        v = qkv_ref[:, 2 * D + h * hd:2 * D + (h + 1) * hd]
        s = jax.lax.dot_general(q, k,
                                dimension_numbers=(((1,), (1,)), ((), ())),
                                preferred_element_type=jnp.float32)  # (S, S)
        s = s * scale
        s = s - jnp.max(s, axis=-1, keepdims=True)
        p = jnp.exp(s)
        p = p * pl.reciprocal(jnp.sum(p, axis=-1, keepdims=True), approx=True)
        o = jnp.dot(p.astype(jnp.bfloat16), v, preferred_element_type=jnp.float32)
        o_ref[:, h * hd:(h + 1) * hd] = o.astype(o_ref.dtype)


def attention(qkv, *, batch, seq, heads, scale):
    """qkv: [B*S, 3D] bf16 (batch-major rows, columns ordered q|k|v) -> [B*S, D]."""
    M, D3 = qkv.shape
    D = D3 // 3
    hd = D // heads
    assert M == batch * seq
    out_shape = jax.ShapeDtypeStruct((M, D), qkv.dtype)

    if hd % 128 == 0:
        # Head loop moved into the grid; lane windows of the fused qkv buffer
        # are selected purely by BlockSpec index maps (no XLA repacks).
        tq = _pick_tile(seq, 512, 16)
        nq = seq // tq
        return pl.pallas_call(
            functools.partial(_mha_head_kernel, scale=scale),
            out_shape=out_shape,
            grid=(batch, heads, nq),
            in_specs=[
                pl.BlockSpec((tq, hd), lambda b, h, qi: (b * nq + qi, h)),
                pl.BlockSpec((seq, hd), lambda b, h, qi: (b, heads + h)),
                pl.BlockSpec((seq, hd), lambda b, h, qi: (b, 2 * heads + h)),
            ],
            out_specs=pl.BlockSpec((tq, hd), lambda b, h, qi: (b * nq + qi, h)),
            compiler_params=pltpu.CompilerParams(
                dimension_semantics=("parallel", "parallel", "parallel"),
                vmem_limit_bytes=_VMEM_LIMIT),
        )(qkv, qkv, qkv)

    return pl.pallas_call(
        functools.partial(_mha_batch_kernel, heads=heads, scale=scale),
        out_shape=out_shape,
        grid=(batch,),
        in_specs=[pl.BlockSpec((seq, D3), lambda b: (b, 0))],
        out_specs=pl.BlockSpec((seq, D), lambda b: (b, 0)),
        compiler_params=pltpu.CompilerParams(
            dimension_semantics=("parallel",),
            vmem_limit_bytes=_VMEM_LIMIT),
    )(qkv)


# --------------------------------------------------------------------------
# Transformer forward (matches Transformer.forward: x is [S, B, width])
# --------------------------------------------------------------------------

@functools.partial(jax.jit, static_argnames=("heads",))
def transformer_forward(x, params, *, heads):
    # TODO(synk): additive attn_mask (non-None) is not plumbed through.
    S, B, D = x.shape
    hd = D // heads
    x2 = jnp.transpose(x, (1, 0, 2)).reshape(B * S, D)  # batch-major, once

    for lp in params["layers"]:
        # ln_1 + in_proj (QKV), emitted bf16
        qkv = ln_matmul_bias(x2, lp["ln1_g"], lp["ln1_b"],
                             lp["w_qkv"], lp["b_qkv"])
        # multi-head self-attention (bf16 in/out)
        attn = attention(qkv, batch=B, seq=S, heads=heads, scale=hd ** -0.5)
        # out_proj + residual (f32 residual stream)
        x2 = matmul_bias_residual(attn, lp["w_out"], lp["b_out"], x2)
        # ln_2 + c_fc + QuickGELU, emitted bf16
        h = ln_matmul_bias(x2, lp["ln2_g"], lp["ln2_b"],
                           lp["w_fc"], lp["b_fc"], activation="quickgelu")
        # c_proj + residual
        x2 = matmul_bias_residual(h, lp["w_proj"], lp["b_proj"], x2)

    out = jnp.transpose(x2.reshape(B, S, D), (1, 0, 2))  # back to [S, B, D]
    return out, None  # need_weights=False -> attn_probs is None


# --------------------------------------------------------------------------
# Deterministic parameter init (PyTorch layouts, transposed + bf16 ONCE here)
# --------------------------------------------------------------------------

def init_params(key, *, width, layers, heads):
    del heads  # head count only affects the forward reshape, not the shapes
    keys = jax.random.split(key, layers)

    def rnd(k, shape, std=0.02):
        return (std * jax.random.normal(k, shape)).astype(jnp.float32)

    layer_params = []
    for l in range(layers):
        lk = jax.random.split(keys[l], 6)
        # PyTorch-layout weights ([out, in]), pre-transposed once to [K, N]
        # and stored bf16 (MXU operand dtype) — forward path never calls .T
        # and never re-casts weights.
        in_proj_w = rnd(lk[0], (3 * width, width))   # nn.MultiheadAttention.in_proj_weight
        out_proj_w = rnd(lk[1], (width, width))
        fc_w = rnd(lk[2], (4 * width, width))
        proj_w = rnd(lk[3], (width, 4 * width))
        layer_params.append({
            "ln1_g": jnp.ones((width,), jnp.float32),
            "ln1_b": jnp.zeros((width,), jnp.float32),
            "ln2_g": jnp.ones((width,), jnp.float32),
            "ln2_b": jnp.zeros((width,), jnp.float32),
            "w_qkv": jnp.asarray(in_proj_w.T, dtype=jnp.bfloat16),   # [D, 3D]
            "b_qkv": rnd(lk[4], (3 * width,)),
            "w_out": jnp.asarray(out_proj_w.T, dtype=jnp.bfloat16),  # [D, D]
            "b_out": jnp.zeros((width,), jnp.float32),
            "w_fc": jnp.asarray(fc_w.T, dtype=jnp.bfloat16),         # [D, 4D]
            "b_fc": rnd(lk[5], (4 * width,)),
            "w_proj": jnp.asarray(proj_w.T, dtype=jnp.bfloat16),     # [4D, D]
            "b_proj": jnp.zeros((width,), jnp.float32),
        })
    return {"layers": layer_params}


# --------------------------------------------------------------------------
# Pure-JAX f32 reference (PyTorch-faithful) for a tolerance check
# --------------------------------------------------------------------------

def reference_forward(x, params, heads):
    S, B, D = x.shape
    hd = D // heads
    x2 = jnp.transpose(x, (1, 0, 2)).astype(jnp.float32)      # [B, S, D]

    def ln(v, g, b):
        m = jnp.mean(v, -1, keepdims=True)
        var = jnp.mean(jnp.square(v - m), -1, keepdims=True)
        return (v - m) * jax.lax.rsqrt(var + 1e-5) * g + b

    for lp in params["layers"]:
        h = ln(x2, lp["ln1_g"], lp["ln1_b"])
        qkv = h @ lp["w_qkv"].astype(jnp.float32) + lp["b_qkv"]
        q, k, v = jnp.split(qkv, 3, axis=-1)
        q = q.reshape(B, S, heads, hd).transpose(0, 2, 1, 3)
        k = k.reshape(B, S, heads, hd).transpose(0, 2, 1, 3)
        v = v.reshape(B, S, heads, hd).transpose(0, 2, 1, 3)
        s = (q @ jnp.swapaxes(k, -1, -2)) * (hd ** -0.5)
        p = jax.nn.softmax(s, axis=-1)
        o = (p @ v).transpose(0, 2, 1, 3).reshape(B, S, D)
        x2 = x2 + o @ lp["w_out"].astype(jnp.float32) + lp["b_out"]
        h2 = ln(x2, lp["ln2_g"], lp["ln2_b"])
        m1 = h2 @ lp["w_fc"].astype(jnp.float32) + lp["b_fc"]
        m1 = m1 * jax.nn.sigmoid(1.702 * m1)
        x2 = x2 + m1 @ lp["w_proj"].astype(jnp.float32) + lp["b_proj"]
    return jnp.transpose(x2, (1, 0, 2))


if __name__ == "__main__":
    def run_case(S, B, width, heads, layers):
        key = jax.random.PRNGKey(0)
        pkey, xkey = jax.random.split(key)
        params = init_params(pkey, width=width, layers=layers, heads=heads)
        x = jax.random.normal(xkey, (S, B, width), jnp.float32)

        out, attn_probs = transformer_forward(x, params, heads=heads)
        jax.block_until_ready(out)

        assert out.shape == (S, B, width)
        assert attn_probs is None  # need_weights=False

        ref = reference_forward(x, params, heads)
        err = float(jnp.max(jnp.abs(out - ref)))
        assert err < 0.1, f"max abs err {err} too large"

    # x: [seq_len, batch, width]
    # head_dim = 32  -> per-batch attention kernel (lane-sliced heads)
    run_case(S=16, B=2, width=128, heads=4, layers=2)
    # head_dim = 128 -> head/query-tile gridded attention kernel
    run_case(S=16, B=2, width=256, heads=2, layers=2)

    print("KERNEL_OK")
</pallas_src>

<mosaic_0001>
module attributes {stable_mosaic.version = 11 : i64} {
  func.func @_ln_matmul_kernel(%arg0: i32, %arg1: i32, %arg2: memref<32x128xf32, #tpu.memory_space<vmem>>, %arg3: memref<1x128xf32, #tpu.memory_space<vmem>>, %arg4: memref<1x128xf32, #tpu.memory_space<vmem>>, %arg5: memref<128x384xbf16, #tpu.memory_space<vmem>>, %arg6: memref<1x384xf32, #tpu.memory_space<vmem>>, %arg7: memref<32x384xbf16, #tpu.memory_space<vmem>>, %arg8: memref<32x128xbf16, #tpu.memory_space<vmem>>) attributes {dimension_semantics = [#tpu.dimension_semantics<parallel>, #tpu.dimension_semantics<arbitrary>], iteration_bounds = array<i64: 1, 1>, scalar_prefetch = 0 : i64, scratch_operands = 1 : i64, tpu.core_type = #tpu.core_type<tc>, window_params = [{transform_indices = @transform_0, window_bounds = array<i64: 32, 128>}, {pipeline_mode = #tpu.pipeline_mode<synchronous>, transform_indices = @transform_1, window_bounds = array<i64: 1, 128>}, {pipeline_mode = #tpu.pipeline_mode<synchronous>, transform_indices = @transform_2, window_bounds = array<i64: 1, 128>}, {transform_indices = @transform_3, window_bounds = array<i64: 128, 384>}, {transform_indices = @transform_4, window_bounds = array<i64: 1, 384>}, {transform_indices = @transform_5, window_bounds = array<i64: 32, 384>}]} {
    %c0_i32 = arith.constant 0 : i32
    %0 = arith.cmpi eq, %arg1, %c0_i32 : i32
    %1 = arith.extui %0 : i1 to i32
    %c0_i32_0 = arith.constant 0 : i32
    %2 = arith.cmpi ne, %1, %c0_i32_0 : i32
    scf.if %2 {
      %c0_8 = arith.constant 0 : index
      %c0_9 = arith.constant 0 : index
      %11 = vector.load %arg2[%c0_8, %c0_9] : memref<32x128xf32, #tpu.memory_space<vmem>>, vector<32x128xf32>
      %cst_10 = arith.constant dense<0.000000e+00> : vector<32xf32>
      %12 = vector.multi_reduction <add>, %11, %cst_10 [1] : vector<32x128xf32> to vector<32xf32>
      %13 = vector.shape_cast %12 : vector<32xf32> to vector<32x1xf32>
      %cst_11 = arith.constant 1.280000e+02 : f32
      %14 = vector.broadcast %cst_11 : f32 to vector<32x1xf32>
      %15 = arith.divf %13, %14 : vector<32x1xf32>
      %16 = vector.broadcast %15 : vector<32x1xf32> to vector<32x128xf32>
      %17 = arith.subf %11, %16 : vector<32x128xf32>
      %18 = arith.mulf %17, %17 : vector<32x128xf32>
      %cst_12 = arith.constant dense<0.000000e+00> : vector<32xf32>
      %19 = vector.multi_reduction <add>, %18, %cst_12 [1] : vector<32x128xf32> to vector<32xf32>
      %20 = vector.shape_cast %19 : vector<32xf32> to vector<32x1xf32>
      %cst_13 = arith.constant 1.280000e+02 : f32
      %21 = vector.broadcast %cst_13 : f32 to vector<32x1xf32>
      %22 = arith.divf %20, %21 : vector<32x1xf32>
      %23 = vector.broadcast %15 : vector<32x1xf32> to vector<32x128xf32>
      %24 = arith.subf %11, %23 : vector<32x128xf32>
      %cst_14 = arith.constant 9.99999974E-6 : f32
      %25 = vector.broadcast %cst_14 : f32 to vector<32x1xf32>
      %26 = arith.addf %22, %25 : vector<32x1xf32>
      %27 = math.rsqrt %26 : vector<32x1xf32>
      %28 = vector.broadcast %27 : vector<32x1xf32> to vector<32x128xf32>
      %29 = arith.mulf %24, %28 : vector<32x128xf32>
      %c0_15 = arith.constant 0 : index
      %c0_16 = arith.constant 0 : index
      %30 = vector.load %arg3[%c0_15, %c0_16] : memref<1x128xf32, #tpu.memory_space<vmem>>, vector<1x128xf32>
      %31 = vector.broadcast %30 : vector<1x128xf32> to vector<32x128xf32>
      %32 = arith.mulf %29, %31 : vector<32x128xf32>
      %c0_17 = arith.constant 0 : index
      %c0_18 = arith.constant 0 : index
      %33 = vector.load %arg4[%c0_17, %c0_18] : memref<1x128xf32, #tpu.memory_space<vmem>>, vector<1x128xf32>
      %34 = vector.broadcast %33 : vector<1x128xf32> to vector<32x128xf32>
      %35 = arith.addf %32, %34 : vector<32x128xf32>
      %36 = arith.truncf %35 : vector<32x128xf32> to vector<32x128xbf16>
      %c0_19 = arith.constant 0 : index
      %c0_20 = arith.constant 0 : index
      %37 = vector.load %arg8[%c0_19, %c0_20] : memref<32x128xbf16, #tpu.memory_space<vmem>>, vector<32x128xbf16>
      tpu.vector_store %arg8[%c0_19, %c0_20], %36 {strides = array<i32>} : memref<32x128xbf16, #tpu.memory_space<vmem>>, vector<32x128xbf16>,
    } else {
    }
    %c0 = arith.constant 0 : index
    %c0_1 = arith.constant 0 : index
    %3 = vector.load %arg8[%c0, %c0_1] : memref<32x128xbf16, #tpu.memory_space<vmem>>, vector<32x128xbf16>
    %c0_2 = arith.constant 0 : index
    %c0_3 = arith.constant 0 : index
    %4 = vector.load %arg5[%c0_2, %c0_3] : memref<128x384xbf16, #tpu.memory_space<vmem>>, vector<128x384xbf16>
    %cst = arith.constant dense<0.000000e+00> : vector<32x384xf32>
    %5 = tpu.matmul %3, %4, %cst {dimension_numbers = #tpu.dot_dimension_numbers<[1], [0], [0], [1], [0, 0, 1, 1], [], []>} : vector<32x128xbf16>, vector<128x384xbf16>, vector<32x384xf32> -> vector<32x384xf32>
    %c0_4 = arith.constant 0 : index
    %c0_5 = arith.constant 0 : index
    %6 = vector.load %arg6[%c0_4, %c0_5] : memref<1x384xf32, #tpu.memory_space<vmem>>, vector<1x384xf32>
    %7 = vector.broadcast %6 : vector<1x384xf32> to vector<32x384xf32>
    %8 = arith.addf %5, %7 : vector<32x384xf32>
    %9 = arith.truncf %8 : vector<32x384xf32> to vector<32x384xbf16>
    %c0_6 = arith.constant 0 : index
    %c0_7 = arith.constant 0 : index
    %10 = vector.load %arg7[%c0_6, %c0_7] : memref<32x384xbf16, #tpu.memory_space<vmem>>, vector<32x384xbf16>
    tpu.vector_store %arg7[%c0_6, %c0_7], %9 {strides = array<i32>} : memref<32x384xbf16, #tpu.memory_space<vmem>>, vector<32x384xbf16>,
    return
  }
  func.func @transform_0(%arg0: i32, %arg1: i32) -> (i32, i32) {
    %c0_i32 = arith.constant 0 : i32
    %c0_i32_0 = arith.constant 0 : i32
    return %arg0, %c0_i32 : i32, i32
  }
  func.func @transform_1(%arg0: i32, %arg1: i32) -> (i32, i32) {
    %c0_i32 = arith.constant 0 : i32
    %c0_i32_0 = arith.constant 0 : i32
    %c0_i32_1 = arith.constant 0 : i32
    return %c0_i32, %c0_i32_0 : i32, i32
  }
  func.func @transform_2(%arg0: i32, %arg1: i32) -> (i32, i32) {
    %c0_i32 = arith.constant 0 : i32
    %c0_i32_0 = arith.constant 0 : i32
    %c0_i32_1 = arith.constant 0 : i32
    return %c0_i32, %c0_i32_0 : i32, i32
  }
  func.func @transform_3(%arg0: i32, %arg1: i32) -> (i32, i32) {
    %c0_i32 = arith.constant 0 : i32
    %c0_i32_0 = arith.constant 0 : i32
    return %c0_i32, %arg1 : i32, i32
  }
  func.func @transform_4(%arg0: i32, %arg1: i32) -> (i32, i32) {
    %c0_i32 = arith.constant 0 : i32
    %c0_i32_0 = arith.constant 0 : i32
    return %c0_i32, %arg1 : i32, i32
  }
  func.func @transform_5(%arg0: i32, %arg1: i32) -> (i32, i32) {
    %c0_i32 = arith.constant 0 : i32
    return %arg0, %arg1 : i32, i32
  }
}

module attributes {stable_mosaic.version = 11 : i64} {
  func.func @_mha_batch_kernel(%arg0: i32, %arg1: memref<16x384xbf16, #tpu.memory_space<vmem>>, %arg2: memref<16x128xbf16, #tpu.memory_space<vmem>>) attributes {dimension_semantics = [#tpu.dimension_semantics<parallel>], iteration_bounds = array<i64: 2>, scalar_prefetch = 0 : i64, scratch_operands = 0 : i64, tpu.core_type = #tpu.core_type<tc>, window_params = [{transform_indices = @transform_0, window_bounds = array<i64: 16, 384>}, {transform_indices = @transform_1, window_bounds = array<i64: 16, 128>}]} {
    %c0 = arith.constant 0 : index
    %c0_0 = arith.constant 0 : index
    %0 = vector.load %arg1[%c0, %c0_0] : memref<16x384xbf16, #tpu.memory_space<vmem>>, vector<16x32xbf16>
    %c0_1 = arith.constant 0 : index
    %c128 = arith.constant 128 : index
    %1 = vector.load %arg1[%c0_1, %c128] : memref<16x384xbf16, #tpu.memory_space<vmem>>, vector<16x32xbf16>
    %c0_2 = arith.constant 0 : index
    %c256 = arith.constant 256 : index
    %2 = vector.load %arg1[%c0_2, %c256] : memref<16x384xbf16, #tpu.memory_space<vmem>>, vector<16x32xbf16>
    %cst = arith.constant dense<0.000000e+00> : vector<16x16xf32>
    %3 = tpu.matmul %0, %1, %cst {dimension_numbers = #tpu.dot_dimension_numbers<[1], [1], [0], [0], [0, 0, 1, 0], [], []>} : vector<16x32xbf16>, vector<16x32xbf16>, vector<16x16xf32> -> vector<16x16xf32>
    %cst_3 = arith.constant 0.176776692 : f32
    %4 = vector.broadcast %cst_3 : f32 to vector<16x16xf32>
    %5 = arith.mulf %3, %4 : vector<16x16xf32>
    %cst_4 = arith.constant dense<0xFF800000> : vector<16xf32>
    %6 = vector.multi_reduction <maximumf>, %5, %cst_4 [1] : vector<16x16xf32> to vector<16xf32>
    %7 = vector.shape_cast %6 : vector<16xf32> to vector<16x1xf32>
    %8 = vector.broadcast %7 : vector<16x1xf32> to vector<16x16xf32>
    %9 = arith.subf %5, %8 : vector<16x16xf32>
    %10 = math.exp %9 : vector<16x16xf32>
    %cst_5 = arith.constant dense<0.000000e+00> : vector<16xf32>
    %11 = vector.multi_reduction <add>, %10, %cst_5 [1] : vector<16x16xf32> to vector<16xf32>
    %12 = vector.shape_cast %11 : vector<16xf32> to vector<16x1xf32>
    %13 = tpu.reciprocal %12 {approx = true} : vector<16x1xf32> -> vector<16x1xf32>
    %14 = vector.broadcast %13 : vector<16x1xf32> to vector<16x16xf32>
    %15 = arith.mulf %10, %14 : vector<16x16xf32>
    %16 = arith.truncf %15 : vector<16x16xf32> to vector<16x16xbf16>
    %cst_6 = arith.constant dense<0.000000e+00> : vector<16x32xf32>
    %17 = tpu.matmul %16, %2, %cst_6 {dimension_numbers = #tpu.dot_dimension_numbers<[1], [0], [0], [1], [0, 0, 1, 1], [], []>} : vector<16x16xbf16>, vector<16x32xbf16>, vector<16x32xf32> -> vector<16x32xf32>
    %18 = arith.truncf %17 : vector<16x32xf32> to vector<16x32xbf16>
    %c0_7 = arith.constant 0 : index
    %c0_8 = arith.constant 0 : index
    %19 = vector.load %arg2[%c0_7, %c0_8] : memref<16x128xbf16, #tpu.memory_space<vmem>>, vector<16x32xbf16>
    tpu.vector_store %arg2[%c0_7, %c0_8], %18 {strides = array<i32>} : memref<16x128xbf16, #tpu.memory_space<vmem>>, vector<16x32xbf16>,
    %c0_9 = arith.constant 0 : index
    %c32 = arith.constant 32 : index
    %20 = vector.load %arg1[%c0_9, %c32] : memref<16x384xbf16, #tpu.memory_space<vmem>>, vector<16x32xbf16>
    %c0_10 = arith.constant 0 : index
    %c160 = arith.constant 160 : index
    %21 = vector.load %arg1[%c0_10, %c160] : memref<16x384xbf16, #tpu.memory_space<vmem>>, vector<16x32xbf16>
    %c0_11 = arith.constant 0 : index
    %c288 = arith.constant 288 : index
    %22 = vector.load %arg1[%c0_11, %c288] : memref<16x384xbf16, #tpu.memory_space<vmem>>, vector<16x32xbf16>
    %cst_12 = arith.constant dense<0.000000e+00> : vector<16x16xf32>
    %23 = tpu.matmul %20, %21, %cst_12 {dimension_numbers = #tpu.dot_dimension_numbers<[1], [1], [0], [0], [0, 0, 1, 0], [], []>} : vector<16x32xbf16>, vector<16x32xbf16>, vector<16x16xf32> -> vector<16x16xf32>
    %cst_13 = arith.constant 0.176776692 : f32
    %24 = vector.broadcast %cst_13 : f32 to vector<16x16xf32>
    %25 = arith.mulf %23, %24 : vector<16x16xf32>
    %cst_14 = arith.constant dense<0xFF800000> : vector<16xf32>
    %26 = vector.multi_reduction <maximumf>, %25, %cst_14 [1] : vector<16x16xf32> to vector<16xf32>
    %27 = vector.shape_cast %26 : vector<16xf32> to vector<16x1xf32>
    %28 = vector.broadcast %27 : vector<16x1xf32> to vector<16x16xf32>
    %29 = arith.subf %25, %28 : vector<16x16xf32>
    %30 = math.exp %29 : vector<16x16xf32>
    %cst_15 = arith.constant dense<0.000000e+00> : vector<16xf32>
    %31 = vector.multi_reduction <add>, %30, %cst_15 [1] : vector<16x16xf32> to vector<16xf32>
    %32 = vector.shape_cast %31 : vector<16xf32> to vector<16x1xf32>
    %33 = tpu.reciprocal %32 {approx = true} : vector<16x1xf32> -> vector<16x1xf32>
    %34 = vector.broadcast %33 : vector<16x1xf32> to vector<16x16xf32>
    %35 = arith.mulf %30, %34 : vector<16x16xf32>
    %36 = arith.truncf %35 : vector<16x16xf32> to vector<16x16xbf16>
    %cst_16 = arith.constant dense<0.000000e+00> : vector<16x32xf32>
    %37 = tpu.matmul %36, %22, %cst_16 {dimension_numbers = #tpu.dot_dimension_numbers<[1], [0], [0], [1], [0, 0, 1, 1], [], []>} : vector<16x16xbf16>, vector<16x32xbf16>, vector<16x32xf32> -> vector<16x32xf32>
    %38 = arith.truncf %37 : vector<16x32xf32> to vector<16x32xbf16>
    %c0_17 = arith.constant 0 : index
    %c32_18 = arith.constant 32 : index
    %39 = vector.load %arg2[%c0_17, %c32_18] : memref<16x128xbf16, #tpu.memory_space<vmem>>, vector<16x32xbf16>
    tpu.vector_store %arg2[%c0_17, %c32_18], %38 {strides = array<i32>} : memref<16x128xbf16, #tpu.memory_space<vmem>>, vector<16x32xbf16>,
    %c0_19 = arith.constant 0 : index
    %c64 = arith.constant 64 : index
    %40 = vector.load %arg1[%c0_19, %c64] : memref<16x384xbf16, #tpu.memory_space<vmem>>, vector<16x32xbf16>
    %c0_20 = arith.constant 0 : index
    %c192 = arith.constant 192 : index
    %41 = vector.load %arg1[%c0_20, %c192] : memref<16x384xbf16, #tpu.memory_space<vmem>>, vector<16x32xbf16>
    %c0_21 = arith.constant 0 : index
    %c320 = arith.constant 320 : index
    %42 = vector.load %arg1[%c0_21, %c320] : memref<16x384xbf16, #tpu.memory_space<vmem>>, vector<16x32xbf16>
    %cst_22 = arith.constant dense<0.000000e+00> : vector<16x16xf32>
    %43 = tpu.matmul %40, %41, %cst_22 {dimension_numbers = #tpu.dot_dimension_numbers<[1], [1], [0], [0], [0, 0, 1, 0], [], []>} : vector<16x32xbf16>, vector<16x32xbf16>, vector<16x16xf32> -> vector<16x16xf32>
    %cst_23 = arith.constant 0.176776692 : f32
    %44 = vector.broadcast %cst_23 : f32 to vector<16x16xf32>
    %45 = arith.mulf %43, %44 : vector<16x16xf32>
    %cst_24 = arith.constant dense<0xFF800000> : vector<16xf32>
    %46 = vector.multi_reduction <maximumf>, %45, %cst_24 [1] : vector<16x16xf32> to vector<16xf32>
    %47 = vector.shape_cast %46 : vector<16xf32> to vector<16x1xf32>
    %48 = vector.broadcast %47 : vector<16x1xf32> to vector<16x16xf32>
    %49 = arith.subf %45, %48 : vector<16x16xf32>
    %50 = math.exp %49 : vector<16x16xf32>
    %cst_25 = arith.constant dense<0.000000e+00> : vector<16xf32>
    %51 = vector.multi_reduction <add>, %50, %cst_25 [1] : vector<16x16xf32> to vector<16xf32>
    %52 = vector.shape_cast %51 : vector<16xf32> to vector<16x1xf32>
    %53 = tpu.reciprocal %52 {approx = true} : vector<16x1xf32> -> vector<16x1xf32>
    %54 = vector.broadcast %53 : vector<16x1xf32> to vector<16x16xf32>
    %55 = arith.mulf %50, %54 : vector<16x16xf32>
    %56 = arith.truncf %55 : vector<16x16xf32> to vector<16x16xbf16>
    %cst_26 = arith.constant dense<0.000000e+00> : vector<16x32xf32>
    %57 = tpu.matmul %56, %42, %cst_26 {dimension_numbers = #tpu.dot_dimension_numbers<[1], [0], [0], [1], [0, 0, 1, 1], [], []>} : vector<16x16xbf16>, vector<16x32xbf16>, vector<16x32xf32> -> vector<16x32xf32>
    %58 = arith.truncf %57 : vector<16x32xf32> to vector<16x32xbf16>
    %c0_27 = arith.constant 0 : index
    %c64_28 = arith.constant 64 : index
    %59 = vector.load %arg2[%c0_27, %c64_28] : memref<16x128xbf16, #tpu.memory_space<vmem>>, vector<16x32xbf16>
    tpu.vector_store %arg2[%c0_27, %c64_28], %58 {strides = array<i32>} : memref<16x128xbf16, #tpu.memory_space<vmem>>, vector<16x32xbf16>,
    %c0_29 = arith.constant 0 : index
    %c96 = arith.constant 96 : index
    %60 = vector.load %arg1[%c0_29, %c96] : memref<16x384xbf16, #tpu.memory_space<vmem>>, vector<16x32xbf16>
    %c0_30 = arith.constant 0 : index
    %c224 = arith.constant 224 : index
    %61 = vector.load %arg1[%c0_30, %c224] : memref<16x384xbf16, #tpu.memory_space<vmem>>, vector<16x32xbf16>
    %c0_31 = arith.constant 0 : index
    %c352 = arith.constant 352 : index
    %62 = vector.load %arg1[%c0_31, %c352] : memref<16x384xbf16, #tpu.memory_space<vmem>>, vector<16x32xbf16>
    %cst_32 = arith.constant dense<0.000000e+00> : vector<16x16xf32>
    %63 = tpu.matmul %60, %61, %cst_32 {dimension_numbers = #tpu.dot_dimension_numbers<[1], [1], [0], [0], [0, 0, 1, 0], [], []>} : vector<16x32xbf16>, vector<16x32xbf16>, vector<16x16xf32> -> vector<16x16xf32>
    %cst_33 = arith.constant 0.176776692 : f32
    %64 = vector.broadcast %cst_33 : f32 to vector<16x16xf32>
    %65 = arith.mulf %63, %64 : vector<16x16xf32>
    %cst_34 = arith.constant dense<0xFF800000> : vector<16xf32>
    %66 = vector.multi_reduction <maximumf>, %65, %cst_34 [1] : vector<16x16xf32> to vector<16xf32>
    %67 = vector.shape_cast %66 : vector<16xf32> to vector<16x1xf32>
    %68 = vector.broadcast %67 : vector<16x1xf32> to vector<16x16xf32>
    %69 = arith.subf %65, %68 : vector<16x16xf32>
    %70 = math.exp %69 : vector<16x16xf32>
    %cst_35 = arith.constant dense<0.000000e+00> : vector<16xf32>
    %71 = vector.multi_reduction <add>, %70, %cst_35 [1] : vector<16x16xf32> to vector<16xf32>
    %72 = vector.shape_cast %71 : vector<16xf32> to vector<16x1xf32>
    %73 = tpu.reciprocal %72 {approx = true} : vector<16x1xf32> -> vector<16x1xf32>
    %74 = vector.broadcast %73 : vector<16x1xf32> to vector<16x16xf32>
    %75 = arith.mulf %70, %74 : vector<16x16xf32>
    %76 = arith.truncf %75 : vector<16x16xf32> to vector<16x16xbf16>
    %cst_36 = arith.constant dense<0.000000e+00> : vector<16x32xf32>
    %77 = tpu.matmul %76, %62, %cst_36 {dimension_numbers = #tpu.dot_dimension_numbers<[1], [0], [0], [1], [0, 0, 1, 1], [], []>} : vector<16x16xbf16>, vector<16x32xbf16>, vector<16x32xf32> -> vector<16x32xf32>
    %78 = arith.truncf %77 : vector<16x32xf32> to vector<16x32xbf16>
    %c0_37 = arith.constant 0 : index
    %c96_38 = arith.constant 96 : index
    %79 = vector.load %arg2[%c0_37, %c96_38] : memref<16x128xbf16, #tpu.memory_space<vmem>>, vector<16x32xbf16>
    tpu.vector_store %arg2[%c0_37, %c96_38], %78 {strides = array<i32>} : memref<16x128xbf16, #tpu.memory_space<vmem>>, vector<16x32xbf16>,
    return
  }
  func.func @transform_0(%arg0: i32) -> (i32, i32) {
    %c0_i32 = arith.constant 0 : i32
    %c0_i32_0 = arith.constant 0 : i32
    return %arg0, %c0_i32 : i32, i32
  }
  func.func @transform_1(%arg0: i32) -> (i32, i32) {
    %c0_i32 = arith.constant 0 : i32
    %c0_i32_0 = arith.constant 0 : i32
    return %arg0, %c0_i32 : i32, i32
  }
}

module attributes {stable_mosaic.version = 11 : i64} {
  func.func @_ln_matmul_kernel(%arg0: i32, %arg1: i32, %arg2: memref<32x128xf32, #tpu.memory_space<vmem>>, %arg3: memref<1x128xf32, #tpu.memory_space<vmem>>, %arg4: memref<1x128xf32, #tpu.memory_space<vmem>>, %arg5: memref<128x512xbf16, #tpu.memory_space<vmem>>, %arg6: memref<1x512xf32, #tpu.memory_space<vmem>>, %arg7: memref<32x512xbf16, #tpu.memory_space<vmem>>, %arg8: memref<32x128xbf16, #tpu.memory_space<vmem>>) attributes {dimension_semantics = [#tpu.dimension_semantics<parallel>, #tpu.dimension_semantics<arbitrary>], iteration_bounds = array<i64: 1, 1>, scalar_prefetch = 0 : i64, scratch_operands = 1 : i64, tpu.core_type = #tpu.core_type<tc>, window_params = [{transform_indices = @transform_0, window_bounds = array<i64: 32, 128>}, {pipeline_mode = #tpu.pipeline_mode<synchronous>, transform_indices = @transform_1, window_bounds = array<i64: 1, 128>}, {pipeline_mode = #tpu.pipeline_mode<synchronous>, transform_indices = @transform_2, window_bounds = array<i64: 1, 128>}, {transform_indices = @transform_3, window_bounds = array<i64: 128, 512>}, {transform_indices = @transform_4, window_bounds = array<i64: 1, 512>}, {transform_indices = @transform_5, window_bounds = array<i64: 32, 512>}]} {
    %c0_i32 = arith.constant 0 : i32
    %0 = arith.cmpi eq, %arg1, %c0_i32 : i32
    %1 = arith.extui %0 : i1 to i32
    %c0_i32_0 = arith.constant 0 : i32
    %2 = arith.cmpi ne, %1, %c0_i32_0 : i32
    scf.if %2 {
      %c0_10 = arith.constant 0 : index
      %c0_11 = arith.constant 0 : index
      %19 = vector.load %arg2[%c0_10, %c0_11] : memref<32x128xf32, #tpu.memory_space<vmem>>, vector<32x128xf32>
      %cst_12 = arith.constant dense<0.000000e+00> : vector<32xf32>
      %20 = vector.multi_reduction <add>, %19, %cst_12 [1] : vector<32x128xf32> to vector<32xf32>
      %21 = vector.shape_cast %20 : vector<32xf32> to vector<32x1xf32>
      %cst_13 = arith.constant 1.280000e+02 : f32
      %22 = vector.broadcast %cst_13 : f32 to vector<32x1xf32>
      %23 = arith.divf %21, %22 : vector<32x1xf32>
      %24 = vector.broadcast %23 : vector<32x1xf32> to vector<32x128xf32>
      %25 = arith.subf %19, %24 : vector<32x128xf32>
      %26 = arith.mulf %25, %25 : vector<32x128xf32>
      %cst_14 = arith.constant dense<0.000000e+00> : vector<32xf32>
      %27 = vector.multi_reduction <add>, %26, %cst_14 [1] : vector<32x128xf32> to vector<32xf32>
      %28 = vector.shape_cast %27 : vector<32xf32> to vector<32x1xf32>
      %cst_15 = arith.constant 1.280000e+02 : f32
      %29 = vector.broadcast %cst_15 : f32 to vector<32x1xf32>
      %30 = arith.divf %28, %29 : vector<32x1xf32>
      %31 = vector.broadcast %23 : vector<32x1xf32> to vector<32x128xf32>
      %32 = arith.subf %19, %31 : vector<32x128xf32>
      %cst_16 = arith.constant 9.99999974E-6 : f32
      %33 = vector.broadcast %cst_16 : f32 to vector<32x1xf32>
      %34 = arith.addf %30, %33 : vector<32x1xf32>
      %35 = math.rsqrt %34 : vector<32x1xf32>
      %36 = vector.broadcast %35 : vector<32x1xf32> to vector<32x128xf32>
      %37 = arith.mulf %32, %36 : vector<32x128xf32>
      %c0_17 = arith.constant 0 : index
      %c0_18 = arith.constant 0 : index
      %38 = vector.load %arg3[%c0_17, %c0_18] : memref<1x128xf32, #tpu.memory_space<vmem>>, vector<1x128xf32>
      %39 = vector.broadcast %38 : vector<1x128xf32> to vector<32x128xf32>
      %40 = arith.mulf %37, %39 : vector<32x128xf32>
      %c0_19 = arith.constant 0 : index
      %c0_20 = arith.constant 0 : index
      %41 = vector.load %arg4[%c0_19, %c0_20] : memref<1x128xf32, #tpu.memory_space<vmem>>, vector<1x128xf32>
      %42 = vector.broadcast %41 : vector<1x128xf32> to vector<32x128xf32>
      %43 = arith.addf %40, %42 : vector<32x128xf32>
      %44 = arith.truncf %43 : vector<32x128xf32> to vector<32x128xbf16>
      %c0_21 = arith.constant 0 : index
      %c0_22 = arith.constant 0 : index
      %45 = vector.load %arg8[%c0_21, %c0_22] : memref<32x128xbf16, #tpu.memory_space<vmem>>, vector<32x128xbf16>
      tpu.vector_store %arg8[%c0_21, %c0_22], %44 {strides = array<i32>} : memref<32x128xbf16, #tpu.memory_space<vmem>>, vector<32x128xbf16>,
    } else {
    }
    %c0 = arith.constant 0 : index
    %c0_1 = arith.constant 0 : index
    %3 = vector.load %arg8[%c0, %c0_1] : memref<32x128xbf16, #tpu.memory_space<vmem>>, vector<32x128xbf16>
    %c0_2 = arith.constant 0 : index
    %c0_3 = arith.constant 0 : index
    %4 = vector.load %arg5[%c0_2, %c0_3] : memref<128x512xbf16, #tpu.memory_space<vmem>>, vector<128x512xbf16>
    %cst = arith.constant dense<0.000000e+00> : vector<32x512xf32>
    %5 = tpu.matmul %3, %4, %cst {dimension_numbers = #tpu.dot_dimension_numbers<[1], [0], [0], [1], [0, 0, 1, 1], [], []>} : vector<32x128xbf16>, vector<128x512xbf16>, vector<32x512xf32> -> vector<32x512xf32>
    %c0_4 = arith.constant 0 : index
    %c0_5 = arith.constant 0 : index
    %6 = vector.load %arg6[%c0_4, %c0_5] : memref<1x512xf32, #tpu.memory_space<vmem>>, vector<1x512xf32>
    %7 = vector.broadcast %6 : vector<1x512xf32> to vector<32x512xf32>
    %8 = arith.addf %5, %7 : vector<32x512xf32>
    %cst_6 = arith.constant 1.702000e+00 : f32
    %9 = vector.broadcast %cst_6 : f32 to vector<32x512xf32>
    %10 = arith.mulf %9, %8 : vector<32x512xf32>
    %11 = arith.negf %10 : vector<32x512xf32>
    %12 = math.exp %11 : vector<32x512xf32>
    %cst_7 = arith.constant 1.000000e+00 : f32
    %13 = vector.broadcast %cst_7 : f32 to vector<32x512xf32>
    %14 = arith.addf %13, %12 : vector<32x512xf32>
    %15 = arith.divf %13, %14 : vector<32x512xf32>
    %16 = arith.mulf %8, %15 : vector<32x512xf32>
    %17 = arith.truncf %16 : vector<32x512xf32> to vector<32x512xbf16>
    %c0_8 = arith.constant 0 : index
    %c0_9 = arith.constant 0 : index
    %18 = vector.load %arg7[%c0_8, %c0_9] : memref<32x512xbf16, #tpu.memory_space<vmem>>, vector<32x512xbf16>
    tpu.vector_store %arg7[%c0_8, %c0_9], %17 {strides = array<i32>} : memref<32x512xbf16, #tpu.memory_space<vmem>>, vector<32x512xbf16>,
    return
  }
  func.func @transform_0(%arg0: i32, %arg1: i32) -> (i32, i32) {
    %c0_i32 = arith.constant 0 : i32
    %c0_i32_0 = arith.constant 0 : i32
    return %arg0, %c0_i32 : i32, i32
  }
  func.func @transform_1(%arg0: i32, %arg1: i32) -> (i32, i32) {
    %c0_i32 = arith.constant 0 : i32
    %c0_i32_0 = arith.constant 0 : i32
    %c0_i32_1 = arith.constant 0 : i32
    return %c0_i32, %c0_i32_0 : i32, i32
  }
  func.func @transform_2(%arg0: i32, %arg1: i32) -> (i32, i32) {
    %c0_i32 = arith.constant 0 : i32
    %c0_i32_0 = arith.constant 0 : i32
    %c0_i32_1 = arith.constant 0 : i32
    return %c0_i32, %c0_i32_0 : i32, i32
  }
  func.func @transform_3(%arg0: i32, %arg1: i32) -> (i32, i32) {
    %c0_i32 = arith.constant 0 : i32
    %c0_i32_0 = arith.constant 0 : i32
    return %c0_i32, %arg1 : i32, i32
  }
  func.func @transform_4(%arg0: i32, %arg1: i32) -> (i32, i32) {
    %c0_i32 = arith.constant 0 : i32
    %c0_i32_0 = arith.constant 0 : i32
    return %c0_i32, %arg1 : i32, i32
  }
  func.func @transform_5(%arg0: i32, %arg1: i32) -> (i32, i32) {
    %c0_i32 = arith.constant 0 : i32
    return %arg0, %arg1 : i32, i32
  }
}

module attributes {stable_mosaic.version = 11 : i64} {
  func.func @_matmul_res_kernel(%arg0: i32, %arg1: i32, %arg2: i32, %arg3: memref<32x128xbf16, #tpu.memory_space<vmem>>, %arg4: memref<128x128xbf16, #tpu.memory_space<vmem>>, %arg5: memref<1x128xf32, #tpu.memory_space<vmem>>, %arg6: memref<32x128xf32, #tpu.memory_space<vmem>>, %arg7: memref<32x128xf32, #tpu.memory_space<vmem>>, %arg8: memref<32x128xf32, #tpu.memory_space<vmem>>) attributes {dimension_semantics = [#tpu.dimension_semantics<parallel>, #tpu.dimension_semantics<parallel>, #tpu.dimension_semantics<arbitrary>], iteration_bounds = array<i64: 1, 1, 1>, scalar_prefetch = 0 : i64, scratch_operands = 1 : i64, tpu.core_type = #tpu.core_type<tc>, window_params = [{transform_indices = @transform_0, window_bounds = array<i64: 32, 128>}, {transform_indices = @transform_1, window_bounds = array<i64: 128, 128>}, {transform_indices = @transform_2, window_bounds = array<i64: 1, 128>}, {transform_indices = @transform_3, window_bounds = array<i64: 32, 128>}, {transform_indices = @transform_4, window_bounds = array<i64: 32, 128>}]} {
    %c0_i32 = arith.constant 0 : i32
    %0 = arith.cmpi eq, %arg2, %c0_i32 : i32
    %1 = arith.extui %0 : i1 to i32
    %c0_i32_0 = arith.constant 0 : i32
    %2 = arith.cmpi ne, %1, %c0_i32_0 : i32
    scf.if %2 {
      %cst_10 = arith.constant 0.000000e+00 : f32
      %12 = vector.broadcast %cst_10 : f32 to vector<32x128xf32>
      %c0_11 = arith.constant 0 : index
      %c0_12 = arith.constant 0 : index
      %13 = vector.load %arg8[%c0_11, %c0_12] : memref<32x128xf32, #tpu.memory_space<vmem>>, vector<32x128xf32>
      tpu.vector_store %arg8[%c0_11, %c0_12], %12 {strides = array<i32>} : memref<32x128xf32, #tpu.memory_space<vmem>>, vector<32x128xf32>,
    } else {
    }
    %c0 = arith.constant 0 : index
    %c0_1 = arith.constant 0 : index
    %3 = vector.load %arg3[%c0, %c0_1] : memref<32x128xbf16, #tpu.memory_space<vmem>>, vector<32x128xbf16>
    %c0_2 = arith.constant 0 : index
    %c0_3 = arith.constant 0 : index
    %4 = vector.load %arg8[%c0_2, %c0_3] : memref<32x128xf32, #tpu.memory_space<vmem>>, vector<32x128xf32>
    %c0_4 = arith.constant 0 : index
    %c0_5 = arith.constant 0 : index
    %5 = vector.load %arg4[%c0_4, %c0_5] : memref<128x128xbf16, #tpu.memory_space<vmem>>, vector<128x128xbf16>
    %cst = arith.constant dense<0.000000e+00> : vector<32x128xf32>
    %6 = tpu.matmul %3, %5, %cst {dimension_numbers = #tpu.dot_dimension_numbers<[1], [0], [0], [1], [0, 0, 1, 1], [], []>} : vector<32x128xbf16>, vector<128x128xbf16>, vector<32x128xf32> -> vector<32x128xf32>
    %7 = arith.addf %4, %6 : vector<32x128xf32>
    %c0_6 = arith.constant 0 : index
    %c0_7 = arith.constant 0 : index
    %8 = vector.load %arg8[%c0_6, %c0_7] : memref<32x128xf32, #tpu.memory_space<vmem>>, vector<32x128xf32>
    tpu.vector_store %arg8[%c0_6, %c0_7], %7 {strides = array<i32>} : memref<32x128xf32, #tpu.memory_space<vmem>>, vector<32x128xf32>,
    %c0_i32_8 = arith.constant 0 : i32
    %9 = arith.cmpi eq, %arg2, %c0_i32_8 : i32
    %10 = arith.extui %9 : i1 to i32
    %c0_i32_9 = arith.constant 0 : i32
    %11 = arith.cmpi ne, %10, %c0_i32_9 : i32
    scf.if %11 {
      %c0_10 = arith.constant 0 : index
      %c0_11 = arith.constant 0 : index
      %12 = vector.load %arg8[%c0_10, %c0_11] : memref<32x128xf32, #tpu.memory_space<vmem>>, vector<32x128xf32>
      %c0_12 = arith.constant 0 : index
      %c0_13 = arith.constant 0 : index
      %13 = vector.load %arg5[%c0_12, %c0_13] : memref<1x128xf32, #tpu.memory_space<vmem>>, vector<1x128xf32>
      %14 = vector.broadcast %13 : vector<1x128xf32> to vector<32x128xf32>
      %15 = arith.addf %12, %14 : vector<32x128xf32>
      %c0_14 = arith.constant 0 : index
      %c0_15 = arith.constant 0 : index
      %16 = vector.load %arg6[%c0_14, %c0_15] : memref<32x128xf32, #tpu.memory_space<vmem>>, vector<32x128xf32>
      %17 = arith.addf %15, %16 : vector<32x128xf32>
      %c0_16 = arith.constant 0 : index
      %c0_17 = arith.constant 0 : index
      %18 = vector.load %arg7[%c0_16, %c0_17] : memref<32x128xf32, #tpu.memory_space<vmem>>, vector<32x128xf32>
      tpu.vector_store %arg7[%c0_16, %c0_17], %17 {strides = array<i32>} : memref<32x128xf32, #tpu.memory_space<vmem>>, vector<32x128xf32>,
    } else {
    }
    return
  }
  func.func @transform_0(%arg0: i32, %arg1: i32, %arg2: i32) -> (i32, i32) {
    %c0_i32 = arith.constant 0 : i32
    return %arg0, %arg2 : i32, i32
  }
  func.func @transform_1(%arg0: i32, %arg1: i32, %arg2: i32) -> (i32, i32) {
    %c0_i32 = arith.constant 0 : i32
    return %arg2, %arg1 : i32, i32
  }
  func.func @transform_2(%arg0: i32, %arg1: i32, %arg2: i32) -> (i32, i32) {
    %c0_i32 = arith.constant 0 : i32
    %c0_i32_0 = arith.constant 0 : i32
    return %c0_i32, %arg1 : i32, i32
  }
  func.func @transform_3(%arg0: i32, %arg1: i32, %arg2: i32) -> (i32, i32) {
    %c0_i32 = arith.constant 0 : i32
    return %arg0, %arg1 : i32, i32
  }
  func.func @transform_4(%arg0: i32, %arg1: i32, %arg2: i32) -> (i32, i32) {
    %c0_i32 = arith.constant 0 : i32
    return %arg0, %arg1 : i32, i32
  }
}

module attributes {stable_mosaic.version = 11 : i64} {
  func.func @_matmul_res_kernel(%arg0: i32, %arg1: i32, %arg2: i32, %arg3: memref<32x512xbf16, #tpu.memory_space<vmem>>, %arg4: memref<512x128xbf16, #tpu.memory_space<vmem>>, %arg5: memref<1x128xf32, #tpu.memory_space<vmem>>, %arg6: memref<32x128xf32, #tpu.memory_space<vmem>>, %arg7: memref<32x128xf32, #tpu.memory_space<vmem>>, %arg8: memref<32x128xf32, #tpu.memory_space<vmem>>) attributes {dimension_semantics = [#tpu.dimension_semantics<parallel>, #tpu.dimension_semantics<parallel>, #tpu.dimension_semantics<arbitrary>], iteration_bounds = array<i64: 1, 1, 1>, scalar_prefetch = 0 : i64, scratch_operands = 1 : i64, tpu.core_type = #tpu.core_type<tc>, window_params = [{transform_indices = @transform_0, window_bounds = array<i64: 32, 512>}, {transform_indices = @transform_1, window_bounds = array<i64: 512, 128>}, {transform_indices = @transform_2, window_bounds = array<i64: 1, 128>}, {transform_indices = @transform_3, window_bounds = array<i64: 32, 128>}, {transform_indices = @transform_4, window_bounds = array<i64: 32, 128>}]} {
    %c0_i32 = arith.constant 0 : i32
    %0 = arith.cmpi eq, %arg2, %c0_i32 : i32
    %1 = arith.extui %0 : i1 to i32
    %c0_i32_0 = arith.constant 0 : i32
    %2 = arith.cmpi ne, %1, %c0_i32_0 : i32
    scf.if %2 {
      %cst_10 = arith.constant 0.000000e+00 : f32
      %12 = vector.broadcast %cst_10 : f32 to vector<32x128xf32>
      %c0_11 = arith.constant 0 : index
      %c0_12 = arith.constant 0 : index
      %13 = vector.load %arg8[%c0_11, %c0_12] : memref<32x128xf32, #tpu.memory_space<vmem>>, vector<32x128xf32>
      tpu.vector_store %arg8[%c0_11, %c0_12], %12 {strides = array<i32>} : memref<32x128xf32, #tpu.memory_space<vmem>>, vector<32x128xf32>,
    } else {
    }
    %c0 = arith.constant 0 : index
    %c0_1 = arith.constant 0 : index
    %3 = vector.load %arg3[%c0, %c0_1] : memref<32x512xbf16, #tpu.memory_space<vmem>>, vector<32x512xbf16>
    %c0_2 = arith.constant 0 : index
    %c0_3 = arith.constant 0 : index
    %4 = vector.load %arg8[%c0_2, %c0_3] : memref<32x128xf32, #tpu.memory_space<vmem>>, vector<32x128xf32>
    %c0_4 = arith.constant 0 : index
    %c0_5 = arith.constant 0 : index
    %5 = vector.load %arg4[%c0_4, %c0_5] : memref<512x128xbf16, #tpu.memory_space<vmem>>, vector<512x128xbf16>
    %cst = arith.constant dense<0.000000e+00> : vector<32x128xf32>
    %6 = tpu.matmul %3, %5, %cst {dimension_numbers = #tpu.dot_dimension_numbers<[1], [0], [0], [1], [0, 0, 1, 1], [], []>} : vector<32x512xbf16>, vector<512x128xbf16>, vector<32x128xf32> -> vector<32x128xf32>
    %7 = arith.addf %4, %6 : vector<32x128xf32>
    %c0_6 = arith.constant 0 : index
    %c0_7 = arith.constant 0 : index
    %8 = vector.load %arg8[%c0_6, %c0_7] : memref<32x128xf32, #tpu.memory_space<vmem>>, vector<32x128xf32>
    tpu.vector_store %arg8[%c0_6, %c0_7], %7 {strides = array<i32>} : memref<32x128xf32, #tpu.memory_space<vmem>>, vector<32x128xf32>,
    %c0_i32_8 = arith.constant 0 : i32
    %9 = arith.cmpi eq, %arg2, %c0_i32_8 : i32
    %10 = arith.extui %9 : i1 to i32
    %c0_i32_9 = arith.constant 0 : i32
    %11 = arith.cmpi ne, %10, %c0_i32_9 : i32
    scf.if %11 {
      %c0_10 = arith.constant 0 : index
      %c0_11 = arith.constant 0 : index
      %12 = vector.load %arg8[%c0_10, %c0_11] : memref<32x128xf32, #tpu.memory_space<vmem>>, vector<32x128xf32>
      %c0_12 = arith.constant 0 : index
      %c0_13 = arith.constant 0 : index
      %13 = vector.load %arg5[%c0_12, %c0_13] : memref<1x128xf32, #tpu.memory_space<vmem>>, vector<1x128xf32>
      %14 = vector.broadcast %13 : vector<1x128xf32> to vector<32x128xf32>
      %15 = arith.addf %12, %14 : vector<32x128xf32>
      %c0_14 = arith.constant 0 : index
      %c0_15 = arith.constant 0 : index
      %16 = vector.load %arg6[%c0_14, %c0_15] : memref<32x128xf32, #tpu.memory_space<vmem>>, vector<32x128xf32>
      %17 = arith.addf %15, %16 : vector<32x128xf32>
      %c0_16 = arith.constant 0 : index
      %c0_17 = arith.constant 0 : index
      %18 = vector.load %arg7[%c0_16, %c0_17] : memref<32x128xf32, #tpu.memory_space<vmem>>, vector<32x128xf32>
      tpu.vector_store %arg7[%c0_16, %c0_17], %17 {strides = array<i32>} : memref<32x128xf32, #tpu.memory_space<vmem>>, vector<32x128xf32>,
    } else {
    }
    return
  }
  func.func @transform_0(%arg0: i32, %arg1: i32, %arg2: i32) -> (i32, i32) {
    %c0_i32 = arith.constant 0 : i32
    return %arg0, %arg2 : i32, i32
  }
  func.func @transform_1(%arg0: i32, %arg1: i32, %arg2: i32) -> (i32, i32) {
    %c0_i32 = arith.constant 0 : i32
    return %arg2, %arg1 : i32, i32
  }
  func.func @transform_2(%arg0: i32, %arg1: i32, %arg2: i32) -> (i32, i32) {
    %c0_i32 = arith.constant 0 : i32
    %c0_i32_0 = arith.constant 0 : i32
    return %c0_i32, %arg1 : i32, i32
  }
  func.func @transform_3(%arg0: i32, %arg1: i32, %arg2: i32) -> (i32, i32) {
    %c0_i32 = arith.constant 0 : i32
    return %arg0, %arg1 : i32, i32
  }
  func.func @transform_4(%arg0: i32, %arg1: i32, %arg2: i32) -> (i32, i32) {
    %c0_i32 = arith.constant 0 : i32
    return %arg0, %arg1 : i32, i32
  }
}

module attributes {stable_mosaic.version = 11 : i64} {
  func.func @_matmul_res_kernel(%arg0: i32, %arg1: i32, %arg2: i32, %arg3: memref<32x128xbf16, #tpu.memory_space<vmem>>, %arg4: memref<128x128xbf16, #tpu.memory_space<vmem>>, %arg5: memref<1x128xf32, #tpu.memory_space<vmem>>, %arg6: memref<32x128xf32, #tpu.memory_space<vmem>>, %arg7: memref<32x128xf32, #tpu.memory_space<vmem>>, %arg8: memref<32x128xf32, #tpu.memory_space<vmem>>) attributes {dimension_semantics = [#tpu.dimension_semantics<parallel>, #tpu.dimension_semantics<parallel>, #tpu.dimension_semantics<arbitrary>], iteration_bounds = array<i64: 1, 1, 1>, scalar_prefetch = 0 : i64, scratch_operands = 1 : i64, tpu.core_type = #tpu.core_type<tc>, window_params = [{transform_indices = @transform_0, window_bounds = array<i64: 32, 128>}, {transform_indices = @transform_1, window_bounds = array<i64: 128, 128>}, {transform_indices = @transform_2, window_bounds = array<i64: 1, 128>}, {transform_indices = @transform_3, window_bounds = array<i64: 32, 128>}, {transform_indices = @transform_4, window_bounds = array<i64: 32, 128>}]} {
    %c0_i32 = arith.constant 0 : i32
    %0 = arith.cmpi eq, %arg2, %c0_i32 : i32
    %1 = arith.extui %0 : i1 to i32
    %c0_i32_0 = arith.constant 0 : i32
    %2 = arith.cmpi ne, %1, %c0_i32_0 : i32
    scf.if %2 {
      %cst_10 = arith.constant 0.000000e+00 : f32
      %12 = vector.broadcast %cst_10 : f32 to vector<32x128xf32>
      %c0_11 = arith.constant 0 : index
      %c0_12 = arith.constant 0 : index
      %13 = vector.load %arg8[%c0_11, %c0_12] : memref<32x128xf32, #tpu.memory_space<vmem>>, vector<32x128xf32>
      tpu.vector_store %arg8[%c0_11, %c0_12], %12 {strides = array<i32>} : memref<32x128xf32, #tpu.memory_space<vmem>>, vector<32x128xf32>,
    } else {
    }
    %c0 = arith.constant 0 : index
    %c0_1 = arith.constant 0 : index
    %3 = vector.load %arg3[%c0, %c0_1] : memref<32x128xbf16, #tpu.memory_space<vmem>>, vector<32x128xbf16>
    %c0_2 = arith.constant 0 : index
    %c0_3 = arith.constant 0 : index
    %4 = vector.load %arg8[%c0_2, %c0_3] : memref<32x128xf32, #tpu.memory_space<vmem>>, vector<32x128xf32>
    %c0_4 = arith.constant 0 : index
    %c0_5 = arith.constant 0 : index
    %5 = vector.load %arg4[%c0_4, %c0_5] : memref<128x128xbf16, #tpu.memory_space<vmem>>, vector<128x128xbf16>
    %cst = arith.constant dense<0.000000e+00> : vector<32x128xf32>
    %6 = tpu.matmul %3, %5, %cst {dimension_numbers = #tpu.dot_dimension_numbers<[1], [0], [0], [1], [0, 0, 1, 1], [], []>} : vector<32x128xbf16>, vector<128x128xbf16>, vector<32x128xf32> -> vector<32x128xf32>
    %7 = arith.addf %4, %6 : vector<32x128xf32>
    %c0_6 = arith.constant 0 : index
    %c0_7 = arith.constant 0 : index
    %8 = vector.load %arg8[%c0_6, %c0_7] : memref<32x128xf32, #tpu.memory_space<vmem>>, vector<32x128xf32>
    tpu.vector_store %arg8[%c0_6, %c0_7], %7 {strides = array<i32>} : memref<32x128xf32, #tpu.memory_space<vmem>>, vector<32x128xf32>,
    %c0_i32_8 = arith.constant 0 : i32
    %9 = arith.cmpi eq, %arg2, %c0_i32_8 : i32
    %10 = arith.extui %9 : i1 to i32
    %c0_i32_9 = arith.constant 0 : i32
    %11 = arith.cmpi ne, %10, %c0_i32_9 : i32
    scf.if %11 {
      %c0_10 = arith.constant 0 : index
      %c0_11 = arith.constant 0 : index
      %12 = vector.load %arg8[%c0_10, %c0_11] : memref<32x128xf32, #tpu.memory_space<vmem>>, vector<32x128xf32>
      %c0_12 = arith.constant 0 : index
      %c0_13 = arith.constant 0 : index
      %13 = vector.load %arg5[%c0_12, %c0_13] : memref<1x128xf32, #tpu.memory_space<vmem>>, vector<1x128xf32>
      %14 = vector.broadcast %13 : vector<1x128xf32> to vector<32x128xf32>
      %15 = arith.addf %12, %14 : vector<32x128xf32>
      %c0_14 = arith.constant 0 : index
      %c0_15 = arith.constant 0 : index
      %16 = vector.load %arg6[%c0_14, %c0_15] : memref<32x128xf32, #tpu.memory_space<vmem>>, vector<32x128xf32>
      %17 = arith.addf %15, %16 : vector<32x128xf32>
      %c0_16 = arith.constant 0 : index
      %c0_17 = arith.constant 0 : index
      %18 = vector.load %arg7[%c0_16, %c0_17] : memref<32x128xf32, #tpu.memory_space<vmem>>, vector<32x128xf32>
      tpu.vector_store %arg7[%c0_16, %c0_17], %17 {strides = array<i32>} : memref<32x128xf32, #tpu.memory_space<vmem>>, vector<32x128xf32>,
    } else {
    }
    return
  }
  func.func @transform_0(%arg0: i32, %arg1: i32, %arg2: i32) -> (i32, i32) {
    %c0_i32 = arith.constant 0 : i32
    return %arg0, %arg2 : i32, i32
  }
  func.func @transform_1(%arg0: i32, %arg1: i32, %arg2: i32) -> (i32, i32) {
    %c0_i32 = arith.constant 0 : i32
    return %arg2, %arg1 : i32, i32
  }
  func.func @transform_2(%arg0: i32, %arg1: i32, %arg2: i32) -> (i32, i32) {
    %c0_i32 = arith.constant 0 : i32
    %c0_i32_0 = arith.constant 0 : i32
    return %c0_i32, %arg1 : i32, i32
  }
  func.func @transform_3(%arg0: i32, %arg1: i32, %arg2: i32) -> (i32, i32) {
    %c0_i32 = arith.constant 0 : i32
    return %arg0, %arg1 : i32, i32
  }
  func.func @transform_4(%arg0: i32, %arg1: i32, %arg2: i32) -> (i32, i32) {
    %c0_i32 = arith.constant 0 : i32
    return %arg0, %arg1 : i32, i32
  }
}

</mosaic_0001>

<llo_original>
// kernel: transformer_forward.11
$region0: #{transformer_forward.11}
  #allocation0 [shape = 'u32[]', space=smem, size = 0x4, offset = 0x4, fixed_abs, tag = 'smem constant byte address 0x4 - core index']
  #allocation1 [shape = 'u32[72,128]{1,0:T(1,128)}', space=vmem, size = 0x9000, scoped, tag = 'internal scratch']
  %s0 = inlined_call_operand.vmem [shape: bf16[32,384], index: 0, kind: input, shape index: {}]
  %s1 = inlined_call_operand.vmem [shape: bf16[32,128], index: 1, kind: output, shape index: {}]
  %s2 = sld [smem:[#allocation0]]
  $region37: #{transformer_forward.11} parent=0
    _
  %s4 = ssub.s32 1, %s2
  %s5 = scalar_select 0, %s4, %s2
  loop: start=0, step=1, limit=4
  $region2: #{transformer_forward.11} parent=0 // loop_pre_header
    _
  $region3: #{transformer_forward.11} parent=0 // loop_header
    %s7 = sphi 0, %s11
    %p8 = scmp.ge.s32.totalorder %s7, 4
    %s17 = sphi 0, %s19
    %s20 = sphi 0, %s17
    %s21 = sphi 0, %s20
    %s37 = sphi 0, %s21
    %s43 = sphi 0, %s45
    %s46 = sphi 0, %s43
    %s47 = sphi 0, %s46
    %s63 = sphi 0, %s47
  $region4: #{transformer_forward.11} parent=0 // loop_header_branch
    %10 = sbr.rel (%p8) target = $region8
  $region5: #{transformer_forward.11} parent=0 // loop_body
    %s12 = ssub.s32 %s7, 1
    %s13 = ssub.s32 %s7, 2
    %s14 = sadd.s32 %s7, 1
    %s15 = ssub.s32 %s7, %s14
    %p16 = scmp.eq.s32.totalorder %s15, 0
    %s18 = sadd.s32 %s17, 1
    %s19 = scalar_select %p16, %s17, %s18
    %p22 = pneg %p16
    %p23 = scmp.eq.s32.totalorder %s7, 1
    %p24 = por %p22, %p23
    %p25 = scmp.ne.s32.totalorder %s17, %s20
    %p26 = scmp.eq.s32.totalorder %s7, 0
    %p27 = por %p25, %p26
    %p28 = scmp.ne.s32.totalorder %s17, %s20
    %p29 = scmp.eq.s32.totalorder %s12, 1
    %p30 = por %p28, %p29
    %p31 = scmp.ne.s32.totalorder %s20, %s21
    %p32 = scmp.eq.s32.totalorder %s12, 0
    %p33 = por %p31, %p32
    %p34 = scmp.ne.s32.totalorder %s20, %s21
    %p35 = scmp.eq.s32.totalorder %s13, 1
    %p36 = por %p34, %p35
    %p38 = scmp.ne.s32.totalorder %s21, %s37
    %p39 = scmp.eq.s32.totalorder %s13, 0
    %p40 = por %p38, %p39
    %s41 = ssub.s32 %s7, %s14
    %p42 = scmp.eq.s32.totalorder %s41, 0
    %s44 = sadd.s32 %s43, 1
    %s45 = scalar_select %p42, %s43, %s44
    %p48 = pneg %p42
    %p49 = scmp.eq.s32.totalorder %s7, 1
    %p50 = por %p48, %p49
    %p51 = scmp.ne.s32.totalorder %s43, %s46
    %p52 = scmp.eq.s32.totalorder %s7, 0
    %p53 = por %p51, %p52
    %p54 = scmp.ne.s32.totalorder %s43, %s46
    %p55 = scmp.eq.s32.totalorder %s12, 1
    %p56 = por %p54, %p55
    %p57 = scmp.ne.s32.totalorder %s46, %s47
    %p58 = scmp.eq.s32.totalorder %s12, 0
    %p59 = por %p57, %p58
    %p60 = scmp.ne.s32.totalorder %s46, %s47
    %p61 = scmp.eq.s32.totalorder %s13, 1
    %p62 = por %p60, %p61
    %p64 = scmp.ne.s32.totalorder %s47, %s63
    %p65 = scmp.eq.s32.totalorder %s13, 0
    %p66 = por %p64, %p65
    %p67 = scmp.le.s32.totalorder 1, %s7
    %p68 = scmp.lt.s32.totalorder %s7, 3
    %p69 = pnand %p67, %p68
    %p70 = pneg %p69
    // Predicated region
    $region9: #{transformer_forward.11} parent=5 // pred_check
      _
    $region10: #{transformer_forward.11} parent=5 // pred_check_branch
      %72 = sbr.rel (%p69) target = $region12
    $region11: #{transformer_forward.11} parent=5 // pred_region
      %s73 = ssub.s32 %s7, 1
    $region12: #{transformer_forward.11} parent=5 // pred_fallthru
      _
    %p74 = scmp.lt.s32.totalorder %s7, 2
    // Predicated region
    $region13: #{transformer_forward.11} parent=5 // pred_check
      %p75 = pneg %p74
    $region14: #{transformer_forward.11} parent=5 // pred_check_branch
      %77 = sbr.rel (%p75) target = $region16
    $region15: #{transformer_forward.11} parent=5 // pred_region
      // Predicated region
      $region17: #{transformer_forward.11} parent=15 // pred_check
        %p78 = pneg %p27
      $region18: #{transformer_forward.11} parent=15 // pred_check_branch
        %80 = sbr.rel (%p78) target = $region20
      $region19: #{transformer_forward.11} parent=15 // pred_region
        %s81 = smul.u32 2, %s7
        %p82 = scmp.lt.s32.totalorder %s81, 3
        %s83 = scalar_select %p82, %s81, 3
        %s84 = smul.addr %s83, 3
        %s85 = smul.addr %s84, 4
        %s86 = scalar_lea.vmem %s0, %s85
        %s87 = smul.u32 2, %s7
      $region20: #{transformer_forward.11} parent=15 // pred_fallthru
        _
    $region16: #{transformer_forward.11} parent=5 // pred_fallthru
      _
    %p88 = scmp.le.s32.totalorder 1, %s7
    %p89 = scmp.lt.s32.totalorder %s7, 3
    %p90 = pnand %p88, %p89
    %p91 = pneg %p90
    // Predicated region
    $region21: #{transformer_forward.11} parent=5 // pred_check
      _
    $region22: #{transformer_forward.11} parent=5 // pred_check_branch
      %93 = sbr.rel (%p90) target = $region24
    $region23: #{transformer_forward.11} parent=5 // pred_region
      %s94 = ssub.s32 %s7, 1
      %s95 = smul.u32 2, %s12
      %p96 = scmp.lt.s32.totalorder %s95, 3
      %s97 = scalar_select %p96, %s95, 3
      %s98 = smul.addr %s97, 3
      %s99 = smul.addr %s98, 4
      %s100 = scalar_lea.vmem %s0, %s99
      %p101 = pneg %p33
      %p102 = pneg %p30
      %p103 = pneg %p59
      %p104 = pneg %p56
      %s105 = smul.u32 2, %s12
      %p106 = scmp.lt.s32.totalorder %s105, 3
      %s107 = scalar_select %p106, %s105, 3
      %s108 = smul.addr %s107, 4
      %s109 = scalar_lea.vmem %s1, %s108
      %s110 = smul.u32 2, %s12
      %p111 = scmp.lt.s32.totalorder %s110, 3
      %s112 = scalar_select %p111, %s110, 3
      %s113 = smul.addr %s112, 3
      %s114 = smul.addr %s113, 4
      %s115 = scalar_lea.vmem %s0, %s114
      %s116 = smul.u32 2, %s12
      %s117 = smul.u32 2, %s12
      %p118 = scmp.lt.s32.totalorder %s117, 3
      %s119 = scalar_select %p118, %s117, 3
      %s120 = smul.addr %s119, 4
      %s121 = scalar_lea.vmem %s1, %s120
      %s122 = smul.u32 2, %s12
      %v124 = vld [vmem:[%s115] sm:$0xf]
      %v125 = vld [vmem:[%s115 + $0xc] sm:$0xf]
      %v126 = vld [vmem:[%s115 + $0x4] sm:$0xf]
      %v127 = vld [vmem:[%s115 + $0x10] sm:$0xf]
      %v128 = vld [vmem:[%s115 + $0x8] sm:$0xf]
      %v129 = vld [vmem:[%s115 + $0x14] sm:$0xf]
      %v132 = vunpack.c.l.b16 %v124
      %v133 = vunpack.c.l.b16 %v125
      %v134 = vpack.c.b16 %v133, %v132
      %v137 = vunpack.c.l.b16 %v126
      %v138 = vunpack.c.l.b16 %v127
      %v139 = vpack.c.b16 %v138, %v137
      %vm140 = vcmask 261120
      %v142 = vsel %vm140, %v134, 0
      %v145 = vsel %vm140, %v139, 0
      %147 = vmatpush.bf16.xpose.msra.mxu0 0
      %148 = vmatpush.bf16.xpose.msra.mxu0 0
      %149 = vmatpush.bf16.xpose.msra.mxu0 0
      %150 = vmatpush.bf16.xpose.msra.mxu0 0
      %151 = vmatpush.bf16.xpose.msra.mxu0 0
      %152 = vmatpush.bf16.xpose.msra.mxu0 0
      %153 = vmatpush.bf16.xpose.msra.mxu0 0
      %154 = vmatpush.bf16.xpose.msra.mxu0 %v145
      %155 = vmatmul.bf16.gmra.mxu0 %v142
      %v156 = vpop.f32.mrf.mxu0
      %v157 = vadd.f32 0.0, %v156
      %v158 = vpop.f32.mrf.mxu0
      %v159 = vadd.f32 0.0, %v158
      %160 = vdwg.mxu0
      %v161 = vmul.f32 %v157, 0.17677669
      %v162 = vmul.f32 %v159, 0.17677669
      %vm163 = vcmask 130048
      %v164 = vsel %vm163, %v161, -inf
      %165 = vmax.xlane.f32.xlu0 %v164
      %v166 = vpop.xlane.xlu0 %165
      %v167 = vsel %vm163, %v162, -inf
      %168 = vmax.xlane.f32.xlu0 %v167
      %v169 = vpop.xlane.xlu0 %168
      %v170 = vsub.f32 %v161, %v166
      %v171 = vsub.f32 %v162, %v169
      %v172 = vmul.f32 %v170, 1.442695
      %v173 = vpow.pop %v172
      %v174 = vmul.f32 %v171, 1.442695
      %v175 = vpow.pop %v174
      %v176 = vsel %vm163, %v173, 0.0
      %177 = vadd.xlane.f32.xlu0 %v176
      %v178 = vpop.xlane.xlu0 %177
      %v179 = vsel %vm163, %v175, 0.0
      %180 = vadd.xlane.f32.xlu0 %v179
      %v181 = vpop.xlane.xlu0 %180
      %v182 = vrcp.pop %v178
      %v183 = vrcp.pop %v181
      %v184 = vmul.f32 %v173, %v182
      %v185 = vmul.f32 %v175, %v183
      %v186 = vpack.c.bf16 %v185, %v184
      %v189 = vunpack.c.l.b16 %v128
      %v190 = vunpack.c.l.b16 %v129
      %v191 = vpack.c.b16 %v190, %v189
      %v194 = vsel %vm163, %v186, 0
      %196 = vmatpush.bf16.msra.mxu0 0
      %197 = vmatpush.bf16.msra.mxu0 0
      %198 = vmatpush.bf16.msra.mxu0 0
      %199 = vmatpush.bf16.msra.mxu0 0
      %200 = vmatpush.bf16.msra.mxu0 0
      %201 = vmatpush.bf16.msra.mxu0 0
      %202 = vmatpush.bf16.msra.mxu0 0
      %203 = vmatpush.bf16.msra.mxu0 %v191
      %204 = vmatmul.bf16.gmra.mxu0 %v194
      %v205 = vpop.f32.mrf.mxu0
      %v206 = vadd.f32 0.0, %v205
      %v207 = vpop.f32.mrf.mxu0
      %v208 = vadd.f32 0.0, %v207
      %209 = vdwg.mxu0
      %v210 = vpack.c.bf16 %v206, %v206
      %v211 = vpack.c.bf16 %v208, %v208
      %vm212 = vcmask 257024
      %213 = vst.msk [vmem:[%s121] sm:$0xf] %vm212, %v210
      %214 = vst.msk [vmem:[%s121 + $0x4] sm:$0xf] %vm212, %v211
      %v215 = vld [vmem:[%s115] sm:$0xf]
      %v216 = vld [vmem:[%s115 + $0xc] sm:$0xf]
      %v217 = vld [vmem:[%s115 + $0x4] sm:$0xf]
      %v218 = vld [vmem:[%s115 + $0x10] sm:$0xf]
      %v219 = vld [vmem:[%s115 + $0x8] sm:$0xf]
      %v220 = vld [vmem:[%s115 + $0x14] sm:$0xf]
      %v223 = vunpack.c.l.b16 %v215
      %v224 = vunpack.c.l.b16 %v216
      %v225 = vpack.c.b16 %v224, %v223
      %226 = vrot.lane.b32.xlu0 %v225, 96
      %v227 = vpop.permute.xlu0 %226
      %v230 = vunpack.c.l.b16 %v217
      %v231 = vunpack.c.l.b16 %v218
      %v232 = vpack.c.b16 %v231, %v230
      %233 = vrot.lane.b32.xlu0 %v232, 96
      %v234 = vpop.permute.xlu0 %233
      %v236 = vsel %vm140, %v227, 0
      %v239 = vsel %vm140, %v234, 0
      %241 = vmatpush.bf16.xpose.msra.mxu0 0
      %242 = vmatpush.bf16.xpose.msra.mxu0 0
      %243 = vmatpush.bf16.xpose.msra.mxu0 0
      %244 = vmatpush.bf16.xpose.msra.mxu0 0
      %245 = vmatpush.bf16.xpose.msra.mxu0 0
      %246 = vmatpush.bf16.xpose.msra.mxu0 0
      %247 = vmatpush.bf16.xpose.msra.mxu0 0
      %248 = vmatpush.bf16.xpose.msra.mxu0 %v239
      %249 = vmatmul.bf16.gmra.mxu0 %v236
      %v250 = vpop.f32.mrf.mxu0
      %v251 = vadd.f32 0.0, %v250
      %v252 = vpop.f32.mrf.mxu0
      %v253 = vadd.f32 0.0, %v252
      %254 = vdwg.mxu0
      %v255 = vmul.f32 %v251, 0.17677669
      %v256 = vmul.f32 %v253, 0.17677669
      %v257 = vsel %vm163, %v255, -inf
      %258 = vmax.xlane.f32.xlu0 %v257
      %v259 = vpop.xlane.xlu0 %258
      %v260 = vsel %vm163, %v256, -inf
      %261 = vmax.xlane.f32.xlu0 %v260
      %v262 = vpop.xlane.xlu0 %261
      %v263 = vsub.f32 %v255, %v259
      %v264 = vsub.f32 %v256, %v262
      %v265 = vmul.f32 %v263, 1.442695
      %v266 = vpow.pop %v265
      %v267 = vmul.f32 %v264, 1.442695
      %v268 = vpow.pop %v267
      %v269 = vsel %vm163, %v266, 0.0
      %270 = vadd.xlane.f32.xlu0 %v269
      %v271 = vpop.xlane.xlu0 %270
      %v272 = vsel %vm163, %v268, 0.0
      %273 = vadd.xlane.f32.xlu0 %v272
      %v274 = vpop.xlane.xlu0 %273
      %v275 = vrcp.pop %v271
      %v276 = vrcp.pop %v274
      %v277 = vmul.f32 %v266, %v275
      %v278 = vmul.f32 %v268, %v276
      %v279 = vpack.c.bf16 %v278, %v277
      %v282 = vunpack.c.l.b16 %v219
      %v283 = vunpack.c.l.b16 %v220
      %v284 = vpack.c.b16 %v283, %v282
      %285 = vrot.lane.b32.xlu0 %v284, 96
      %v286 = vpop.permute.xlu0 %285
      %v289 = vsel %vm163, %v279, 0
      %291 = vmatpush.bf16.msra.mxu0 0
      %292 = vmatpush.bf16.msra.mxu0 0
      %293 = vmatpush.bf16.msra.mxu0 0
      %294 = vmatpush.bf16.msra.mxu0 0
      %295 = vmatpush.bf16.msra.mxu0 0
      %296 = vmatpush.bf16.msra.mxu0 0
      %297 = vmatpush.bf16.msra.mxu0 0
      %298 = vmatpush.bf16.msra.mxu0 %v286
      %299 = vmatmul.bf16.gmra.mxu0 %v289
      %v300 = vpop.f32.mrf.mxu0
      %v301 = vadd.f32 0.0, %v300
      %v302 = vpop.f32.mrf.mxu0
      %v303 = vadd.f32 0.0, %v302
      %304 = vdwg.mxu0
      %v305 = vpack.c.bf16 %v301, %v301
      %v306 = vpack.c.bf16 %v303, %v303
      %309 = vrot.lane.b32.xlu0 %v305, 32
      %v310 = vpop.permute.xlu0 %309
      %311 = vrot.lane.b32.xlu0 %v306, 32
      %v312 = vpop.permute.xlu0 %311
      %vm315 = vcmask 519424
      %316 = vst.msk [vmem:[%s121] sm:$0xf] %vm315, %v310
      %317 = vst.msk [vmem:[%s121 + $0x4] sm:$0xf] %vm315, %v312
      %v318 = vld [vmem:[%s115] sm:$0xf]
      %v319 = vld [vmem:[%s115 + $0xc] sm:$0xf]
      %v320 = vld [vmem:[%s115 + $0x4] sm:$0xf]
      %v321 = vld [vmem:[%s115 + $0x10] sm:$0xf]
      %v322 = vld [vmem:[%s115 + $0x8] sm:$0xf]
      %v323 = vld [vmem:[%s115 + $0x14] sm:$0xf]
      %v326 = vunpack.c.l.b16 %v318
      %v327 = vunpack.c.l.b16 %v319
      %v328 = vpack.c.b16 %v327, %v326
      %329 = vrot.lane.b32.xlu0 %v328, 64
      %v330 = vpop.permute.xlu0 %329
      %v333 = vunpack.c.l.b16 %v320
      %v334 = vunpack.c.l.b16 %v321
      %v335 = vpack.c.b16 %v334, %v333
      %336 = vrot.lane.b32.xlu0 %v335, 64
      %v337 = vpop.permute.xlu0 %336
      %v339 = vsel %vm140, %v330, 0
      %v342 = vsel %vm140, %v337, 0
      %344 = vmatpush.bf16.xpose.msra.mxu0 0
      %345 = vmatpush.bf16.xpose.msra.mxu0 0
      %346 = vmatpush.bf16.xpose.msra.mxu0 0
      %347 = vmatpush.bf16.xpose.msra.mxu0 0
      %348 = vmatpush.bf16.xpose.msra.mxu0 0
      %349 = vmatpush.bf16.xpose.msra.mxu0 0
      %350 = vmatpush.bf16.xpose.msra.mxu0 0
      %351 = vmatpush.bf16.xpose.msra.mxu0 %v342
      %352 = vmatmul.bf16.gmra.mxu0 %v339
      %v353 = vpop.f32.mrf.mxu0
      %v354 = vadd.f32 0.0, %v353
      %v355 = vpop.f32.mrf.mxu0
      %v356 = vadd.f32 0.0, %v355
      %357 = vdwg.mxu0
      %v358 = vmul.f32 %v354, 0.17677669
      %v359 = vmul.f32 %v356, 0.17677669
      %v360 = vsel %vm163, %v358, -inf
      %361 = vmax.xlane.f32.xlu0 %v360
      %v362 = vpop.xlane.xlu0 %361
      %v363 = vsel %vm163, %v359, -inf
      %364 = vmax.xlane.f32.xlu0 %v363
      %v365 = vpop.xlane.xlu0 %364
      %v366 = vsub.f32 %v358, %v362
      %v367 = vsub.f32 %v359, %v365
      %v368 = vmul.f32 %v366, 1.442695
      %v369 = vpow.pop %v368
      %v370 = vmul.f32 %v367, 1.442695
      %v371 = vpow.pop %v370
      %v372 = vsel %vm163, %v369, 0.0
      %373 = vadd.xlane.f32.xlu0 %v372
      %v374 = vpop.xlane.xlu0 %373
      %v375 = vsel %vm163, %v371, 0.0
      %376 = vadd.xlane.f32.xlu0 %v375
      %v377 = vpop.xlane.xlu0 %376
      %v378 = vrcp.pop %v374
      %v379 = vrcp.pop %v377
      %v380 = vmul.f32 %v369, %v378
      %v381 = vmul.f32 %v371, %v379
      %v382 = vpack.c.bf16 %v381, %v380
      %v385 = vunpack.c.l.b16 %v322
      %v386 = vunpack.c.l.b16 %v323
      %v387 = vpack.c.b16 %v386, %v385
      %388 = vrot.lane.b32.xlu0 %v387, 64
      %v389 = vpop.permute.xlu0 %388
      %v392 = vsel %vm163, %v382, 0
      %394 = vmatpush.bf16.msra.mxu0 0
      %395 = vmatpush.bf16.msra.mxu0 0
      %396 = vmatpush.bf16.msra.mxu0 0
      %397 = vmatpush.bf16.msra.mxu0 0
      %398 = vmatpush.bf16.msra.mxu0 0
      %399 = vmatpush.bf16.msra.mxu0 0
      %400 = vmatpush.bf16.msra.mxu0 0
      %401 = vmatpush.bf16.msra.mxu0 %v389
      %402 = vmatmul.bf16.gmra.mxu0 %v392
      %v403 = vpop.f32.mrf.mxu0
      %v404 = vadd.f32 0.0, %v403
      %v405 = vpop.f32.mrf.mxu0
      %v406 = vadd.f32 0.0, %v405
      %407 = vdwg.mxu0
      %v408 = vpack.c.bf16 %v404, %v404
      %v409 = vpack.c.bf16 %v406, %v406
      %412 = vrot.lane.b32.xlu0 %v408, 64
      %v413 = vpop.permute.xlu0 %412
      %414 = vrot.lane.b32.xlu0 %v409, 64
      %v415 = vpop.permute.xlu0 %414
      %vm418 = vcmask 781824
      %419 = vst.msk [vmem:[%s121] sm:$0xf] %vm418, %v413
      %420 = vst.msk [vmem:[%s121 + $0x4] sm:$0xf] %vm418, %v415
      %v421 = vld [vmem:[%s115] sm:$0xf]
      %v422 = vld [vmem:[%s115 + $0xc] sm:$0xf]
      %v423 = vld [vmem:[%s115 + $0x4] sm:$0xf]
      %v424 = vld [vmem:[%s115 + $0x10] sm:$0xf]
      %v425 = vld [vmem:[%s115 + $0x8] sm:$0xf]
      %v426 = vld [vmem:[%s115 + $0x14] sm:$0xf]
      %v429 = vunpack.c.l.b16 %v421
      %v430 = vunpack.c.l.b16 %v422
      %v431 = vpack.c.b16 %v430, %v429
      %432 = vrot.lane.b32.xlu0 %v431, 32
      %v433 = vpop.permute.xlu0 %432
      %v436 = vunpack.c.l.b16 %v423
      %v437 = vunpack.c.l.b16 %v424
      %v438 = vpack.c.b16 %v437, %v436
      %439 = vrot.lane.b32.xlu0 %v438, 32
      %v440 = vpop.permute.xlu0 %439
      %v442 = vsel %vm140, %v433, 0
      %v445 = vsel %vm140, %v440, 0
      %447 = vmatpush.bf16.xpose.msra.mxu0 0
      %448 = vmatpush.bf16.xpose.msra.mxu0 0
      %449 = vmatpush.bf16.xpose.msra.mxu0 0
      %450 = vmatpush.bf16.xpose.msra.mxu0 0
      %451 = vmatpush.bf16.xpose.msra.mxu0 0
      %452 = vmatpush.bf16.xpose.msra.mxu0 0
      %453 = vmatpush.bf16.xpose.msra.mxu0 0
      %454 = vmatpush.bf16.xpose.msra.mxu0 %v445
      %455 = vmatmul.bf16.gmra.mxu0 %v442
      %v456 = vpop.f32.mrf.mxu0
      %v457 = vadd.f32 0.0, %v456
      %v458 = vpop.f32.mrf.mxu0
      %v459 = vadd.f32 0.0, %v458
      %460 = vdwg.mxu0
      %v461 = vmul.f32 %v457, 0.17677669
      %v462 = vmul.f32 %v459, 0.17677669
      %v463 = vsel %vm163, %v461, -inf
      %464 = vmax.xlane.f32.xlu0 %v463
      %v465 = vpop.xlane.xlu0 %464
      %v466 = vsel %vm163, %v462, -inf
      %467 = vmax.xlane.f32.xlu0 %v466
      %v468 = vpop.xlane.xlu0 %467
      %v469 = vsub.f32 %v461, %v465
      %v470 = vsub.f32 %v462, %v468
      %v471 = vmul.f32 %v469, 1.442695
      %v472 = vpow.pop %v471
      %v473 = vmul.f32 %v470, 1.442695
      %v474 = vpow.pop %v473
      %v475 = vsel %vm163, %v472, 0.0
      %476 = vadd.xlane.f32.xlu0 %v475
      %v477 = vpop.xlane.xlu0 %476
      %v478 = vsel %vm163, %v474, 0.0
      %479 = vadd.xlane.f32.xlu0 %v478
      %v480 = vpop.xlane.xlu0 %479
      %v481 = vrcp.pop %v477
      %v482 = vrcp.pop %v480
      %v483 = vmul.f32 %v472, %v481
      %v484 = vmul.f32 %v474, %v482
      %v485 = vpack.c.bf16 %v484, %v483
      %v488 = vunpack.c.l.b16 %v425
      %v489 = vunpack.c.l.b16 %v426
      %v490 = vpack.c.b16 %v489, %v488
      %491 = vrot.lane.b32.xlu0 %v490, 32
      %v492 = vpop.permute.xlu0 %491
      %v495 = vsel %vm163, %v485, 0
      %497 = vmatpush.bf16.msra.mxu0 0
      %498 = vmatpush.bf16.msra.mxu0 0
      %499 = vmatpush.bf16.msra.mxu0 0
      %500 = vmatpush.bf16.msra.mxu0 0
      %501 = vmatpush.bf16.msra.mxu0 0
      %502 = vmatpush.bf16.msra.mxu0 0
      %503 = vmatpush.bf16.msra.mxu0 0
      %504 = vmatpush.bf16.msra.mxu0 %v492
      %505 = vmatmul.bf16.gmra.mxu0 %v495
      %v506 = vpop.f32.mrf.mxu0
      %v507 = vadd.f32 0.0, %v506
      %v508 = vpop.f32.mrf.mxu0
      %v509 = vadd.f32 0.0, %v508
      %510 = vdwg.mxu0
      %v511 = vpack.c.bf16 %v507, %v507
      %v512 = vpack.c.bf16 %v509, %v509
      %515 = vrot.lane.b32.xlu0 %v511, 96
      %v516 = vpop.permute.xlu0 %515
      %517 = vrot.lane.b32.xlu0 %v512, 96
      %v518 = vpop.permute.xlu0 %517
      %vm521 = vcmask 1044224
      %522 = vst.msk [vmem:[%s121] sm:$0xf] %vm521, %v516
      %523 = vst.msk [vmem:[%s121 + $0x4] sm:$0xf] %vm521, %v518
      %s524 = smul.u32 2, %s12
      %p525 = scmp.lt.s32.totalorder %s524, 3
      %s526 = scalar_select %p525, %s524, 3
      %s527 = smul.addr %s526, 4
      %s528 = scalar_lea.vmem %s1, %s527
      // Predicated region
      $region25: #{transformer_forward.11} parent=23 // pred_check
        %p529 = pneg %p56
      $region26: #{transformer_forward.11} parent=23 // pred_check_branch
        %531 = sbr.rel (%p529) target = $region28
      $region27: #{transformer_forward.11} parent=23 // pred_region
        %s532 = smul.u32 2, %s12
      $region28: #{transformer_forward.11} parent=23 // pred_fallthru
        _
    $region24: #{transformer_forward.11} parent=5 // pred_fallthru
      _
    %p533 = scmp.le.s32.totalorder 2, %s7
    // Predicated region
    $region29: #{transformer_forward.11} parent=5 // pred_check
      %p534 = pneg %p533
    $region30: #{transformer_forward.11} parent=5 // pred_check_branch
      %536 = sbr.rel (%p534) target = $region32
    $region31: #{transformer_forward.11} parent=5 // pred_region
      %s537 = ssub.s32 %s7, 2
      // Predicated region
      $region33: #{transformer_forward.11} parent=31 // pred_check
        %p538 = pneg %p62
      $region34: #{transformer_forward.11} parent=31 // pred_check_branch
        %540 = sbr.rel (%p538) target = $region36
      $region35: #{transformer_forward.11} parent=31 // pred_region
        %s541 = smul.u32 2, %s13
        %p542 = scmp.lt.s32.totalorder %s541, 3
        %s543 = scalar_select %p542, %s541, 3
        %s544 = smul.addr %s543, 4
        %s545 = scalar_lea.vmem %s1, %s544
      $region36: #{transformer_forward.11} parent=31 // pred_fallthru
        _
    $region32: #{transformer_forward.11} parent=5 // pred_fallthru
      _
  $region6: #{transformer_forward.11} parent=0 // loop_footer
    %s11 = sadd.s32 1, %s7
  $region7: #{transformer_forward.11} parent=0 // loop_footer_branch
    %6 = sbr.rel target = $region3
  $region8: #{transformer_forward.11} parent=0 // loop_exit
    _

// kernel: transformer_forward.10
$region0: #{transformer_forward.10}
  #allocation0 [shape = 'u32[]', space=smem, size = 0x4, offset = 0x4, fixed_abs, tag = 'smem constant byte address 0x4 - core index']
  #allocation1 [shape = 'u32[72,128]{1,0:T(1,128)}', space=vmem, size = 0x9000, scoped, tag = 'internal scratch']
  #allocation2 [shape = 'bf16[32,128]{1,0:T(8,128)(2,1)}', space=vmem, size = 0x2000, scoped, tag = 'scratch operand']
  %s0 = inlined_call_operand.vmem [shape: f32[32,128], index: 0, kind: input, shape index: {}]
  %s1 = inlined_call_operand.vmem [shape: f32[1,128], index: 1, kind: input, shape index: {}]
  %s2 = inlined_call_operand.vmem [shape: f32[1,128], index: 2, kind: input, shape index: {}]
  %s3 = inlined_call_operand.hbm [shape: bf16[128,384], index: 3, kind: input, shape index: {}]
  %s4 = inlined_call_operand.vmem [shape: f32[1,384], index: 4, kind: input, shape index: {}]
  %s5 = inlined_call_operand.vmem [shape: bf16[32,384], index: 5, kind: output, shape index: {}]
  %s6 = sld [smem:[#allocation0]]
  $region38: #{transformer_forward.10} parent=0
    _
  %s8 = ssub.s32 1, %s6
  %s9 = scalar_select 0, %s8, %s6
  $region1: #{transformer_forward.10} parent=0
    #allocation3 [shape = 'u8[98304]{0}', space=vmem, size = 0x18000, scoped, tag = 'input window, operand 3, single buffered']
    #allocation4 [shape = 's32[1]{0}', space=sflag, size = 0x4, scoped, tag = 'scoped memory for transformer_forward.10']
    %10 = vsyncpa [#allocation4], 0
    // Predicated region
    $region2: #{transformer_forward.10} parent=1 // pred_check
      _
    $region3: #{transformer_forward.10} parent=1 // pred_check_branch
      %12 = sbr.rel (0) target = $region5
    $region4: #{transformer_forward.10} parent=1 // pred_region
      _
    $region5: #{transformer_forward.10} parent=1 // pred_fallthru
      _
    // Predicated region
    $region6: #{transformer_forward.10} parent=1 // pred_check
      _
    $region7: #{transformer_forward.10} parent=1 // pred_check_branch
      %14 = sbr.rel (0) target = $region9
    $region8: #{transformer_forward.10} parent=1 // pred_region
      _
    $region9: #{transformer_forward.10} parent=1 // pred_fallthru
      _
    // Predicated region
    $region10: #{transformer_forward.10} parent=1 // pred_check
      _
    $region11: #{transformer_forward.10} parent=1 // pred_check_branch
      %16 = sbr.rel (0) target = $region13
    $region12: #{transformer_forward.10} parent=1 // pred_region
      _
    $region13: #{transformer_forward.10} parent=1 // pred_fallthru
      _
    // Predicated region
    $region14: #{transformer_forward.10} parent=1 // pred_check
      _
    $region15: #{transformer_forward.10} parent=1 // pred_check_branch
      %18 = sbr.rel (0) target = $region17
    $region16: #{transformer_forward.10} parent=1 // pred_region
      %20 = vsyncadd [#allocation4], 0
      %s21 = sshll.u32 %s3, 4
      %s22 = int_to_ptr.hbm [resolvable:$true] %s21
      %s23 = sshll.u32 [#allocation3], 4
      %s24 = int_to_ptr.vmem [resolvable:$true] %s23
      %29 = dma.hbm_to_vmem [thread:$0]  %s22, 3072, %s24, [#allocation4], 192, 192, 12
    $region17: #{transformer_forward.10} parent=1 // pred_fallthru
      _
    // Predicated region
    $region18: #{transformer_forward.10} parent=1 // pred_check
      _
    $region19: #{transformer_forward.10} parent=1 // pred_check_branch
      %31 = sbr.rel (0) target = $region21
    $region20: #{transformer_forward.10} parent=1 // pred_region
      _
    $region21: #{transformer_forward.10} parent=1 // pred_fallthru
      _
    // Predicated region
    $region22: #{transformer_forward.10} parent=1 // pred_check
      _
    $region23: #{transformer_forward.10} parent=1 // pred_check_branch
      %33 = sbr.rel (0) target = $region25
    $region24: #{transformer_forward.10} parent=1 // pred_region
      %35 = dma.done [#allocation4], 3072
    $region25: #{transformer_forward.10} parent=1 // pred_fallthru
      _
    %p36 = scmp.eq.s32.totalorder 0, 0
    // Predicated region
    $region26: #{transformer_forward.10} parent=1 // pred_check
      %p37 = pneg %p36
    $region27: #{transformer_forward.10} parent=1 // pred_check_branch
      %39 = sbr.rel (%p37) target = $region29
    $region28: #{transformer_forward.10} parent=1 // pred_region
      %v40 = vld [vmem:[%s0] sm:$0xff]
      %v41 = vld [vmem:[%s0 + $0x8] sm:$0xff]
      %v42 = vld [vmem:[%s0 + $0x10] sm:$0xff]
      %v43 = vld [vmem:[%s0 + $0x18] sm:$0xff]
      %44 = vadd.xlane.f32.xlu0 %v40
      %v45 = vpop.xlane.xlu0 %44
      %46 = vadd.xlane.f32.xlu0 %v41
      %v47 = vpop.xlane.xlu0 %46
      %48 = vadd.xlane.f32.xlu0 %v42
      %v49 = vpop.xlane.xlu0 %48
      %50 = vadd.xlane.f32.xlu0 %v43
      %v51 = vpop.xlane.xlu0 %50
      %v52 = vrcp.pop 128.0
      %v53 = vmul.f32 128.0, %v52
      %v54 = vsub.f32 1.0, %v53
      %v55 = vmul.f32 %v52, %v54
      %v56 = vadd.f32 %v52, %v55
      %vm57 = vweird.f32 %v52
      %v58 = vsel %vm57, %v52, %v56
      %v59 = vmul.f32 %v45, %v58
      %v60 = vmul.f32 %v47, %v58
      %v61 = vmul.f32 %v49, %v58
      %v62 = vmul.f32 %v51, %v58
      %v63 = vsub.f32 %v40, %v59
      %v64 = vsub.f32 %v41, %v60
      %v65 = vsub.f32 %v42, %v61
      %v66 = vsub.f32 %v43, %v62
      %v67 = vmul.f32 %v63, %v63
      %v68 = vmul.f32 %v64, %v64
      %v69 = vmul.f32 %v65, %v65
      %v70 = vmul.f32 %v66, %v66
      %71 = vadd.xlane.f32.xlu0 %v67
      %v72 = vpop.xlane.xlu0 %71
      %73 = vadd.xlane.f32.xlu0 %v68
      %v74 = vpop.xlane.xlu0 %73
      %75 = vadd.xlane.f32.xlu0 %v69
      %v76 = vpop.xlane.xlu0 %75
      %77 = vadd.xlane.f32.xlu0 %v70
      %v78 = vpop.xlane.xlu0 %77
      %v79 = vmul.f32 %v72, %v58
      %v80 = vmul.f32 %v74, %v58
      %v81 = vmul.f32 %v76, %v58
      %v82 = vmul.f32 %v78, %v58
      %v83 = vadd.f32 %v79, 1e-05
      %v84 = vadd.f32 %v80, 1e-05
      %v85 = vadd.f32 %v81, 1e-05
      %v86 = vadd.f32 %v82, 1e-05
      %v87 = vrsqrt.pop %v83
      %v88 = vmul.f32 %v87, %v83
      %v89 = vmul.f32 %v88, %v87
      %v90 = vmul.f32 0.5, %v89
      %v91 = vsub.f32 1.5, %v90
      %v92 = vmul.f32 %v87, %v91
      %vm93 = vweird.f32 %v83
      %vm94 = vweird.f32 %v87
      %vm95 = vmor %vm93, %vm94
      %v96 = vsel %vm95, %v87, %v92
      %v97 = vrsqrt.pop %v84
      %v98 = vmul.f32 %v97, %v84
      %v99 = vmul.f32 %v98, %v97
      %v100 = vmul.f32 0.5, %v99
      %v101 = vsub.f32 1.5, %v100
      %v102 = vmul.f32 %v97, %v101
      %vm103 = vweird.f32 %v84
      %vm104 = vweird.f32 %v97
      %vm105 = vmor %vm103, %vm104
      %v106 = vsel %vm105, %v97, %v102
      %v107 = vrsqrt.pop %v85
      %v108 = vmul.f32 %v107, %v85
      %v109 = vmul.f32 %v108, %v107
      %v110 = vmul.f32 0.5, %v109
      %v111 = vsub.f32 1.5, %v110
      %v112 = vmul.f32 %v107, %v111
      %vm113 = vweird.f32 %v85
      %vm114 = vweird.f32 %v107
      %vm115 = vmor %vm113, %vm114
      %v116 = vsel %vm115, %v107, %v112
      %v117 = vrsqrt.pop %v86
      %v118 = vmul.f32 %v117, %v86
      %v119 = vmul.f32 %v118, %v117
      %v120 = vmul.f32 0.5, %v119
      %v121 = vsub.f32 1.5, %v120
      %v122 = vmul.f32 %v117, %v121
      %vm123 = vweird.f32 %v86
      %vm124 = vweird.f32 %v117
      %vm125 = vmor %vm123, %vm124
      %v126 = vsel %vm125, %v117, %v122
      %v127 = vmul.f32 %v63, %v96
      %v128 = vmul.f32 %v64, %v106
      %v129 = vmul.f32 %v65, %v116
      %v130 = vmul.f32 %v66, %v126
      %v131 = vld [vmem:[%s1] sm:$0x1]
      %v133 = vperm.slane %v131, 0
      %v135 = vmul.f32 %v127, %v133
      %v136 = vmul.f32 %v128, %v133
      %v137 = vmul.f32 %v129, %v133
      %v138 = vmul.f32 %v130, %v133
      %v139 = vld [vmem:[%s2] sm:$0x1]
      %v141 = vperm.slane %v139, 0
      %v143 = vadd.f32 %v135, %v141
      %v144 = vadd.f32 %v136, %v141
      %v145 = vadd.f32 %v137, %v141
      %v146 = vadd.f32 %v138, %v141
      %v147 = vpack.c.bf16 %v143, %v143
      %v148 = vpack.c.bf16 %v144, %v144
      %v149 = vpack.c.bf16 %v145, %v145
      %v150 = vpack.c.bf16 %v146, %v146
      %151 = vst [vmem:[#allocation2] sm:$0xf] %v147
      %152 = vst [vmem:[#allocation2 + $0x4] sm:$0xf] %v148
      %153 = vst [vmem:[#allocation2 + $0x8] sm:$0xf] %v149
      %154 = vst [vmem:[#allocation2 + $0xc] sm:$0xf] %v150
    $region29: #{transformer_forward.10} parent=1 // pred_fallthru
      _
    %v155 = vld [vmem:[#allocation2] sm:$0xf]
    %v156 = vld [vmem:[#allocation2 + $0x4] sm:$0xf]
    %v157 = vld [vmem:[#allocation2 + $0x8] sm:$0xf]
    %v158 = vld [vmem:[#allocation2 + $0xc] sm:$0xf]
    %v159 = vld [vmem:[#allocation3] sm:$0xff]
    %v160 = vld [vmem:[#allocation3 + $0x8] sm:$0xf]
    %v161 = vld [vmem:[#allocation3 + $0xc] sm:$0xff]
    %v162 = vld [vmem:[#allocation3 + $0x14] sm:$0xf]
    %v163 = vld [vmem:[#allocation3 + $0x18] sm:$0xff]
    %v164 = vld [vmem:[#allocation3 + $0x20] sm:$0xf]
    %v165 = vld [vmem:[#allocation3 + $0x24] sm:$0xff]
    %v166 = vld [vmem:[#allocation3 + $0x2c] sm:$0xf]
    %v167 = vld [vmem:[#allocation3 + $0x30] sm:$0xff]
    %v168 = vld [vmem:[#allocation3 + $0x38] sm:$0xf]
    %v169 = vld [vmem:[#allocation3 + $0x3c] sm:$0xff]
    %v170 = vld [vmem:[#allocation3 + $0x44] sm:$0xf]
    %v171 = vld [vmem:[#allocation3 + $0x48] sm:$0xff]
    %v172 = vld [vmem:[#allocation3 + $0x50] sm:$0xf]
    %v173 = vld [vmem:[#allocation3 + $0x54] sm:$0xff]
    %v174 = vld [vmem:[#allocation3 + $0x5c] sm:$0xf]
    %v175 = vld [vmem:[#allocation3 + $0x60] sm:$0xff]
    %v176 = vld [vmem:[#allocation3 + $0x68] sm:$0xf]
    %v177 = vld [vmem:[#allocation3 + $0x6c] sm:$0xff]
    %v178 = vld [vmem:[#allocation3 + $0x74] sm:$0xf]
    %v179 = vld [vmem:[#allocation3 + $0x78] sm:$0xff]
    %v180 = vld [vmem:[#allocation3 + $0x80] sm:$0xf]
    %v181 = vld [vmem:[#allocation3 + $0x84] sm:$0xff]
    %v182 = vld [vmem:[#allocation3 + $0x8c] sm:$0xf]
    %v183 = vld [vmem:[#allocation3 + $0x90] sm:$0xff]
    %v184 = vld [vmem:[#allocation3 + $0x98] sm:$0xf]
    %v185 = vld [vmem:[#allocation3 + $0x9c] sm:$0xff]
    %v186 = vld [vmem:[#allocation3 + $0xa4] sm:$0xf]
    %v187 = vld [vmem:[#allocation3 + $0xa8] sm:$0xff]
    %v188 = vld [vmem:[#allocation3 + $0xb0] sm:$0xf]
    %v189 = vld [vmem:[#allocation3 + $0xb4] sm:$0xff]
    %v190 = vld [vmem:[#allocation3 + $0xbc] sm:$0xf]
    %v191 = vld [vmem:[%s4] sm:$0x7]
    %v193 = vperm.slane %v191, 0
    %v194 = vperm.slane %v191, 1
    %v195 = vperm.slane %v191, 2
    %v203 = vunpack.c.l.b16 %v155
    %v204 = vunpack.c.l.b16 %v156
    %v205 = vunpack.c.l.b16 %v157
    %v206 = vunpack.c.l.b16 %v158
    %v207 = vpack.c.b16 %v204, %v203
    %v208 = vpack.c.b16 %v206, %v205
    %v243 = vunpack.c.l.b16 %v159
    %v244 = vunpack.c.h.b16 %v159
    %v245 = vunpack.c.l.b16 %v160
    %v246 = vunpack.c.l.b16 %v161
    %v247 = vunpack.c.h.b16 %v161
    %v248 = vunpack.c.l.b16 %v162
    %v249 = vunpack.c.l.b16 %v163
    %v250 = vunpack.c.h.b16 %v163
    %v251 = vunpack.c.l.b16 %v164
    %v252 = vunpack.c.l.b16 %v165
    %v253 = vunpack.c.h.b16 %v165
    %v254 = vunpack.c.l.b16 %v166
    %v255 = vunpack.c.l.b16 %v167
    %v256 = vunpack.c.h.b16 %v167
    %v257 = vunpack.c.l.b16 %v168
    %v258 = vunpack.c.l.b16 %v169
    %v259 = vunpack.c.h.b16 %v169
    %v260 = vunpack.c.l.b16 %v170
    %v261 = vunpack.c.l.b16 %v171
    %v262 = vunpack.c.h.b16 %v171
    %v263 = vunpack.c.l.b16 %v172
    %v264 = vunpack.c.l.b16 %v173
    %v265 = vunpack.c.h.b16 %v173
    %v266 = vunpack.c.l.b16 %v174
    %v267 = vunpack.c.l.b16 %v175
    %v268 = vunpack.c.h.b16 %v175
    %v269 = vunpack.c.l.b16 %v176
    %v270 = vunpack.c.l.b16 %v177
    %v271 = vunpack.c.h.b16 %v177
    %v272 = vunpack.c.l.b16 %v178
    %v273 = vunpack.c.l.b16 %v179
    %v274 = vunpack.c.h.b16 %v179
    %v275 = vunpack.c.l.b16 %v180
    %v276 = vunpack.c.l.b16 %v181
    %v277 = vunpack.c.h.b16 %v181
    %v278 = vunpack.c.l.b16 %v182
    %v279 = vunpack.c.l.b16 %v183
    %v280 = vunpack.c.h.b16 %v183
    %v281 = vunpack.c.l.b16 %v184
    %v282 = vunpack.c.l.b16 %v185
    %v283 = vunpack.c.h.b16 %v185
    %v284 = vunpack.c.l.b16 %v186
    %v285 = vunpack.c.l.b16 %v187
    %v286 = vunpack.c.h.b16 %v187
    %v287 = vunpack.c.l.b16 %v188
    %v288 = vunpack.c.l.b16 %v189
    %v289 = vunpack.c.h.b16 %v189
    %v290 = vunpack.c.l.b16 %v190
    %v291 = vpack.c.b16 %v246, %v243
    %v292 = vpack.c.b16 %v247, %v244
    %v293 = vpack.c.b16 %v248, %v245
    %v294 = vpack.c.b16 %v252, %v249
    %v295 = vpack.c.b16 %v253, %v250
    %v296 = vpack.c.b16 %v254, %v251
    %v297 = vpack.c.b16 %v258, %v255
    %v298 = vpack.c.b16 %v259, %v256
    %v299 = vpack.c.b16 %v260, %v257
    %v300 = vpack.c.b16 %v264, %v261
    %v301 = vpack.c.b16 %v265, %v262
    %v302 = vpack.c.b16 %v266, %v263
    %v303 = vpack.c.b16 %v270, %v267
    %v304 = vpack.c.b16 %v271, %v268
    %v305 = vpack.c.b16 %v272, %v269
    %v306 = vpack.c.b16 %v276, %v273
    %v307 = vpack.c.b16 %v277, %v274
    %v308 = vpack.c.b16 %v278, %v275
    %v309 = vpack.c.b16 %v282, %v279
    %v310 = vpack.c.b16 %v283, %v280
    %v311 = vpack.c.b16 %v284, %v281
    %v312 = vpack.c.b16 %v288, %v285
    %v313 = vpack.c.b16 %v289, %v286
    %v314 = vpack.c.b16 %v290, %v287
    %339 = vmatpush.bf16.msra.mxu0 %v312
    %340 = vmatpush.bf16.msra.mxu0 %v309
    %341 = vmatpush.bf16.msra.mxu0 %v306
    %342 = vmatpush.bf16.msra.mxu0 %v303
    %343 = vmatpush.bf16.msra.mxu0 %v300
    %344 = vmatpush.bf16.msra.mxu0 %v297
    %345 = vmatpush.bf16.msra.mxu0 %v294
    %346 = vmatpush.bf16.msra.mxu0 %v291
    %347 = vmatmul.bf16.gmra.mxu0 %v207
    %v348 = vpop.f32.mrf.mxu0
    %v349 = vadd.f32 %v193, %v348
    %v350 = vpop.f32.mrf.mxu0
    %v351 = vadd.f32 %v193, %v350
    %352 = vmatmul.bf16.gmra.mxu0 %v208
    %v353 = vpop.f32.mrf.mxu0
    %v354 = vadd.f32 %v193, %v353
    %v355 = vpop.f32.mrf.mxu0
    %v356 = vadd.f32 %v193, %v355
    %357 = vdwg.mxu0
    %358 = vmatpush.bf16.msra.mxu0 %v313
    %359 = vmatpush.bf16.msra.mxu0 %v310
    %360 = vmatpush.bf16.msra.mxu0 %v307
    %361 = vmatpush.bf16.msra.mxu0 %v304
    %362 = vmatpush.bf16.msra.mxu0 %v301
    %363 = vmatpush.bf16.msra.mxu0 %v298
    %364 = vmatpush.bf16.msra.mxu0 %v295
    %365 = vmatpush.bf16.msra.mxu0 %v292
    %366 = vmatmul.bf16.gmra.mxu0 %v207
    %v367 = vpop.f32.mrf.mxu0
    %v368 = vadd.f32 %v194, %v367
    %v369 = vpop.f32.mrf.mxu0
    %v370 = vadd.f32 %v194, %v369
    %371 = vmatmul.bf16.gmra.mxu0 %v208
    %v372 = vpop.f32.mrf.mxu0
    %v373 = vadd.f32 %v194, %v372
    %v374 = vpop.f32.mrf.mxu0
    %v375 = vadd.f32 %v194, %v374
    %376 = vdwg.mxu0
    %377 = vmatpush.bf16.msra.mxu0 %v314
    %378 = vmatpush.bf16.msra.mxu0 %v311
    %379 = vmatpush.bf16.msra.mxu0 %v308
    %380 = vmatpush.bf16.msra.mxu0 %v305
    %381 = vmatpush.bf16.msra.mxu0 %v302
    %382 = vmatpush.bf16.msra.mxu0 %v299
    %383 = vmatpush.bf16.msra.mxu0 %v296
    %384 = vmatpush.bf16.msra.mxu0 %v293
    %385 = vmatmul.bf16.gmra.mxu0 %v207
    %v386 = vpop.f32.mrf.mxu0
    %v387 = vadd.f32 %v195, %v386
    %v388 = vpop.f32.mrf.mxu0
    %v389 = vadd.f32 %v195, %v388
    %390 = vmatmul.bf16.gmra.mxu0 %v208
    %v391 = vpop.f32.mrf.mxu0
    %v392 = vadd.f32 %v195, %v391
    %v393 = vpop.f32.mrf.mxu0
    %v394 = vadd.f32 %v195, %v393
    %395 = vdwg.mxu0
    %v396 = vpack.c.bf16 %v368, %v349
    %v397 = vpack.c.bf16 %v387, %v387
    %v398 = vpack.c.bf16 %v370, %v351
    %v399 = vpack.c.bf16 %v389, %v389
    %v400 = vpack.c.bf16 %v373, %v354
    %v401 = vpack.c.bf16 %v392, %v392
    %v402 = vpack.c.bf16 %v375, %v356
    %v403 = vpack.c.bf16 %v394, %v394
    %404 = vst [vmem:[%s5] sm:$0xff] %v396
    %405 = vst [vmem:[%s5 + $0x8] sm:$0xf] %v397
    %406 = vst [vmem:[%s5 + $0xc] sm:$0xff] %v398
    %407 = vst [vmem:[%s5 + $0x14] sm:$0xf] %v399
    %408 = vst [vmem:[%s5 + $0x18] sm:$0xff] %v400
    %409 = vst [vmem:[%s5 + $0x20] sm:$0xf] %v401
    %410 = vst [vmem:[%s5 + $0x24] sm:$0xff] %v402
    %411 = vst [vmem:[%s5 + $0x2c] sm:$0xf] %v403
    // Predicated region
    $region30: #{transformer_forward.10} parent=1 // pred_check
      _
    $region31: #{transformer_forward.10} parent=1 // pred_check_branch
      %413 = sbr.rel (0) target = $region33
    $region32: #{transformer_forward.10} parent=1 // pred_region
      _
    $region33: #{transformer_forward.10} parent=1 // pred_fallthru
      _
    // Predicated region
    $region34: #{transformer_forward.10} parent=1 // pred_check
      _
    $region35: #{transformer_forward.10} parent=1 // pred_check_branch
      %415 = sbr.rel (0) target = $region37
    $region36: #{transformer_forward.10} parent=1 // pred_region
      _
    $region37: #{transformer_forward.10} parent=1 // pred_fallthru
      _
    %416 = vsyncpa [#allocation4], 1

// kernel: transformer_forward.12
$region0: #{transformer_forward.12}
  #allocation0 [shape = 'u32[]', space=smem, size = 0x4, offset = 0x4, fixed_abs, tag = 'smem constant byte address 0x4 - core index']
  #allocation1 [shape = 'u32[72,128]{1,0:T(1,128)}', space=vmem, size = 0x9000, scoped, tag = 'internal scratch']
  #allocation2 [shape = 'f32[32,128]{1,0:T(8,128)}', space=vmem, size = 0x4000, scoped, tag = 'scratch operand']
  %s0 = inlined_call_operand.vmem [shape: bf16[32,128], index: 0, kind: input, shape index: {}]
  %s1 = inlined_call_operand.vmem [shape: bf16[128,128], index: 1, kind: input, shape index: {}]
  %s2 = inlined_call_operand.vmem [shape: f32[1,128], index: 2, kind: input, shape index: {}]
  %s3 = inlined_call_operand.vmem [shape: f32[32,128], index: 3, kind: input, shape index: {}]
  %s4 = inlined_call_operand.vmem [shape: f32[32,128], index: 4, kind: output, shape index: {}]
  %s5 = sld [smem:[#allocation0]]
  $region34: #{transformer_forward.12} parent=0
    _
  %s7 = ssub.s32 1, %s5
  %s8 = scalar_select 0, %s7, %s5
  // Predicated region
  $region2: #{transformer_forward.12} parent=0 // pred_check
    _
  $region3: #{transformer_forward.12} parent=0 // pred_check_branch
    %10 = sbr.rel (0) target = $region5
  $region4: #{transformer_forward.12} parent=0 // pred_region
    _
  $region5: #{transformer_forward.12} parent=0 // pred_fallthru
    _
  // Predicated region
  $region6: #{transformer_forward.12} parent=0 // pred_check
    _
  $region7: #{transformer_forward.12} parent=0 // pred_check_branch
    %12 = sbr.rel (0) target = $region9
  $region8: #{transformer_forward.12} parent=0 // pred_region
    _
  $region9: #{transformer_forward.12} parent=0 // pred_fallthru
    _
  // Predicated region
  $region10: #{transformer_forward.12} parent=0 // pred_check
    _
  $region11: #{transformer_forward.12} parent=0 // pred_check_branch
    %14 = sbr.rel (0) target = $region13
  $region12: #{transformer_forward.12} parent=0 // pred_region
    _
  $region13: #{transformer_forward.12} parent=0 // pred_fallthru
    _
  // Predicated region
  $region14: #{transformer_forward.12} parent=0 // pred_check
    _
  $region15: #{transformer_forward.12} parent=0 // pred_check_branch
    %16 = sbr.rel (0) target = $region17
  $region16: #{transformer_forward.12} parent=0 // pred_region
    _
  $region17: #{transformer_forward.12} parent=0 // pred_fallthru
    _
  %p17 = scmp.eq.s32.totalorder 0, 0
  // Predicated region
  $region18: #{transformer_forward.12} parent=0 // pred_check
    %p18 = pneg %p17
  $region19: #{transformer_forward.12} parent=0 // pred_check_branch
    %20 = sbr.rel (%p18) target = $region21
  $region20: #{transformer_forward.12} parent=0 // pred_region
    %21 = vst [vmem:[#allocation2] sm:$0xff] 0.0
    %22 = vst [vmem:[#allocation2 + $0x8] sm:$0xff] 0.0
    %23 = vst [vmem:[#allocation2 + $0x10] sm:$0xff] 0.0
    %24 = vst [vmem:[#allocation2 + $0x18] sm:$0xff] 0.0
  $region21: #{transformer_forward.12} parent=0 // pred_fallthru
    _
  %v25 = vld [vmem:[%s0] sm:$0xf]
  %v26 = vld [vmem:[%s0 + $0x4] sm:$0xf]
  %v27 = vld [vmem:[%s0 + $0x8] sm:$0xf]
  %v28 = vld [vmem:[%s0 + $0xc] sm:$0xf]
  %v29 = vld [vmem:[#allocation2] sm:$0xff]
  %v30 = vld [vmem:[#allocation2 + $0x8] sm:$0xff]
  %v31 = vld [vmem:[#allocation2 + $0x10] sm:$0xff]
  %v32 = vld [vmem:[#allocation2 + $0x18] sm:$0xff]
  %v33 = vld [vmem:[%s1] sm:$0xf]
  %v34 = vld [vmem:[%s1 + $0x4] sm:$0xf]
  %v35 = vld [vmem:[%s1 + $0x8] sm:$0xf]
  %v36 = vld [vmem:[%s1 + $0xc] sm:$0xf]
  %v37 = vld [vmem:[%s1 + $0x10] sm:$0xf]
  %v38 = vld [vmem:[%s1 + $0x14] sm:$0xf]
  %v39 = vld [vmem:[%s1 + $0x18] sm:$0xf]
  %v40 = vld [vmem:[%s1 + $0x1c] sm:$0xf]
  %v41 = vld [vmem:[%s1 + $0x20] sm:$0xf]
  %v42 = vld [vmem:[%s1 + $0x24] sm:$0xf]
  %v43 = vld [vmem:[%s1 + $0x28] sm:$0xf]
  %v44 = vld [vmem:[%s1 + $0x2c] sm:$0xf]
  %v45 = vld [vmem:[%s1 + $0x30] sm:$0xf]
  %v46 = vld [vmem:[%s1 + $0x34] sm:$0xf]
  %v47 = vld [vmem:[%s1 + $0x38] sm:$0xf]
  %v48 = vld [vmem:[%s1 + $0x3c] sm:$0xf]
  %v53 = vunpack.c.l.b16 %v25
  %v54 = vunpack.c.l.b16 %v26
  %v55 = vunpack.c.l.b16 %v27
  %v56 = vunpack.c.l.b16 %v28
  %v57 = vpack.c.b16 %v54, %v53
  %v58 = vpack.c.b16 %v56, %v55
  %v77 = vunpack.c.l.b16 %v33
  %v78 = vunpack.c.l.b16 %v34
  %v79 = vunpack.c.l.b16 %v35
  %v80 = vunpack.c.l.b16 %v36
  %v81 = vunpack.c.l.b16 %v37
  %v82 = vunpack.c.l.b16 %v38
  %v83 = vunpack.c.l.b16 %v39
  %v84 = vunpack.c.l.b16 %v40
  %v85 = vunpack.c.l.b16 %v41
  %v86 = vunpack.c.l.b16 %v42
  %v87 = vunpack.c.l.b16 %v43
  %v88 = vunpack.c.l.b16 %v44
  %v89 = vunpack.c.l.b16 %v45
  %v90 = vunpack.c.l.b16 %v46
  %v91 = vunpack.c.l.b16 %v47
  %v92 = vunpack.c.l.b16 %v48
  %v93 = vpack.c.b16 %v78, %v77
  %v94 = vpack.c.b16 %v80, %v79
  %v95 = vpack.c.b16 %v82, %v81
  %v96 = vpack.c.b16 %v84, %v83
  %v97 = vpack.c.b16 %v86, %v85
  %v98 = vpack.c.b16 %v88, %v87
  %v99 = vpack.c.b16 %v90, %v89
  %v100 = vpack.c.b16 %v92, %v91
  %109 = vmatpush.bf16.msra.mxu0 %v100
  %110 = vmatpush.bf16.msra.mxu0 %v99
  %111 = vmatpush.bf16.msra.mxu0 %v98
  %112 = vmatpush.bf16.msra.mxu0 %v97
  %113 = vmatpush.bf16.msra.mxu0 %v96
  %114 = vmatpush.bf16.msra.mxu0 %v95
  %115 = vmatpush.bf16.msra.mxu0 %v94
  %116 = vmatpush.bf16.msra.mxu0 %v93
  %117 = vmatmul.bf16.gmra.mxu0 %v57
  %v118 = vpop.f32.mrf.mxu0
  %v119 = vadd.f32 0.0, %v118
  %v120 = vpop.f32.mrf.mxu0
  %v121 = vadd.f32 0.0, %v120
  %122 = vmatmul.bf16.gmra.mxu0 %v58
  %v123 = vpop.f32.mrf.mxu0
  %v124 = vadd.f32 0.0, %v123
  %v125 = vpop.f32.mrf.mxu0
  %v126 = vadd.f32 0.0, %v125
  %127 = vdwg.mxu0
  %v128 = vadd.f32 %v29, %v119
  %v129 = vadd.f32 %v30, %v121
  %v130 = vadd.f32 %v31, %v124
  %v131 = vadd.f32 %v32, %v126
  %132 = vst [vmem:[#allocation2] sm:$0xff] %v128
  %133 = vst [vmem:[#allocation2 + $0x8] sm:$0xff] %v129
  %134 = vst [vmem:[#allocation2 + $0x10] sm:$0xff] %v130
  %135 = vst [vmem:[#allocation2 + $0x18] sm:$0xff] %v131
  // Predicated region
  $region22: #{transformer_forward.12} parent=0 // pred_check
    %p136 = pneg %p17
  $region23: #{transformer_forward.12} parent=0 // pred_check_branch
    %138 = sbr.rel (%p136) target = $region25
  $region24: #{transformer_forward.12} parent=0 // pred_region
    %v139 = vld [vmem:[#allocation2] sm:$0xff]
    %v140 = vld [vmem:[#allocation2 + $0x8] sm:$0xff]
    %v141 = vld [vmem:[#allocation2 + $0x10] sm:$0xff]
    %v142 = vld [vmem:[#allocation2 + $0x18] sm:$0xff]
    %v143 = vld [vmem:[%s2] sm:$0x1]
    %v145 = vperm.slane %v143, 0
    %v147 = vadd.f32 %v139, %v145
    %v148 = vadd.f32 %v140, %v145
    %v149 = vadd.f32 %v141, %v145
    %v150 = vadd.f32 %v142, %v145
    %v151 = vld [vmem:[%s3] sm:$0xff]
    %v152 = vld [vmem:[%s3 + $0x8] sm:$0xff]
    %v153 = vld [vmem:[%s3 + $0x10] sm:$0xff]
    %v154 = vld [vmem:[%s3 + $0x18] sm:$0xff]
    %v155 = vadd.f32 %v147, %v151
    %v156 = vadd.f32 %v148, %v152
    %v157 = vadd.f32 %v149, %v153
    %v158 = vadd.f32 %v150, %v154
    %159 = vst [vmem:[%s4] sm:$0xff] %v155
    %160 = vst [vmem:[%s4 + $0x8] sm:$0xff] %v156
    %161 = vst [vmem:[%s4 + $0x10] sm:$0xff] %v157
    %162 = vst [vmem:[%s4 + $0x18] sm:$0xff] %v158
  $region25: #{transformer_forward.12} parent=0 // pred_fallthru
    _
  // Predicated region
  $region26: #{transformer_forward.12} parent=0 // pred_check
    _
  $region27: #{transformer_forward.12} parent=0 // pred_check_branch
    %164 = sbr.rel (0) target = $region29
  $region28: #{transformer_forward.12} parent=0 // pred_region
    _
  $region29: #{transformer_forward.12} parent=0 // pred_fallthru
    _
  // Predicated region
  $region30: #{transformer_forward.12} parent=0 // pred_check
    _
  $region31: #{transformer_forward.12} parent=0 // pred_check_branch
    %166 = sbr.rel (0) target = $region33
  $region32: #{transformer_forward.12} parent=0 // pred_region
    _
  $region33: #{transformer_forward.12} parent=0 // pred_fallthru
    _

// kernel: transformer_forward.13
$region0: #{transformer_forward.13}
  #allocation0 [shape = 'u32[]', space=smem, size = 0x4, offset = 0x4, fixed_abs, tag = 'smem constant byte address 0x4 - core index']
  #allocation1 [shape = 'u32[72,128]{1,0:T(1,128)}', space=vmem, size = 0x9000, scoped, tag = 'internal scratch']
  #allocation2 [shape = 'bf16[32,128]{1,0:T(8,128)(2,1)}', space=vmem, size = 0x2000, scoped, tag = 'scratch operand']
  %s0 = inlined_call_operand.vmem [shape: f32[32,128], index: 0, kind: input, shape index: {}]
  %s1 = inlined_call_operand.vmem [shape: f32[1,128], index: 1, kind: input, shape index: {}]
  %s2 = inlined_call_operand.vmem [shape: f32[1,128], index: 2, kind: input, shape index: {}]
  %s3 = inlined_call_operand.hbm [shape: bf16[128,512], index: 3, kind: input, shape index: {}]
  %s4 = inlined_call_operand.vmem [shape: f32[1,512], index: 4, kind: input, shape index: {}]
  %s5 = inlined_call_operand.vmem [shape: bf16[32,512], index: 5, kind: output, shape index: {}]
  %s6 = sld [smem:[#allocation0]]
  $region38: #{transformer_forward.13} parent=0
    _
  %s8 = ssub.s32 1, %s6
  %s9 = scalar_select 0, %s8, %s6
  $region1: #{transformer_forward.13} parent=0
    #allocation3 [shape = 'u8[131072]{0}', space=vmem, size = 0x20000, scoped, tag = 'input window, operand 3, single buffered']
    #allocation4 [shape = 's32[1]{0}', space=sflag, size = 0x4, scoped, tag = 'scoped memory for transformer_forward.13']
    %10 = vsyncpa [#allocation4], 0
    // Predicated region
    $region2: #{transformer_forward.13} parent=1 // pred_check
      _
    $region3: #{transformer_forward.13} parent=1 // pred_check_branch
      %12 = sbr.rel (0) target = $region5
    $region4: #{transformer_forward.13} parent=1 // pred_region
      _
    $region5: #{transformer_forward.13} parent=1 // pred_fallthru
      _
    // Predicated region
    $region6: #{transformer_forward.13} parent=1 // pred_check
      _
    $region7: #{transformer_forward.13} parent=1 // pred_check_branch
      %14 = sbr.rel (0) target = $region9
    $region8: #{transformer_forward.13} parent=1 // pred_region
      _
    $region9: #{transformer_forward.13} parent=1 // pred_fallthru
      _
    // Predicated region
    $region10: #{transformer_forward.13} parent=1 // pred_check
      _
    $region11: #{transformer_forward.13} parent=1 // pred_check_branch
      %16 = sbr.rel (0) target = $region13
    $region12: #{transformer_forward.13} parent=1 // pred_region
      _
    $region13: #{transformer_forward.13} parent=1 // pred_fallthru
      _
    // Predicated region
    $region14: #{transformer_forward.13} parent=1 // pred_check
      _
    $region15: #{transformer_forward.13} parent=1 // pred_check_branch
      %18 = sbr.rel (0) target = $region17
    $region16: #{transformer_forward.13} parent=1 // pred_region
      %20 = vsyncadd [#allocation4], 0
      %s21 = sshll.u32 %s3, 4
      %s22 = int_to_ptr.hbm [resolvable:$true] %s21
      %s23 = sshll.u32 [#allocation3], 4
      %s24 = int_to_ptr.vmem [resolvable:$true] %s23
      %29 = dma.hbm_to_vmem [thread:$0]  %s22, 4096, %s24, [#allocation4], 256, 256, 16
    $region17: #{transformer_forward.13} parent=1 // pred_fallthru
      _
    // Predicated region
    $region18: #{transformer_forward.13} parent=1 // pred_check
      _
    $region19: #{transformer_forward.13} parent=1 // pred_check_branch
      %31 = sbr.rel (0) target = $region21
    $region20: #{transformer_forward.13} parent=1 // pred_region
      _
    $region21: #{transformer_forward.13} parent=1 // pred_fallthru
      _
    // Predicated region
    $region22: #{transformer_forward.13} parent=1 // pred_check
      _
    $region23: #{transformer_forward.13} parent=1 // pred_check_branch
      %33 = sbr.rel (0) target = $region25
    $region24: #{transformer_forward.13} parent=1 // pred_region
      %35 = dma.done [#allocation4], 4096
    $region25: #{transformer_forward.13} parent=1 // pred_fallthru
      _
    %p36 = scmp.eq.s32.totalorder 0, 0
    // Predicated region
    $region26: #{transformer_forward.13} parent=1 // pred_check
      %p37 = pneg %p36
    $region27: #{transformer_forward.13} parent=1 // pred_check_branch
      %39 = sbr.rel (%p37) target = $region29
    $region28: #{transformer_forward.13} parent=1 // pred_region
      %v40 = vld [vmem:[%s0] sm:$0xff]
      %v41 = vld [vmem:[%s0 + $0x8] sm:$0xff]
      %v42 = vld [vmem:[%s0 + $0x10] sm:$0xff]
      %v43 = vld [vmem:[%s0 + $0x18] sm:$0xff]
      %44 = vadd.xlane.f32.xlu0 %v40
      %v45 = vpop.xlane.xlu0 %44
      %46 = vadd.xlane.f32.xlu0 %v41
      %v47 = vpop.xlane.xlu0 %46
      %48 = vadd.xlane.f32.xlu0 %v42
      %v49 = vpop.xlane.xlu0 %48
      %50 = vadd.xlane.f32.xlu0 %v43
      %v51 = vpop.xlane.xlu0 %50
      %v52 = vrcp.pop 128.0
      %v53 = vmul.f32 128.0, %v52
      %v54 = vsub.f32 1.0, %v53
      %v55 = vmul.f32 %v52, %v54
      %v56 = vadd.f32 %v52, %v55
      %vm57 = vweird.f32 %v52
      %v58 = vsel %vm57, %v52, %v56
      %v59 = vmul.f32 %v45, %v58
      %v60 = vmul.f32 %v47, %v58
      %v61 = vmul.f32 %v49, %v58
      %v62 = vmul.f32 %v51, %v58
      %v63 = vsub.f32 %v40, %v59
      %v64 = vsub.f32 %v41, %v60
      %v65 = vsub.f32 %v42, %v61
      %v66 = vsub.f32 %v43, %v62
      %v67 = vmul.f32 %v63, %v63
      %v68 = vmul.f32 %v64, %v64
      %v69 = vmul.f32 %v65, %v65
      %v70 = vmul.f32 %v66, %v66
      %71 = vadd.xlane.f32.xlu0 %v67
      %v72 = vpop.xlane.xlu0 %71
      %73 = vadd.xlane.f32.xlu0 %v68
      %v74 = vpop.xlane.xlu0 %73
      %75 = vadd.xlane.f32.xlu0 %v69
      %v76 = vpop.xlane.xlu0 %75
      %77 = vadd.xlane.f32.xlu0 %v70
      %v78 = vpop.xlane.xlu0 %77
      %v79 = vmul.f32 %v72, %v58
      %v80 = vmul.f32 %v74, %v58
      %v81 = vmul.f32 %v76, %v58
      %v82 = vmul.f32 %v78, %v58
      %v83 = vadd.f32 %v79, 1e-05
      %v84 = vadd.f32 %v80, 1e-05
      %v85 = vadd.f32 %v81, 1e-05
      %v86 = vadd.f32 %v82, 1e-05
      %v87 = vrsqrt.pop %v83
      %v88 = vmul.f32 %v87, %v83
      %v89 = vmul.f32 %v88, %v87
      %v90 = vmul.f32 0.5, %v89
      %v91 = vsub.f32 1.5, %v90
      %v92 = vmul.f32 %v87, %v91
      %vm93 = vweird.f32 %v83
      %vm94 = vweird.f32 %v87
      %vm95 = vmor %vm93, %vm94
      %v96 = vsel %vm95, %v87, %v92
      %v97 = vrsqrt.pop %v84
      %v98 = vmul.f32 %v97, %v84
      %v99 = vmul.f32 %v98, %v97
      %v100 = vmul.f32 0.5, %v99
      %v101 = vsub.f32 1.5, %v100
      %v102 = vmul.f32 %v97, %v101
      %vm103 = vweird.f32 %v84
      %vm104 = vweird.f32 %v97
      %vm105 = vmor %vm103, %vm104
      %v106 = vsel %vm105, %v97, %v102
      %v107 = vrsqrt.pop %v85
      %v108 = vmul.f32 %v107, %v85
      %v109 = vmul.f32 %v108, %v107
      %v110 = vmul.f32 0.5, %v109
      %v111 = vsub.f32 1.5, %v110
      %v112 = vmul.f32 %v107, %v111
      %vm113 = vweird.f32 %v85
      %vm114 = vweird.f32 %v107
      %vm115 = vmor %vm113, %vm114
      %v116 = vsel %vm115, %v107, %v112
      %v117 = vrsqrt.pop %v86
      %v118 = vmul.f32 %v117, %v86
      %v119 = vmul.f32 %v118, %v117
      %v120 = vmul.f32 0.5, %v119
      %v121 = vsub.f32 1.5, %v120
      %v122 = vmul.f32 %v117, %v121
      %vm123 = vweird.f32 %v86
      %vm124 = vweird.f32 %v117
      %vm125 = vmor %vm123, %vm124
      %v126 = vsel %vm125, %v117, %v122
      %v127 = vmul.f32 %v63, %v96
      %v128 = vmul.f32 %v64, %v106
      %v129 = vmul.f32 %v65, %v116
      %v130 = vmul.f32 %v66, %v126
      %v131 = vld [vmem:[%s1] sm:$0x1]
      %v133 = vperm.slane %v131, 0
      %v135 = vmul.f32 %v127, %v133
      %v136 = vmul.f32 %v128, %v133
      %v137 = vmul.f32 %v129, %v133
      %v138 = vmul.f32 %v130, %v133
      %v139 = vld [vmem:[%s2] sm:$0x1]
      %v141 = vperm.slane %v139, 0
      %v143 = vadd.f32 %v135, %v141
      %v144 = vadd.f32 %v136, %v141
      %v145 = vadd.f32 %v137, %v141
      %v146 = vadd.f32 %v138, %v141
      %v147 = vpack.c.bf16 %v143, %v143
      %v148 = vpack.c.bf16 %v144, %v144
      %v149 = vpack.c.bf16 %v145, %v145
      %v150 = vpack.c.bf16 %v146, %v146
      %151 = vst [vmem:[#allocation2] sm:$0xf] %v147
      %152 = vst [vmem:[#allocation2 + $0x4] sm:$0xf] %v148
      %153 = vst [vmem:[#allocation2 + $0x8] sm:$0xf] %v149
      %154 = vst [vmem:[#allocation2 + $0xc] sm:$0xf] %v150
    $region29: #{transformer_forward.13} parent=1 // pred_fallthru
      _
    %v155 = vld [vmem:[#allocation2] sm:$0xf]
    %v156 = vld [vmem:[#allocation2 + $0x4] sm:$0xf]
    %v157 = vld [vmem:[#allocation2 + $0x8] sm:$0xf]
    %v158 = vld [vmem:[#allocation2 + $0xc] sm:$0xf]
    %v159 = vld [vmem:[#allocation3] sm:$0xff]
    %v160 = vld [vmem:[#allocation3 + $0x8] sm:$0xff]
    %v161 = vld [vmem:[#allocation3 + $0x10] sm:$0xff]
    %v162 = vld [vmem:[#allocation3 + $0x18] sm:$0xff]
    %v163 = vld [vmem:[#allocation3 + $0x20] sm:$0xff]
    %v164 = vld [vmem:[#allocation3 + $0x28] sm:$0xff]
    %v165 = vld [vmem:[#allocation3 + $0x30] sm:$0xff]
    %v166 = vld [vmem:[#allocation3 + $0x38] sm:$0xff]
    %v167 = vld [vmem:[#allocation3 + $0x40] sm:$0xff]
    %v168 = vld [vmem:[#allocation3 + $0x48] sm:$0xff]
    %v169 = vld [vmem:[#allocation3 + $0x50] sm:$0xff]
    %v170 = vld [vmem:[#allocation3 + $0x58] sm:$0xff]
    %v171 = vld [vmem:[#allocation3 + $0x60] sm:$0xff]
    %v172 = vld [vmem:[#allocation3 + $0x68] sm:$0xff]
    %v173 = vld [vmem:[#allocation3 + $0x70] sm:$0xff]
    %v174 = vld [vmem:[#allocation3 + $0x78] sm:$0xff]
    %v175 = vld [vmem:[#allocation3 + $0x80] sm:$0xff]
    %v176 = vld [vmem:[#allocation3 + $0x88] sm:$0xff]
    %v177 = vld [vmem:[#allocation3 + $0x90] sm:$0xff]
    %v178 = vld [vmem:[#allocation3 + $0x98] sm:$0xff]
    %v179 = vld [vmem:[#allocation3 + $0xa0] sm:$0xff]
    %v180 = vld [vmem:[#allocation3 + $0xa8] sm:$0xff]
    %v181 = vld [vmem:[#allocation3 + $0xb0] sm:$0xff]
    %v182 = vld [vmem:[#allocation3 + $0xb8] sm:$0xff]
    %v183 = vld [vmem:[#allocation3 + $0xc0] sm:$0xff]
    %v184 = vld [vmem:[#allocation3 + $0xc8] sm:$0xff]
    %v185 = vld [vmem:[#allocation3 + $0xd0] sm:$0xff]
    %v186 = vld [vmem:[#allocation3 + $0xd8] sm:$0xff]
    %v187 = vld [vmem:[#allocation3 + $0xe0] sm:$0xff]
    %v188 = vld [vmem:[#allocation3 + $0xe8] sm:$0xff]
    %v189 = vld [vmem:[#allocation3 + $0xf0] sm:$0xff]
    %v190 = vld [vmem:[#allocation3 + $0xf8] sm:$0xff]
    %v191 = vld [vmem:[%s4] sm:$0xf]
    %v193 = vperm.slane %v191, 0
    %v194 = vperm.slane %v191, 1
    %v195 = vperm.slane %v191, 2
    %v196 = vperm.slane %v191, 3
    %v205 = vunpack.c.l.b16 %v155
    %v206 = vunpack.c.l.b16 %v156
    %v207 = vunpack.c.l.b16 %v157
    %v208 = vunpack.c.l.b16 %v158
    %v209 = vpack.c.b16 %v206, %v205
    %v210 = vpack.c.b16 %v208, %v207
    %v245 = vunpack.c.l.b16 %v159
    %v246 = vunpack.c.h.b16 %v159
    %v247 = vunpack.c.l.b16 %v160
    %v248 = vunpack.c.h.b16 %v160
    %v249 = vunpack.c.l.b16 %v161
    %v250 = vunpack.c.h.b16 %v161
    %v251 = vunpack.c.l.b16 %v162
    %v252 = vunpack.c.h.b16 %v162
    %v253 = vunpack.c.l.b16 %v163
    %v254 = vunpack.c.h.b16 %v163
    %v255 = vunpack.c.l.b16 %v164
    %v256 = vunpack.c.h.b16 %v164
    %v257 = vunpack.c.l.b16 %v165
    %v258 = vunpack.c.h.b16 %v165
    %v259 = vunpack.c.l.b16 %v166
    %v260 = vunpack.c.h.b16 %v166
    %v261 = vunpack.c.l.b16 %v167
    %v262 = vunpack.c.h.b16 %v167
    %v263 = vunpack.c.l.b16 %v168
    %v264 = vunpack.c.h.b16 %v168
    %v265 = vunpack.c.l.b16 %v169
    %v266 = vunpack.c.h.b16 %v169
    %v267 = vunpack.c.l.b16 %v170
    %v268 = vunpack.c.h.b16 %v170
    %v269 = vunpack.c.l.b16 %v171
    %v270 = vunpack.c.h.b16 %v171
    %v271 = vunpack.c.l.b16 %v172
    %v272 = vunpack.c.h.b16 %v172
    %v273 = vunpack.c.l.b16 %v173
    %v274 = vunpack.c.h.b16 %v173
    %v275 = vunpack.c.l.b16 %v174
    %v276 = vunpack.c.h.b16 %v174
    %v277 = vunpack.c.l.b16 %v175
    %v278 = vunpack.c.h.b16 %v175
    %v279 = vunpack.c.l.b16 %v176
    %v280 = vunpack.c.h.b16 %v176
    %v281 = vunpack.c.l.b16 %v177
    %v282 = vunpack.c.h.b16 %v177
    %v283 = vunpack.c.l.b16 %v178
    %v284 = vunpack.c.h.b16 %v178
    %v285 = vunpack.c.l.b16 %v179
    %v286 = vunpack.c.h.b16 %v179
    %v287 = vunpack.c.l.b16 %v180
    %v288 = vunpack.c.h.b16 %v180
    %v289 = vunpack.c.l.b16 %v181
    %v290 = vunpack.c.h.b16 %v181
    %v291 = vunpack.c.l.b16 %v182
    %v292 = vunpack.c.h.b16 %v182
    %v293 = vunpack.c.l.b16 %v183
    %v294 = vunpack.c.h.b16 %v183
    %v295 = vunpack.c.l.b16 %v184
    %v296 = vunpack.c.h.b16 %v184
    %v297 = vunpack.c.l.b16 %v185
    %v298 = vunpack.c.h.b16 %v185
    %v299 = vunpack.c.l.b16 %v186
    %v300 = vunpack.c.h.b16 %v186
    %v301 = vunpack.c.l.b16 %v187
    %v302 = vunpack.c.h.b16 %v187
    %v303 = vunpack.c.l.b16 %v188
    %v304 = vunpack.c.h.b16 %v188
    %v305 = vunpack.c.l.b16 %v189
    %v306 = vunpack.c.h.b16 %v189
    %v307 = vunpack.c.l.b16 %v190
    %v308 = vunpack.c.h.b16 %v190
    %v309 = vpack.c.b16 %v249, %v245
    %v310 = vpack.c.b16 %v250, %v246
    %v311 = vpack.c.b16 %v251, %v247
    %v312 = vpack.c.b16 %v252, %v248
    %v313 = vpack.c.b16 %v257, %v253
    %v314 = vpack.c.b16 %v258, %v254
    %v315 = vpack.c.b16 %v259, %v255
    %v316 = vpack.c.b16 %v260, %v256
    %v317 = vpack.c.b16 %v265, %v261
    %v318 = vpack.c.b16 %v266, %v262
    %v319 = vpack.c.b16 %v267, %v263
    %v320 = vpack.c.b16 %v268, %v264
    %v321 = vpack.c.b16 %v273, %v269
    %v322 = vpack.c.b16 %v274, %v270
    %v323 = vpack.c.b16 %v275, %v271
    %v324 = vpack.c.b16 %v276, %v272
    %v325 = vpack.c.b16 %v281, %v277
    %v326 = vpack.c.b16 %v282, %v278
    %v327 = vpack.c.b16 %v283, %v279
    %v328 = vpack.c.b16 %v284, %v280
    %v329 = vpack.c.b16 %v289, %v285
    %v330 = vpack.c.b16 %v290, %v286
    %v331 = vpack.c.b16 %v291, %v287
    %v332 = vpack.c.b16 %v292, %v288
    %v333 = vpack.c.b16 %v297, %v293
    %v334 = vpack.c.b16 %v298, %v294
    %v335 = vpack.c.b16 %v299, %v295
    %v336 = vpack.c.b16 %v300, %v296
    %v337 = vpack.c.b16 %v305, %v301
    %v338 = vpack.c.b16 %v306, %v302
    %v339 = vpack.c.b16 %v307, %v303
    %v340 = vpack.c.b16 %v308, %v304
    %373 = vmatpush.bf16.msra.mxu0 %v337
    %374 = vmatpush.bf16.msra.mxu0 %v333
    %375 = vmatpush.bf16.msra.mxu0 %v329
    %376 = vmatpush.bf16.msra.mxu0 %v325
    %377 = vmatpush.bf16.msra.mxu0 %v321
    %378 = vmatpush.bf16.msra.mxu0 %v317
    %379 = vmatpush.bf16.msra.mxu0 %v313
    %380 = vmatpush.bf16.msra.mxu0 %v309
    %381 = vmatmul.bf16.gmra.mxu0 %v209
    %v382 = vpop.f32.mrf.mxu0
    %v383 = vadd.f32 %v193, %v382
    %v384 = vpop.f32.mrf.mxu0
    %v385 = vadd.f32 %v193, %v384
    %386 = vmatmul.bf16.gmra.mxu0 %v210
    %v387 = vpop.f32.mrf.mxu0
    %v388 = vadd.f32 %v193, %v387
    %v389 = vpop.f32.mrf.mxu0
    %v390 = vadd.f32 %v193, %v389
    %391 = vdwg.mxu0
    %392 = vmatpush.bf16.msra.mxu0 %v338
    %393 = vmatpush.bf16.msra.mxu0 %v334
    %394 = vmatpush.bf16.msra.mxu0 %v330
    %395 = vmatpush.bf16.msra.mxu0 %v326
    %396 = vmatpush.bf16.msra.mxu0 %v322
    %397 = vmatpush.bf16.msra.mxu0 %v318
    %398 = vmatpush.bf16.msra.mxu0 %v314
    %399 = vmatpush.bf16.msra.mxu0 %v310
    %400 = vmatmul.bf16.gmra.mxu0 %v209
    %v401 = vpop.f32.mrf.mxu0
    %v402 = vadd.f32 %v194, %v401
    %v403 = vpop.f32.mrf.mxu0
    %v404 = vadd.f32 %v194, %v403
    %405 = vmatmul.bf16.gmra.mxu0 %v210
    %v406 = vpop.f32.mrf.mxu0
    %v407 = vadd.f32 %v194, %v406
    %v408 = vpop.f32.mrf.mxu0
    %v409 = vadd.f32 %v194, %v408
    %410 = vdwg.mxu0
    %411 = vmatpush.bf16.msra.mxu0 %v339
    %412 = vmatpush.bf16.msra.mxu0 %v335
    %413 = vmatpush.bf16.msra.mxu0 %v331
    %414 = vmatpush.bf16.msra.mxu0 %v327
    %415 = vmatpush.bf16.msra.mxu0 %v323
    %416 = vmatpush.bf16.msra.mxu0 %v319
    %417 = vmatpush.bf16.msra.mxu0 %v315
    %418 = vmatpush.bf16.msra.mxu0 %v311
    %419 = vmatmul.bf16.gmra.mxu0 %v209
    %v420 = vpop.f32.mrf.mxu0
    %v421 = vadd.f32 %v195, %v420
    %v422 = vpop.f32.mrf.mxu0
    %v423 = vadd.f32 %v195, %v422
    %424 = vmatmul.bf16.gmra.mxu0 %v210
    %v425 = vpop.f32.mrf.mxu0
    %v426 = vadd.f32 %v195, %v425
    %v427 = vpop.f32.mrf.mxu0
    %v428 = vadd.f32 %v195, %v427
    %429 = vdwg.mxu0
    %430 = vmatpush.bf16.msra.mxu0 %v340
    %431 = vmatpush.bf16.msra.mxu0 %v336
    %432 = vmatpush.bf16.msra.mxu0 %v332
    %433 = vmatpush.bf16.msra.mxu0 %v328
    %434 = vmatpush.bf16.msra.mxu0 %v324
    %435 = vmatpush.bf16.msra.mxu0 %v320
    %436 = vmatpush.bf16.msra.mxu0 %v316
    %437 = vmatpush.bf16.msra.mxu0 %v312
    %438 = vmatmul.bf16.gmra.mxu0 %v209
    %v439 = vpop.f32.mrf.mxu0
    %v440 = vadd.f32 %v196, %v439
    %v441 = vpop.f32.mrf.mxu0
    %v442 = vadd.f32 %v196, %v441
    %443 = vmatmul.bf16.gmra.mxu0 %v210
    %v444 = vpop.f32.mrf.mxu0
    %v445 = vadd.f32 %v196, %v444
    %v446 = vpop.f32.mrf.mxu0
    %v447 = vadd.f32 %v196, %v446
    %448 = vdwg.mxu0
    %v449 = vmul.f32 %v383, 1.702
    %v450 = vmul.f32 %v402, 1.702
    %v451 = vmul.f32 %v421, 1.702
    %v452 = vmul.f32 %v440, 1.702
    %v453 = vmul.f32 %v385, 1.702
    %v454 = vmul.f32 %v404, 1.702
    %v455 = vmul.f32 %v423, 1.702
    %v456 = vmul.f32 %v442, 1.702
    %v457 = vmul.f32 %v388, 1.702
    %v458 = vmul.f32 %v407, 1.702
    %v459 = vmul.f32 %v426, 1.702
    %v460 = vmul.f32 %v445, 1.702
    %v461 = vmul.f32 %v390, 1.702
    %v462 = vmul.f32 %v409, 1.702
    %v463 = vmul.f32 %v428, 1.702
    %v464 = vmul.f32 %v447, 1.702
    %v465 = vxor.u32 %v449, 2147483648
    %v466 = vxor.u32 %v450, 2147483648
    %v467 = vxor.u32 %v451, 2147483648
    %v468 = vxor.u32 %v452, 2147483648
    %v469 = vxor.u32 %v453, 2147483648
    %v470 = vxor.u32 %v454, 2147483648
    %v471 = vxor.u32 %v455, 2147483648
    %v472 = vxor.u32 %v456, 2147483648
    %v473 = vxor.u32 %v457, 2147483648
    %v474 = vxor.u32 %v458, 2147483648
    %v475 = vxor.u32 %v459, 2147483648
    %v476 = vxor.u32 %v460, 2147483648
    %v477 = vxor.u32 %v461, 2147483648
    %v478 = vxor.u32 %v462, 2147483648
    %v479 = vxor.u32 %v463, 2147483648
    %v480 = vxor.u32 %v464, 2147483648
    %v481 = vmul.f32 %v465, 1.442695
    %v482 = vpow.pop %v481
    %v483 = vmul.f32 %v466, 1.442695
    %v484 = vpow.pop %v483
    %v485 = vmul.f32 %v467, 1.442695
    %v486 = vpow.pop %v485
    %v487 = vmul.f32 %v468, 1.442695
    %v488 = vpow.pop %v487
    %v489 = vmul.f32 %v469, 1.442695
    %v490 = vpow.pop %v489
    %v491 = vmul.f32 %v470, 1.442695
    %v492 = vpow.pop %v491
    %v493 = vmul.f32 %v471, 1.442695
    %v494 = vpow.pop %v493
    %v495 = vmul.f32 %v472, 1.442695
    %v496 = vpow.pop %v495
    %v497 = vmul.f32 %v473, 1.442695
    %v498 = vpow.pop %v497
    %v499 = vmul.f32 %v474, 1.442695
    %v500 = vpow.pop %v499
    %v501 = vmul.f32 %v475, 1.442695
    %v502 = vpow.pop %v501
    %v503 = vmul.f32 %v476, 1.442695
    %v504 = vpow.pop %v503
    %v505 = vmul.f32 %v477, 1.442695
    %v506 = vpow.pop %v505
    %v507 = vmul.f32 %v478, 1.442695
    %v508 = vpow.pop %v507
    %v509 = vmul.f32 %v479, 1.442695
    %v510 = vpow.pop %v509
    %v511 = vmul.f32 %v480, 1.442695
    %v512 = vpow.pop %v511
    %v513 = vadd.f32 %v482, 1.0
    %v514 = vadd.f32 %v484, 1.0
    %v515 = vadd.f32 %v486, 1.0
    %v516 = vadd.f32 %v488, 1.0
    %v517 = vadd.f32 %v490, 1.0
    %v518 = vadd.f32 %v492, 1.0
    %v519 = vadd.f32 %v494, 1.0
    %v520 = vadd.f32 %v496, 1.0
    %v521 = vadd.f32 %v498, 1.0
    %v522 = vadd.f32 %v500, 1.0
    %v523 = vadd.f32 %v502, 1.0
    %v524 = vadd.f32 %v504, 1.0
    %v525 = vadd.f32 %v506, 1.0
    %v526 = vadd.f32 %v508, 1.0
    %v527 = vadd.f32 %v510, 1.0
    %v528 = vadd.f32 %v512, 1.0
    %v529 = vrcp.pop %v513
    %v530 = vmul.f32 %v513, %v529
    %v531 = vsub.f32 1.0, %v530
    %v532 = vmul.f32 %v529, %v531
    %v533 = vadd.f32 %v529, %v532
    %vm534 = vweird.f32 %v513
    %vm535 = vweird.f32 %v529
    %vm536 = vmor %vm534, %vm535
    %v537 = vsel %vm536, %v529, %v533
    %v538 = vand.u32 2147483647, %v513
    %vm539 = vcmp.eq.f32.partialorder %v538, 8.507059e+37
    %v540 = vand.u32 %v513, 2147483648
    %v541 = vor.u32 1.1754944e-38, %v540
    %v542 = vsel %vm539, %v541, %v537
    %v543 = vmul.f32 1.0, %v542
    %v544 = vrcp.pop %v514
    %v545 = vmul.f32 %v514, %v544
    %v546 = vsub.f32 1.0, %v545
    %v547 = vmul.f32 %v544, %v546
    %v548 = vadd.f32 %v544, %v547
    %vm549 = vweird.f32 %v514
    %vm550 = vweird.f32 %v544
    %vm551 = vmor %vm549, %vm550
    %v552 = vsel %vm551, %v544, %v548
    %v553 = vand.u32 2147483647, %v514
    %vm554 = vcmp.eq.f32.partialorder %v553, 8.507059e+37
    %v555 = vand.u32 %v514, 2147483648
    %v556 = vor.u32 1.1754944e-38, %v555
    %v557 = vsel %vm554, %v556, %v552
    %v558 = vmul.f32 1.0, %v557
    %v559 = vrcp.pop %v515
    %v560 = vmul.f32 %v515, %v559
    %v561 = vsub.f32 1.0, %v560
    %v562 = vmul.f32 %v559, %v561
    %v563 = vadd.f32 %v559, %v562
    %vm564 = vweird.f32 %v515
    %vm565 = vweird.f32 %v559
    %vm566 = vmor %vm564, %vm565
    %v567 = vsel %vm566, %v559, %v563
    %v568 = vand.u32 2147483647, %v515
    %vm569 = vcmp.eq.f32.partialorder %v568, 8.507059e+37
    %v570 = vand.u32 %v515, 2147483648
    %v571 = vor.u32 1.1754944e-38, %v570
    %v572 = vsel %vm569, %v571, %v567
    %v573 = vmul.f32 1.0, %v572
    %v574 = vrcp.pop %v516
    %v575 = vmul.f32 %v516, %v574
    %v576 = vsub.f32 1.0, %v575
    %v577 = vmul.f32 %v574, %v576
    %v578 = vadd.f32 %v574, %v577
    %vm579 = vweird.f32 %v516
    %vm580 = vweird.f32 %v574
    %vm581 = vmor %vm579, %vm580
    %v582 = vsel %vm581, %v574, %v578
    %v583 = vand.u32 2147483647, %v516
    %vm584 = vcmp.eq.f32.partialorder %v583, 8.507059e+37
    %v585 = vand.u32 %v516, 2147483648
    %v586 = vor.u32 1.1754944e-38, %v585
    %v587 = vsel %vm584, %v586, %v582
    %v588 = vmul.f32 1.0, %v587
    %v589 = vrcp.pop %v517
    %v590 = vmul.f32 %v517, %v589
    %v591 = vsub.f32 1.0, %v590
    %v592 = vmul.f32 %v589, %v591
    %v593 = vadd.f32 %v589, %v592
    %vm594 = vweird.f32 %v517
    %vm595 = vweird.f32 %v589
    %vm596 = vmor %vm594, %vm595
    %v597 = vsel %vm596, %v589, %v593
    %v598 = vand.u32 2147483647, %v517
    %vm599 = vcmp.eq.f32.partialorder %v598, 8.507059e+37
    %v600 = vand.u32 %v517, 2147483648
    %v601 = vor.u32 1.1754944e-38, %v600
    %v602 = vsel %vm599, %v601, %v597
    %v603 = vmul.f32 1.0, %v602
    %v604 = vrcp.pop %v518
    %v605 = vmul.f32 %v518, %v604
    %v606 = vsub.f32 1.0, %v605
    %v607 = vmul.f32 %v604, %v606
    %v608 = vadd.f32 %v604, %v607
    %vm609 = vweird.f32 %v518
    %vm610 = vweird.f32 %v604
    %vm611 = vmor %vm609, %vm610
    %v612 = vsel %vm611, %v604, %v608
    %v613 = vand.u32 2147483647, %v518
    %vm614 = vcmp.eq.f32.partialorder %v613, 8.507059e+37
    %v615 = vand.u32 %v518, 2147483648
    %v616 = vor.u32 1.1754944e-38, %v615
    %v617 = vsel %vm614, %v616, %v612
    %v618 = vmul.f32 1.0, %v617
    %v619 = vrcp.pop %v519
    %v620 = vmul.f32 %v519, %v619
    %v621 = vsub.f32 1.0, %v620
    %v622 = vmul.f32 %v619, %v621
    %v623 = vadd.f32 %v619, %v622
    %vm624 = vweird.f32 %v519
    %vm625 = vweird.f32 %v619
    %vm626 = vmor %vm624, %vm625
    %v627 = vsel %vm626, %v619, %v623
    %v628 = vand.u32 2147483647, %v519
    %vm629 = vcmp.eq.f32.partialorder %v628, 8.507059e+37
    %v630 = vand.u32 %v519, 2147483648
    %v631 = vor.u32 1.1754944e-38, %v630
    %v632 = vsel %vm629, %v631, %v627
    %v633 = vmul.f32 1.0, %v632
    %v634 = vrcp.pop %v520
    %v635 = vmul.f32 %v520, %v634
    %v636 = vsub.f32 1.0, %v635
    %v637 = vmul.f32 %v634, %v636
    %v638 = vadd.f32 %v634, %v637
    %vm639 = vweird.f32 %v520
    %vm640 = vweird.f32 %v634
    %vm641 = vmor %vm639, %vm640
    %v642 = vsel %vm641, %v634, %v638
    %v643 = vand.u32 2147483647, %v520
    %vm644 = vcmp.eq.f32.partialorder %v643, 8.507059e+37
    %v645 = vand.u32 %v520, 2147483648
    %v646 = vor.u32 1.1754944e-38, %v645
    %v647 = vsel %vm644, %v646, %v642
    %v648 = vmul.f32 1.0, %v647
    %v649 = vrcp.pop %v521
    %v650 = vmul.f32 %v521, %v649
    %v651 = vsub.f32 1.0, %v650
    %v652 = vmul.f32 %v649, %v651
    %v653 = vadd.f32 %v649, %v652
    %vm654 = vweird.f32 %v521
    %vm655 = vweird.f32 %v649
    %vm656 = vmor %vm654, %vm655
    %v657 = vsel %vm656, %v649, %v653
    %v658 = vand.u32 2147483647, %v521
    %vm659 = vcmp.eq.f32.partialorder %v658, 8.507059e+37
    %v660 = vand.u32 %v521, 2147483648
    %v661 = vor.u32 1.1754944e-38, %v660
    %v662 = vsel %vm659, %v661, %v657
    %v663 = vmul.f32 1.0, %v662
    %v664 = vrcp.pop %v522
    %v665 = vmul.f32 %v522, %v664
    %v666 = vsub.f32 1.0, %v665
    %v667 = vmul.f32 %v664, %v666
    %v668 = vadd.f32 %v664, %v667
    %vm669 = vweird.f32 %v522
    %vm670 = vweird.f32 %v664
    %vm671 = vmor %vm669, %vm670
    %v672 = vsel %vm671, %v664, %v668
    %v673 = vand.u32 2147483647, %v522
    %vm674 = vcmp.eq.f32.partialorder %v673, 8.507059e+37
    %v675 = vand.u32 %v522, 2147483648
    %v676 = vor.u32 1.1754944e-38, %v675
    %v677 = vsel %vm674, %v676, %v672
    %v678 = vmul.f32 1.0, %v677
    %v679 = vrcp.pop %v523
    %v680 = vmul.f32 %v523, %v679
    %v681 = vsub.f32 1.0, %v680
    %v682 = vmul.f32 %v679, %v681
    %v683 = vadd.f32 %v679, %v682
    %vm684 = vweird.f32 %v523
    %vm685 = vweird.f32 %v679
    %vm686 = vmor %vm684, %vm685
    %v687 = vsel %vm686, %v679, %v683
    %v688 = vand.u32 2147483647, %v523
    %vm689 = vcmp.eq.f32.partialorder %v688, 8.507059e+37
    %v690 = vand.u32 %v523, 2147483648
    %v691 = vor.u32 1.1754944e-38, %v690
    %v692 = vsel %vm689, %v691, %v687
    %v693 = vmul.f32 1.0, %v692
    %v694 = vrcp.pop %v524
    %v695 = vmul.f32 %v524, %v694
    %v696 = vsub.f32 1.0, %v695
    %v697 = vmul.f32 %v694, %v696
    %v698 = vadd.f32 %v694, %v697
    %vm699 = vweird.f32 %v524
    %vm700 = vweird.f32 %v694
    %vm701 = vmor %vm699, %vm700
    %v702 = vsel %vm701, %v694, %v698
    %v703 = vand.u32 2147483647, %v524
    %vm704 = vcmp.eq.f32.partialorder %v703, 8.507059e+37
    %v705 = vand.u32 %v524, 2147483648
    %v706 = vor.u32 1.1754944e-38, %v705
    %v707 = vsel %vm704, %v706, %v702
    %v708 = vmul.f32 1.0, %v707
    %v709 = vrcp.pop %v525
    %v710 = vmul.f32 %v525, %v709
    %v711 = vsub.f32 1.0, %v710
    %v712 = vmul.f32 %v709, %v711
    %v713 = vadd.f32 %v709, %v712
    %vm714 = vweird.f32 %v525
    %vm715 = vweird.f32 %v709
    %vm716 = vmor %vm714, %vm715
    %v717 = vsel %vm716, %v709, %v713
    %v718 = vand.u32 2147483647, %v525
    %vm719 = vcmp.eq.f32.partialorder %v718, 8.507059e+37
    %v720 = vand.u32 %v525, 2147483648
    %v721 = vor.u32 1.1754944e-38, %v720
    %v722 = vsel %vm719, %v721, %v717
    %v723 = vmul.f32 1.0, %v722
    %v724 = vrcp.pop %v526
    %v725 = vmul.f32 %v526, %v724
    %v726 = vsub.f32 1.0, %v725
    %v727 = vmul.f32 %v724, %v726
    %v728 = vadd.f32 %v724, %v727
    %vm729 = vweird.f32 %v526
    %vm730 = vweird.f32 %v724
    %vm731 = vmor %vm729, %vm730
    %v732 = vsel %vm731, %v724, %v728
    %v733 = vand.u32 2147483647, %v526
    %vm734 = vcmp.eq.f32.partialorder %v733, 8.507059e+37
    %v735 = vand.u32 %v526, 2147483648
    %v736 = vor.u32 1.1754944e-38, %v735
    %v737 = vsel %vm734, %v736, %v732
    %v738 = vmul.f32 1.0, %v737
    %v739 = vrcp.pop %v527
    %v740 = vmul.f32 %v527, %v739
    %v741 = vsub.f32 1.0, %v740
    %v742 = vmul.f32 %v739, %v741
    %v743 = vadd.f32 %v739, %v742
    %vm744 = vweird.f32 %v527
    %vm745 = vweird.f32 %v739
    %vm746 = vmor %vm744, %vm745
    %v747 = vsel %vm746, %v739, %v743
    %v748 = vand.u32 2147483647, %v527
    %vm749 = vcmp.eq.f32.partialorder %v748, 8.507059e+37
    %v750 = vand.u32 %v527, 2147483648
    %v751 = vor.u32 1.1754944e-38, %v750
    %v752 = vsel %vm749, %v751, %v747
    %v753 = vmul.f32 1.0, %v752
    %v754 = vrcp.pop %v528
    %v755 = vmul.f32 %v528, %v754
    %v756 = vsub.f32 1.0, %v755
    %v757 = vmul.f32 %v754, %v756
    %v758 = vadd.f32 %v754, %v757
    %vm759 = vweird.f32 %v528
    %vm760 = vweird.f32 %v754
    %vm761 = vmor %vm759, %vm760
    %v762 = vsel %vm761, %v754, %v758
    %v763 = vand.u32 2147483647, %v528
    %vm764 = vcmp.eq.f32.partialorder %v763, 8.507059e+37
    %v765 = vand.u32 %v528, 2147483648
    %v766 = vor.u32 1.1754944e-38, %v765
    %v767 = vsel %vm764, %v766, %v762
    %v768 = vmul.f32 1.0, %v767
    %v769 = vmul.f32 %v383, %v543
    %v770 = vmul.f32 %v402, %v558
    %v771 = vmul.f32 %v421, %v573
    %v772 = vmul.f32 %v440, %v588
    %v773 = vmul.f32 %v385, %v603
    %v774 = vmul.f32 %v404, %v618
    %v775 = vmul.f32 %v423, %v633
    %v776 = vmul.f32 %v442, %v648
    %v777 = vmul.f32 %v388, %v663
    %v778 = vmul.f32 %v407, %v678
    %v779 = vmul.f32 %v426, %v693
    %v780 = vmul.f32 %v445, %v708
    %v781 = vmul.f32 %v390, %v723
    %v782 = vmul.f32 %v409, %v738
    %v783 = vmul.f32 %v428, %v753
    %v784 = vmul.f32 %v447, %v768
    %v785 = vpack.c.bf16 %v770, %v769
    %v786 = vpack.c.bf16 %v772, %v771
    %v787 = vpack.c.bf16 %v774, %v773
    %v788 = vpack.c.bf16 %v776, %v775
    %v789 = vpack.c.bf16 %v778, %v777
    %v790 = vpack.c.bf16 %v780, %v779
    %v791 = vpack.c.bf16 %v782, %v781
    %v792 = vpack.c.bf16 %v784, %v783
    %793 = vst [vmem:[%s5] sm:$0xff] %v785
    %794 = vst [vmem:[%s5 + $0x8] sm:$0xff] %v786
    %795 = vst [vmem:[%s5 + $0x10] sm:$0xff] %v787
    %796 = vst [vmem:[%s5 + $0x18] sm:$0xff] %v788
    %797 = vst [vmem:[%s5 + $0x20] sm:$0xff] %v789
    %798 = vst [vmem:[%s5 + $0x28] sm:$0xff] %v790
    %799 = vst [vmem:[%s5 + $0x30] sm:$0xff] %v791
    %800 = vst [vmem:[%s5 + $0x38] sm:$0xff] %v792
    // Predicated region
    $region30: #{transformer_forward.13} parent=1 // pred_check
      _
    $region31: #{transformer_forward.13} parent=1 // pred_check_branch
      %802 = sbr.rel (0) target = $region33
    $region32: #{transformer_forward.13} parent=1 // pred_region
      _
    $region33: #{transformer_forward.13} parent=1 // pred_fallthru
      _
    // Predicated region
    $region34: #{transformer_forward.13} parent=1 // pred_check
      _
    $region35: #{transformer_forward.13} parent=1 // pred_check_branch
      %804 = sbr.rel (0) target = $region37
    $region36: #{transformer_forward.13} parent=1 // pred_region
      _
    $region37: #{transformer_forward.13} parent=1 // pred_fallthru
      _
    %805 = vsyncpa [#allocation4], 1

// kernel: transformer_forward.17
$region0: #{transformer_forward.17}
  #allocation0 [shape = 'u32[]', space=smem, size = 0x4, offset = 0x4, fixed_abs, tag = 'smem constant byte address 0x4 - core index']
  #allocation1 [shape = 'u32[72,128]{1,0:T(1,128)}', space=vmem, size = 0x9000, scoped, tag = 'internal scratch']
  #allocation2 [shape = 'f32[32,128]{1,0:T(8,128)}', space=vmem, size = 0x4000, scoped, tag = 'scratch operand']
  %s0 = inlined_call_operand.vmem [shape: bf16[32,128], index: 0, kind: input, shape index: {}]
  %s1 = inlined_call_operand.hbm [shape: bf16[128,128], index: 1, kind: input, shape index: {}]
  %s2 = inlined_call_operand.vmem [shape: f32[1,128], index: 2, kind: input, shape index: {}]
  %s3 = inlined_call_operand.vmem [shape: f32[32,128], index: 3, kind: input, shape index: {}]
  %s4 = inlined_call_operand.vmem [shape: f32[32,128], index: 4, kind: output, shape index: {}]
  %s5 = sld [smem:[#allocation0]]
  $region38: #{transformer_forward.17} parent=0
    _
  %s7 = ssub.s32 1, %s5
  %s8 = scalar_select 0, %s7, %s5
  $region1: #{transformer_forward.17} parent=0
    #allocation3 [shape = 'u8[32768]{0}', space=vmem, size = 0x8000, scoped, tag = 'input window, operand 1, single buffered']
    #allocation4 [shape = 's32[1]{0}', space=sflag, size = 0x4, scoped, tag = 'scoped memory for transformer_forward.17']
    %9 = vsyncpa [#allocation4], 0
    // Predicated region
    $region2: #{transformer_forward.17} parent=1 // pred_check
      _
    $region3: #{transformer_forward.17} parent=1 // pred_check_branch
      %11 = sbr.rel (0) target = $region5
    $region4: #{transformer_forward.17} parent=1 // pred_region
      _
    $region5: #{transformer_forward.17} parent=1 // pred_fallthru
      _
    // Predicated region
    $region6: #{transformer_forward.17} parent=1 // pred_check
      _
    $region7: #{transformer_forward.17} parent=1 // pred_check_branch
      %13 = sbr.rel (0) target = $region9
    $region8: #{transformer_forward.17} parent=1 // pred_region
      %15 = vsyncadd [#allocation4], 0
      %s16 = sshll.u32 %s1, 4
      %s17 = int_to_ptr.hbm [resolvable:$true] %s16
      %s18 = sshll.u32 [#allocation3], 4
      %s19 = int_to_ptr.vmem [resolvable:$true] %s18
      %24 = dma.hbm_to_vmem [thread:$0]  %s17, 1024, %s19, [#allocation4], 64, 64, 4
    $region9: #{transformer_forward.17} parent=1 // pred_fallthru
      _
    // Predicated region
    $region10: #{transformer_forward.17} parent=1 // pred_check
      _
    $region11: #{transformer_forward.17} parent=1 // pred_check_branch
      %26 = sbr.rel (0) target = $region13
    $region12: #{transformer_forward.17} parent=1 // pred_region
      _
    $region13: #{transformer_forward.17} parent=1 // pred_fallthru
      _
    // Predicated region
    $region14: #{transformer_forward.17} parent=1 // pred_check
      _
    $region15: #{transformer_forward.17} parent=1 // pred_check_branch
      %28 = sbr.rel (0) target = $region17
    $region16: #{transformer_forward.17} parent=1 // pred_region
      _
    $region17: #{transformer_forward.17} parent=1 // pred_fallthru
      _
    // Predicated region
    $region18: #{transformer_forward.17} parent=1 // pred_check
      _
    $region19: #{transformer_forward.17} parent=1 // pred_check_branch
      %30 = sbr.rel (0) target = $region21
    $region20: #{transformer_forward.17} parent=1 // pred_region
      %32 = dma.done [#allocation4], 1024
    $region21: #{transformer_forward.17} parent=1 // pred_fallthru
      _
    %p33 = scmp.eq.s32.totalorder 0, 0
    // Predicated region
    $region22: #{transformer_forward.17} parent=1 // pred_check
      %p34 = pneg %p33
    $region23: #{transformer_forward.17} parent=1 // pred_check_branch
      %36 = sbr.rel (%p34) target = $region25
    $region24: #{transformer_forward.17} parent=1 // pred_region
      %37 = vst [vmem:[#allocation2] sm:$0xff] 0.0
      %38 = vst [vmem:[#allocation2 + $0x8] sm:$0xff] 0.0
      %39 = vst [vmem:[#allocation2 + $0x10] sm:$0xff] 0.0
      %40 = vst [vmem:[#allocation2 + $0x18] sm:$0xff] 0.0
    $region25: #{transformer_forward.17} parent=1 // pred_fallthru
      _
    %v41 = vld [vmem:[%s0] sm:$0xf]
    %v42 = vld [vmem:[%s0 + $0x4] sm:$0xf]
    %v43 = vld [vmem:[%s0 + $0x8] sm:$0xf]
    %v44 = vld [vmem:[%s0 + $0xc] sm:$0xf]
    %v45 = vld [vmem:[#allocation2] sm:$0xff]
    %v46 = vld [vmem:[#allocation2 + $0x8] sm:$0xff]
    %v47 = vld [vmem:[#allocation2 + $0x10] sm:$0xff]
    %v48 = vld [vmem:[#allocation2 + $0x18] sm:$0xff]
    %v49 = vld [vmem:[#allocation3] sm:$0xf]
    %v50 = vld [vmem:[#allocation3 + $0x4] sm:$0xf]
    %v51 = vld [vmem:[#allocation3 + $0x8] sm:$0xf]
    %v52 = vld [vmem:[#allocation3 + $0xc] sm:$0xf]
    %v53 = vld [vmem:[#allocation3 + $0x10] sm:$0xf]
    %v54 = vld [vmem:[#allocation3 + $0x14] sm:$0xf]
    %v55 = vld [vmem:[#allocation3 + $0x18] sm:$0xf]
    %v56 = vld [vmem:[#allocation3 + $0x1c] sm:$0xf]
    %v57 = vld [vmem:[#allocation3 + $0x20] sm:$0xf]
    %v58 = vld [vmem:[#allocation3 + $0x24] sm:$0xf]
    %v59 = vld [vmem:[#allocation3 + $0x28] sm:$0xf]
    %v60 = vld [vmem:[#allocation3 + $0x2c] sm:$0xf]
    %v61 = vld [vmem:[#allocation3 + $0x30] sm:$0xf]
    %v62 = vld [vmem:[#allocation3 + $0x34] sm:$0xf]
    %v63 = vld [vmem:[#allocation3 + $0x38] sm:$0xf]
    %v64 = vld [vmem:[#allocation3 + $0x3c] sm:$0xf]
    %v69 = vunpack.c.l.b16 %v41
    %v70 = vunpack.c.l.b16 %v42
    %v71 = vunpack.c.l.b16 %v43
    %v72 = vunpack.c.l.b16 %v44
    %v73 = vpack.c.b16 %v70, %v69
    %v74 = vpack.c.b16 %v72, %v71
    %v93 = vunpack.c.l.b16 %v49
    %v94 = vunpack.c.l.b16 %v50
    %v95 = vunpack.c.l.b16 %v51
    %v96 = vunpack.c.l.b16 %v52
    %v97 = vunpack.c.l.b16 %v53
    %v98 = vunpack.c.l.b16 %v54
    %v99 = vunpack.c.l.b16 %v55
    %v100 = vunpack.c.l.b16 %v56
    %v101 = vunpack.c.l.b16 %v57
    %v102 = vunpack.c.l.b16 %v58
    %v103 = vunpack.c.l.b16 %v59
    %v104 = vunpack.c.l.b16 %v60
    %v105 = vunpack.c.l.b16 %v61
    %v106 = vunpack.c.l.b16 %v62
    %v107 = vunpack.c.l.b16 %v63
    %v108 = vunpack.c.l.b16 %v64
    %v109 = vpack.c.b16 %v94, %v93
    %v110 = vpack.c.b16 %v96, %v95
    %v111 = vpack.c.b16 %v98, %v97
    %v112 = vpack.c.b16 %v100, %v99
    %v113 = vpack.c.b16 %v102, %v101
    %v114 = vpack.c.b16 %v104, %v103
    %v115 = vpack.c.b16 %v106, %v105
    %v116 = vpack.c.b16 %v108, %v107
    %125 = vmatpush.bf16.msra.mxu0 %v116
    %126 = vmatpush.bf16.msra.mxu0 %v115
    %127 = vmatpush.bf16.msra.mxu0 %v114
    %128 = vmatpush.bf16.msra.mxu0 %v113
    %129 = vmatpush.bf16.msra.mxu0 %v112
    %130 = vmatpush.bf16.msra.mxu0 %v111
    %131 = vmatpush.bf16.msra.mxu0 %v110
    %132 = vmatpush.bf16.msra.mxu0 %v109
    %133 = vmatmul.bf16.gmra.mxu0 %v73
    %v134 = vpop.f32.mrf.mxu0
    %v135 = vadd.f32 0.0, %v134
    %v136 = vpop.f32.mrf.mxu0
    %v137 = vadd.f32 0.0, %v136
    %138 = vmatmul.bf16.gmra.mxu0 %v74
    %v139 = vpop.f32.mrf.mxu0
    %v140 = vadd.f32 0.0, %v139
    %v141 = vpop.f32.mrf.mxu0
    %v142 = vadd.f32 0.0, %v141
    %143 = vdwg.mxu0
    %v144 = vadd.f32 %v45, %v135
    %v145 = vadd.f32 %v46, %v137
    %v146 = vadd.f32 %v47, %v140
    %v147 = vadd.f32 %v48, %v142
    %148 = vst [vmem:[#allocation2] sm:$0xff] %v144
    %149 = vst [vmem:[#allocation2 + $0x8] sm:$0xff] %v145
    %150 = vst [vmem:[#allocation2 + $0x10] sm:$0xff] %v146
    %151 = vst [vmem:[#allocation2 + $0x18] sm:$0xff] %v147
    // Predicated region
    $region26: #{transformer_forward.17} parent=1 // pred_check
      %p152 = pneg %p33
    $region27: #{transformer_forward.17} parent=1 // pred_check_branch
      %154 = sbr.rel (%p152) target = $region29
    $region28: #{transformer_forward.17} parent=1 // pred_region
      %v155 = vld [vmem:[#allocation2] sm:$0xff]
      %v156 = vld [vmem:[#allocation2 + $0x8] sm:$0xff]
      %v157 = vld [vmem:[#allocation2 + $0x10] sm:$0xff]
      %v158 = vld [vmem:[#allocation2 + $0x18] sm:$0xff]
      %v159 = vld [vmem:[%s2] sm:$0x1]
      %v161 = vperm.slane %v159, 0
      %v163 = vadd.f32 %v155, %v161
      %v164 = vadd.f32 %v156, %v161
      %v165 = vadd.f32 %v157, %v161
      %v166 = vadd.f32 %v158, %v161
      %v167 = vld [vmem:[%s3] sm:$0xff]
      %v168 = vld [vmem:[%s3 + $0x8] sm:$0xff]
      %v169 = vld [vmem:[%s3 + $0x10] sm:$0xff]
      %v170 = vld [vmem:[%s3 + $0x18] sm:$0xff]
      %v171 = vadd.f32 %v163, %v167
      %v172 = vadd.f32 %v164, %v168
      %v173 = vadd.f32 %v165, %v169
      %v174 = vadd.f32 %v166, %v170
      %175 = vst [vmem:[%s4] sm:$0xff] %v171
      %176 = vst [vmem:[%s4 + $0x8] sm:$0xff] %v172
      %177 = vst [vmem:[%s4 + $0x10] sm:$0xff] %v173
      %178 = vst [vmem:[%s4 + $0x18] sm:$0xff] %v174
    $region29: #{transformer_forward.17} parent=1 // pred_fallthru
      _
    // Predicated region
    $region30: #{transformer_forward.17} parent=1 // pred_check
      _
    $region31: #{transformer_forward.17} parent=1 // pred_check_branch
      %180 = sbr.rel (0) target = $region33
    $region32: #{transformer_forward.17} parent=1 // pred_region
      _
    $region33: #{transformer_forward.17} parent=1 // pred_fallthru
      _
    // Predicated region
    $region34: #{transformer_forward.17} parent=1 // pred_check
      _
    $region35: #{transformer_forward.17} parent=1 // pred_check_branch
      %182 = sbr.rel (0) target = $region37
    $region36: #{transformer_forward.17} parent=1 // pred_region
      _
    $region37: #{transformer_forward.17} parent=1 // pred_fallthru
      _
    %183 = vsyncpa [#allocation4], 1

// kernel: transformer_forward.14
$region0: #{transformer_forward.14}
  #allocation0 [shape = 'u32[]', space=smem, size = 0x4, offset = 0x4, fixed_abs, tag = 'smem constant byte address 0x4 - core index']
  #allocation1 [shape = 'u32[72,128]{1,0:T(1,128)}', space=vmem, size = 0x9000, scoped, tag = 'internal scratch']
  #allocation2 [shape = 'f32[32,128]{1,0:T(8,128)}', space=vmem, size = 0x4000, scoped, tag = 'scratch operand']
  %s0 = inlined_call_operand.vmem [shape: bf16[32,512], index: 0, kind: input, shape index: {}]
  %s1 = inlined_call_operand.hbm [shape: bf16[512,128], index: 1, kind: input, shape index: {}]
  %s2 = inlined_call_operand.vmem [shape: f32[1,128], index: 2, kind: input, shape index: {}]
  %s3 = inlined_call_operand.vmem [shape: f32[32,128], index: 3, kind: input, shape index: {}]
  %s4 = inlined_call_operand.vmem [shape: f32[32,128], index: 4, kind: output, shape index: {}]
  %s5 = sld [smem:[#allocation0]]
  $region38: #{transformer_forward.14} parent=0
    _
  %s7 = ssub.s32 1, %s5
  %s8 = scalar_select 0, %s7, %s5
  $region1: #{transformer_forward.14} parent=0
    #allocation3 [shape = 'u8[131072]{0}', space=vmem, size = 0x20000, scoped, tag = 'input window, operand 1, single buffered']
    #allocation4 [shape = 's32[1]{0}', space=sflag, size = 0x4, scoped, tag = 'scoped memory for transformer_forward.14']
    %9 = vsyncpa [#allocation4], 0
    // Predicated region
    $region2: #{transformer_forward.14} parent=1 // pred_check
      _
    $region3: #{transformer_forward.14} parent=1 // pred_check_branch
      %11 = sbr.rel (0) target = $region5
    $region4: #{transformer_forward.14} parent=1 // pred_region
      _
    $region5: #{transformer_forward.14} parent=1 // pred_fallthru
      _
    // Predicated region
    $region6: #{transformer_forward.14} parent=1 // pred_check
      _
    $region7: #{transformer_forward.14} parent=1 // pred_check_branch
      %13 = sbr.rel (0) target = $region9
    $region8: #{transformer_forward.14} parent=1 // pred_region
      %15 = vsyncadd [#allocation4], 0
      %s16 = sshll.u32 %s1, 4
      %s17 = int_to_ptr.hbm [resolvable:$true] %s16
      %s18 = sshll.u32 [#allocation3], 4
      %s19 = int_to_ptr.vmem [resolvable:$true] %s18
      %24 = dma.hbm_to_vmem [thread:$0]  %s17, 4096, %s19, [#allocation4], 64, 64, 4
    $region9: #{transformer_forward.14} parent=1 // pred_fallthru
      _
    // Predicated region
    $region10: #{transformer_forward.14} parent=1 // pred_check
      _
    $region11: #{transformer_forward.14} parent=1 // pred_check_branch
      %26 = sbr.rel (0) target = $region13
    $region12: #{transformer_forward.14} parent=1 // pred_region
      _
    $region13: #{transformer_forward.14} parent=1 // pred_fallthru
      _
    // Predicated region
    $region14: #{transformer_forward.14} parent=1 // pred_check
      _
    $region15: #{transformer_forward.14} parent=1 // pred_check_branch
      %28 = sbr.rel (0) target = $region17
    $region16: #{transformer_forward.14} parent=1 // pred_region
      _
    $region17: #{transformer_forward.14} parent=1 // pred_fallthru
      _
    // Predicated region
    $region18: #{transformer_forward.14} parent=1 // pred_check
      _
    $region19: #{transformer_forward.14} parent=1 // pred_check_branch
      %30 = sbr.rel (0) target = $region21
    $region20: #{transformer_forward.14} parent=1 // pred_region
      %32 = dma.done [#allocation4], 4096
    $region21: #{transformer_forward.14} parent=1 // pred_fallthru
      _
    %p33 = scmp.eq.s32.totalorder 0, 0
    // Predicated region
    $region22: #{transformer_forward.14} parent=1 // pred_check
      %p34 = pneg %p33
    $region23: #{transformer_forward.14} parent=1 // pred_check_branch
      %36 = sbr.rel (%p34) target = $region25
    $region24: #{transformer_forward.14} parent=1 // pred_region
      %37 = vst [vmem:[#allocation2] sm:$0xff] 0.0
      %38 = vst [vmem:[#allocation2 + $0x8] sm:$0xff] 0.0
      %39 = vst [vmem:[#allocation2 + $0x10] sm:$0xff] 0.0
      %40 = vst [vmem:[#allocation2 + $0x18] sm:$0xff] 0.0
    $region25: #{transformer_forward.14} parent=1 // pred_fallthru
      _
    %v41 = vld [vmem:[%s0] sm:$0xff]
    %v42 = vld [vmem:[%s0 + $0x8] sm:$0xff]
    %v43 = vld [vmem:[%s0 + $0x10] sm:$0xff]
    %v44 = vld [vmem:[%s0 + $0x18] sm:$0xff]
    %v45 = vld [vmem:[%s0 + $0x20] sm:$0xff]
    %v46 = vld [vmem:[%s0 + $0x28] sm:$0xff]
    %v47 = vld [vmem:[%s0 + $0x30] sm:$0xff]
    %v48 = vld [vmem:[%s0 + $0x38] sm:$0xff]
    %v49 = vld [vmem:[#allocation2] sm:$0xff]
    %v50 = vld [vmem:[#allocation2 + $0x8] sm:$0xff]
    %v51 = vld [vmem:[#allocation2 + $0x10] sm:$0xff]
    %v52 = vld [vmem:[#allocation2 + $0x18] sm:$0xff]
    %v53 = vld [vmem:[#allocation3] sm:$0xf]
    %v54 = vld [vmem:[#allocation3 + $0x4] sm:$0xf]
    %v55 = vld [vmem:[#allocation3 + $0x8] sm:$0xf]
    %v56 = vld [vmem:[#allocation3 + $0xc] sm:$0xf]
    %v57 = vld [vmem:[#allocation3 + $0x10] sm:$0xf]
    %v58 = vld [vmem:[#allocation3 + $0x14] sm:$0xf]
    %v59 = vld [vmem:[#allocation3 + $0x18] sm:$0xf]
    %v60 = vld [vmem:[#allocation3 + $0x1c] sm:$0xf]
    %v61 = vld [vmem:[#allocation3 + $0x20] sm:$0xf]
    %v62 = vld [vmem:[#allocation3 + $0x24] sm:$0xf]
    %v63 = vld [vmem:[#allocation3 + $0x28] sm:$0xf]
    %v64 = vld [vmem:[#allocation3 + $0x2c] sm:$0xf]
    %v65 = vld [vmem:[#allocation3 + $0x30] sm:$0xf]
    %v66 = vld [vmem:[#allocation3 + $0x34] sm:$0xf]
    %v67 = vld [vmem:[#allocation3 + $0x38] sm:$0xf]
    %v68 = vld [vmem:[#allocation3 + $0x3c] sm:$0xf]
    %v69 = vld [vmem:[#allocation3 + $0x40] sm:$0xf]
    %v70 = vld [vmem:[#allocation3 + $0x44] sm:$0xf]
    %v71 = vld [vmem:[#allocation3 + $0x48] sm:$0xf]
    %v72 = vld [vmem:[#allocation3 + $0x4c] sm:$0xf]
    %v73 = vld [vmem:[#allocation3 + $0x50] sm:$0xf]
    %v74 = vld [vmem:[#allocation3 + $0x54] sm:$0xf]
    %v75 = vld [vmem:[#allocation3 + $0x58] sm:$0xf]
    %v76 = vld [vmem:[#allocation3 + $0x5c] sm:$0xf]
    %v77 = vld [vmem:[#allocation3 + $0x60] sm:$0xf]
    %v78 = vld [vmem:[#allocation3 + $0x64] sm:$0xf]
    %v79 = vld [vmem:[#allocation3 + $0x68] sm:$0xf]
    %v80 = vld [vmem:[#allocation3 + $0x6c] sm:$0xf]
    %v81 = vld [vmem:[#allocation3 + $0x70] sm:$0xf]
    %v82 = vld [vmem:[#allocation3 + $0x74] sm:$0xf]
    %v83 = vld [vmem:[#allocation3 + $0x78] sm:$0xf]
    %v84 = vld [vmem:[#allocation3 + $0x7c] sm:$0xf]
    %v85 = vld [vmem:[#allocation3 + $0x80] sm:$0xf]
    %v86 = vld [vmem:[#allocation3 + $0x84] sm:$0xf]
    %v87 = vld [vmem:[#allocation3 + $0x88] sm:$0xf]
    %v88 = vld [vmem:[#allocation3 + $0x8c] sm:$0xf]
    %v89 = vld [vmem:[#allocation3 + $0x90] sm:$0xf]
    %v90 = vld [vmem:[#allocation3 + $0x94] sm:$0xf]
    %v91 = vld [vmem:[#allocation3 + $0x98] sm:$0xf]
    %v92 = vld [vmem:[#allocation3 + $0x9c] sm:$0xf]
    %v93 = vld [vmem:[#allocation3 + $0xa0] sm:$0xf]
    %v94 = vld [vmem:[#allocation3 + $0xa4] sm:$0xf]
    %v95 = vld [vmem:[#allocation3 + $0xa8] sm:$0xf]
    %v96 = vld [vmem:[#allocation3 + $0xac] sm:$0xf]
    %v97 = vld [vmem:[#allocation3 + $0xb0] sm:$0xf]
    %v98 = vld [vmem:[#allocation3 + $0xb4] sm:$0xf]
    %v99 = vld [vmem:[#allocation3 + $0xb8] sm:$0xf]
    %v100 = vld [vmem:[#allocation3 + $0xbc] sm:$0xf]
    %v101 = vld [vmem:[#allocation3 + $0xc0] sm:$0xf]
    %v102 = vld [vmem:[#allocation3 + $0xc4] sm:$0xf]
    %v103 = vld [vmem:[#allocation3 + $0xc8] sm:$0xf]
    %v104 = vld [vmem:[#allocation3 + $0xcc] sm:$0xf]
    %v105 = vld [vmem:[#allocation3 + $0xd0] sm:$0xf]
    %v106 = vld [vmem:[#allocation3 + $0xd4] sm:$0xf]
    %v107 = vld [vmem:[#allocation3 + $0xd8] sm:$0xf]
    %v108 = vld [vmem:[#allocation3 + $0xdc] sm:$0xf]
    %v109 = vld [vmem:[#allocation3 + $0xe0] sm:$0xf]
    %v110 = vld [vmem:[#allocation3 + $0xe4] sm:$0xf]
    %v111 = vld [vmem:[#allocation3 + $0xe8] sm:$0xf]
    %v112 = vld [vmem:[#allocation3 + $0xec] sm:$0xf]
    %v113 = vld [vmem:[#allocation3 + $0xf0] sm:$0xf]
    %v114 = vld [vmem:[#allocation3 + $0xf4] sm:$0xf]
    %v115 = vld [vmem:[#allocation3 + $0xf8] sm:$0xf]
    %v116 = vld [vmem:[#allocation3 + $0xfc] sm:$0xf]
    %v125 = vunpack.c.l.b16 %v41
    %v126 = vunpack.c.h.b16 %v41
    %v127 = vunpack.c.l.b16 %v42
    %v128 = vunpack.c.h.b16 %v42
    %v129 = vunpack.c.l.b16 %v43
    %v130 = vunpack.c.h.b16 %v43
    %v131 = vunpack.c.l.b16 %v44
    %v132 = vunpack.c.h.b16 %v44
    %v133 = vunpack.c.l.b16 %v45
    %v134 = vunpack.c.h.b16 %v45
    %v135 = vunpack.c.l.b16 %v46
    %v136 = vunpack.c.h.b16 %v46
    %v137 = vunpack.c.l.b16 %v47
    %v138 = vunpack.c.h.b16 %v47
    %v139 = vunpack.c.l.b16 %v48
    %v140 = vunpack.c.h.b16 %v48
    %v141 = vpack.c.b16 %v129, %v125
    %v142 = vpack.c.b16 %v130, %v126
    %v143 = vpack.c.b16 %v131, %v127
    %v144 = vpack.c.b16 %v132, %v128
    %v145 = vpack.c.b16 %v137, %v133
    %v146 = vpack.c.b16 %v138, %v134
    %v147 = vpack.c.b16 %v139, %v135
    %v148 = vpack.c.b16 %v140, %v136
    %v221 = vunpack.c.l.b16 %v53
    %v222 = vunpack.c.l.b16 %v54
    %v223 = vunpack.c.l.b16 %v55
    %v224 = vunpack.c.l.b16 %v56
    %v225 = vunpack.c.l.b16 %v57
    %v226 = vunpack.c.l.b16 %v58
    %v227 = vunpack.c.l.b16 %v59
    %v228 = vunpack.c.l.b16 %v60
    %v229 = vunpack.c.l.b16 %v61
    %v230 = vunpack.c.l.b16 %v62
    %v231 = vunpack.c.l.b16 %v63
    %v232 = vunpack.c.l.b16 %v64
    %v233 = vunpack.c.l.b16 %v65
    %v234 = vunpack.c.l.b16 %v66
    %v235 = vunpack.c.l.b16 %v67
    %v236 = vunpack.c.l.b16 %v68
    %v237 = vunpack.c.l.b16 %v69
    %v238 = vunpack.c.l.b16 %v70
    %v239 = vunpack.c.l.b16 %v71
    %v240 = vunpack.c.l.b16 %v72
    %v241 = vunpack.c.l.b16 %v73
    %v242 = vunpack.c.l.b16 %v74
    %v243 = vunpack.c.l.b16 %v75
    %v244 = vunpack.c.l.b16 %v76
    %v245 = vunpack.c.l.b16 %v77
    %v246 = vunpack.c.l.b16 %v78
    %v247 = vunpack.c.l.b16 %v79
    %v248 = vunpack.c.l.b16 %v80
    %v249 = vunpack.c.l.b16 %v81
    %v250 = vunpack.c.l.b16 %v82
    %v251 = vunpack.c.l.b16 %v83
    %v252 = vunpack.c.l.b16 %v84
    %v253 = vunpack.c.l.b16 %v85
    %v254 = vunpack.c.l.b16 %v86
    %v255 = vunpack.c.l.b16 %v87
    %v256 = vunpack.c.l.b16 %v88
    %v257 = vunpack.c.l.b16 %v89
    %v258 = vunpack.c.l.b16 %v90
    %v259 = vunpack.c.l.b16 %v91
    %v260 = vunpack.c.l.b16 %v92
    %v261 = vunpack.c.l.b16 %v93
    %v262 = vunpack.c.l.b16 %v94
    %v263 = vunpack.c.l.b16 %v95
    %v264 = vunpack.c.l.b16 %v96
    %v265 = vunpack.c.l.b16 %v97
    %v266 = vunpack.c.l.b16 %v98
    %v267 = vunpack.c.l.b16 %v99
    %v268 = vunpack.c.l.b16 %v100
    %v269 = vunpack.c.l.b16 %v101
    %v270 = vunpack.c.l.b16 %v102
    %v271 = vunpack.c.l.b16 %v103
    %v272 = vunpack.c.l.b16 %v104
    %v273 = vunpack.c.l.b16 %v105
    %v274 = vunpack.c.l.b16 %v106
    %v275 = vunpack.c.l.b16 %v107
    %v276 = vunpack.c.l.b16 %v108
    %v277 = vunpack.c.l.b16 %v109
    %v278 = vunpack.c.l.b16 %v110
    %v279 = vunpack.c.l.b16 %v111
    %v280 = vunpack.c.l.b16 %v112
    %v281 = vunpack.c.l.b16 %v113
    %v282 = vunpack.c.l.b16 %v114
    %v283 = vunpack.c.l.b16 %v115
    %v284 = vunpack.c.l.b16 %v116
    %v285 = vpack.c.b16 %v222, %v221
    %v286 = vpack.c.b16 %v224, %v223
    %v287 = vpack.c.b16 %v226, %v225
    %v288 = vpack.c.b16 %v228, %v227
    %v289 = vpack.c.b16 %v230, %v229
    %v290 = vpack.c.b16 %v232, %v231
    %v291 = vpack.c.b16 %v234, %v233
    %v292 = vpack.c.b16 %v236, %v235
    %v293 = vpack.c.b16 %v238, %v237
    %v294 = vpack.c.b16 %v240, %v239
    %v295 = vpack.c.b16 %v242, %v241
    %v296 = vpack.c.b16 %v244, %v243
    %v297 = vpack.c.b16 %v246, %v245
    %v298 = vpack.c.b16 %v248, %v247
    %v299 = vpack.c.b16 %v250, %v249
    %v300 = vpack.c.b16 %v252, %v251
    %v301 = vpack.c.b16 %v254, %v253
    %v302 = vpack.c.b16 %v256, %v255
    %v303 = vpack.c.b16 %v258, %v257
    %v304 = vpack.c.b16 %v260, %v259
    %v305 = vpack.c.b16 %v262, %v261
    %v306 = vpack.c.b16 %v264, %v263
    %v307 = vpack.c.b16 %v266, %v265
    %v308 = vpack.c.b16 %v268, %v267
    %v309 = vpack.c.b16 %v270, %v269
    %v310 = vpack.c.b16 %v272, %v271
    %v311 = vpack.c.b16 %v274, %v273
    %v312 = vpack.c.b16 %v276, %v275
    %v313 = vpack.c.b16 %v278, %v277
    %v314 = vpack.c.b16 %v280, %v279
    %v315 = vpack.c.b16 %v282, %v281
    %v316 = vpack.c.b16 %v284, %v283
    %349 = vmatpush.bf16.msra.mxu0 %v292
    %350 = vmatpush.bf16.msra.mxu0 %v291
    %351 = vmatpush.bf16.msra.mxu0 %v290
    %352 = vmatpush.bf16.msra.mxu0 %v289
    %353 = vmatpush.bf16.msra.mxu0 %v288
    %354 = vmatpush.bf16.msra.mxu0 %v287
    %355 = vmatpush.bf16.msra.mxu0 %v286
    %356 = vmatpush.bf16.msra.mxu0 %v285
    %357 = vmatmul.bf16.gmra.mxu0 %v141
    %v358 = vpop.f32.mrf.mxu0
    %v359 = vadd.f32 0.0, %v358
    %v360 = vpop.f32.mrf.mxu0
    %v361 = vadd.f32 0.0, %v360
    %362 = vmatmul.bf16.gmra.mxu0 %v145
    %v363 = vpop.f32.mrf.mxu0
    %v364 = vadd.f32 0.0, %v363
    %v365 = vpop.f32.mrf.mxu0
    %v366 = vadd.f32 0.0, %v365
    %367 = vdwg.mxu0
    %368 = vmatpush.bf16.msra.mxu0 %v300
    %369 = vmatpush.bf16.msra.mxu0 %v299
    %370 = vmatpush.bf16.msra.mxu0 %v298
    %371 = vmatpush.bf16.msra.mxu0 %v297
    %372 = vmatpush.bf16.msra.mxu0 %v296
    %373 = vmatpush.bf16.msra.mxu0 %v295
    %374 = vmatpush.bf16.msra.mxu0 %v294
    %375 = vmatpush.bf16.msra.mxu0 %v293
    %376 = vmatmul.bf16.gmra.mxu0 %v142
    %v377 = vpop.f32.mrf.mxu0
    %v378 = vadd.f32 %v359, %v377
    %v379 = vpop.f32.mrf.mxu0
    %v380 = vadd.f32 %v361, %v379
    %381 = vmatmul.bf16.gmra.mxu0 %v146
    %v382 = vpop.f32.mrf.mxu0
    %v383 = vadd.f32 %v364, %v382
    %v384 = vpop.f32.mrf.mxu0
    %v385 = vadd.f32 %v366, %v384
    %386 = vdwg.mxu0
    %387 = vmatpush.bf16.msra.mxu0 %v308
    %388 = vmatpush.bf16.msra.mxu0 %v307
    %389 = vmatpush.bf16.msra.mxu0 %v306
    %390 = vmatpush.bf16.msra.mxu0 %v305
    %391 = vmatpush.bf16.msra.mxu0 %v304
    %392 = vmatpush.bf16.msra.mxu0 %v303
    %393 = vmatpush.bf16.msra.mxu0 %v302
    %394 = vmatpush.bf16.msra.mxu0 %v301
    %395 = vmatmul.bf16.gmra.mxu0 %v143
    %v396 = vpop.f32.mrf.mxu0
    %v397 = vadd.f32 %v378, %v396
    %v398 = vpop.f32.mrf.mxu0
    %v399 = vadd.f32 %v380, %v398
    %400 = vmatmul.bf16.gmra.mxu0 %v147
    %v401 = vpop.f32.mrf.mxu0
    %v402 = vadd.f32 %v383, %v401
    %v403 = vpop.f32.mrf.mxu0
    %v404 = vadd.f32 %v385, %v403
    %405 = vdwg.mxu0
    %406 = vmatpush.bf16.msra.mxu0 %v316
    %407 = vmatpush.bf16.msra.mxu0 %v315
    %408 = vmatpush.bf16.msra.mxu0 %v314
    %409 = vmatpush.bf16.msra.mxu0 %v313
    %410 = vmatpush.bf16.msra.mxu0 %v312
    %411 = vmatpush.bf16.msra.mxu0 %v311
    %412 = vmatpush.bf16.msra.mxu0 %v310
    %413 = vmatpush.bf16.msra.mxu0 %v309
    %414 = vmatmul.bf16.gmra.mxu0 %v144
    %v415 = vpop.f32.mrf.mxu0
    %v416 = vadd.f32 %v397, %v415
    %v417 = vpop.f32.mrf.mxu0
    %v418 = vadd.f32 %v399, %v417
    %419 = vmatmul.bf16.gmra.mxu0 %v148
    %v420 = vpop.f32.mrf.mxu0
    %v421 = vadd.f32 %v402, %v420
    %v422 = vpop.f32.mrf.mxu0
    %v423 = vadd.f32 %v404, %v422
    %424 = vdwg.mxu0
    %v425 = vadd.f32 %v49, %v416
    %v426 = vadd.f32 %v50, %v418
    %v427 = vadd.f32 %v51, %v421
    %v428 = vadd.f32 %v52, %v423
    %429 = vst [vmem:[#allocation2] sm:$0xff] %v425
    %430 = vst [vmem:[#allocation2 + $0x8] sm:$0xff] %v426
    %431 = vst [vmem:[#allocation2 + $0x10] sm:$0xff] %v427
    %432 = vst [vmem:[#allocation2 + $0x18] sm:$0xff] %v428
    // Predicated region
    $region26: #{transformer_forward.14} parent=1 // pred_check
      %p433 = pneg %p33
    $region27: #{transformer_forward.14} parent=1 // pred_check_branch
      %435 = sbr.rel (%p433) target = $region29
    $region28: #{transformer_forward.14} parent=1 // pred_region
      %v436 = vld [vmem:[#allocation2] sm:$0xff]
      %v437 = vld [vmem:[#allocation2 + $0x8] sm:$0xff]
      %v438 = vld [vmem:[#allocation2 + $0x10] sm:$0xff]
      %v439 = vld [vmem:[#allocation2 + $0x18] sm:$0xff]
      %v440 = vld [vmem:[%s2] sm:$0x1]
      %v442 = vperm.slane %v440, 0
      %v444 = vadd.f32 %v436, %v442
      %v445 = vadd.f32 %v437, %v442
      %v446 = vadd.f32 %v438, %v442
      %v447 = vadd.f32 %v439, %v442
      %v448 = vld [vmem:[%s3] sm:$0xff]
      %v449 = vld [vmem:[%s3 + $0x8] sm:$0xff]
      %v450 = vld [vmem:[%s3 + $0x10] sm:$0xff]
      %v451 = vld [vmem:[%s3 + $0x18] sm:$0xff]
      %v452 = vadd.f32 %v444, %v448
      %v453 = vadd.f32 %v445, %v449
      %v454 = vadd.f32 %v446, %v450
      %v455 = vadd.f32 %v447, %v451
      %456 = vst [vmem:[%s4] sm:$0xff] %v452
      %457 = vst [vmem:[%s4 + $0x8] sm:$0xff] %v453
      %458 = vst [vmem:[%s4 + $0x10] sm:$0xff] %v454
      %459 = vst [vmem:[%s4 + $0x18] sm:$0xff] %v455
    $region29: #{transformer_forward.14} parent=1 // pred_fallthru
      _
    // Predicated region
    $region30: #{transformer_forward.14} parent=1 // pred_check
      _
    $region31: #{transformer_forward.14} parent=1 // pred_check_branch
      %461 = sbr.rel (0) target = $region33
    $region32: #{transformer_forward.14} parent=1 // pred_region
      _
    $region33: #{transformer_forward.14} parent=1 // pred_fallthru
      _
    // Predicated region
    $region34: #{transformer_forward.14} parent=1 // pred_check
      _
    $region35: #{transformer_forward.14} parent=1 // pred_check_branch
      %463 = sbr.rel (0) target = $region37
    $region36: #{transformer_forward.14} parent=1 // pred_region
      _
    $region37: #{transformer_forward.14} parent=1 // pred_fallthru
      _
    %464 = vsyncpa [#allocation4], 1

</llo_original>
